<compile_context>
chip_gen: v6e
topology: v6e:2x2x1
jax: 0.10.0
libtpu: 0.0.40
codegen_flags: <defaults>
</compile_context>

<pallas_src>
import functools

import jax
import jax.numpy as jnp
from jax.experimental import pallas as pl
from jax.experimental.pallas import tpu as pltpu


def _round_up(x, m):
    return (x + m - 1) // m * m


@functools.lru_cache(maxsize=None)
def _vmem_limit_bytes():
    """Generation-aware scoped-VMEM budget.

    v7x has 64 MiB VMEM per TensorCore, v5e/v6e have 128 MiB.  Use ~3/4 of the
    reported capacity, capped at 96 MiB; fall back to a v7x-safe 48 MiB if the
    query is unavailable.
    """
    cap = 64 * 1024 * 1024
    try:
        cap = int(getattr(pltpu.get_tpu_info(), "vmem_capacity_bytes", cap))
    except Exception:
        pass
    return min(cap * 3 // 4, 96 * 1024 * 1024)


def _apply_act(y, act):
    # f32 epilogue math (v5e has no bf16 VPU/EUP; tanh/exp go to the EUP).
    if act == "leaky_relu":
        return jnp.where(y > 0, y, 0.2 * y)
    if act == "relu":
        return jnp.maximum(y, 0.0)
    if act == "tanh":
        return jnp.tanh(y)
    return y  # "none"


# --------------------------- Pallas matmul kernel ---------------------------

def matmul_bias_act_kernel(a_ref, b_ref, bias_ref, *refs, act, with_stats):
    if with_stats:
        o_ref, sum_ref, sq_ref, acc_ref = refs
    else:
        o_ref, acc_ref = refs
        sum_ref = sq_ref = None

    @pl.when(pl.program_id(2) == 0)
    def _():
        acc_ref[...] = jnp.zeros_like(acc_ref)

    acc_ref[...] += jnp.dot(a_ref[...], b_ref[...],
                            preferred_element_type=jnp.float32)

    @pl.when(pl.program_id(2) == pl.num_programs(2) - 1)
    def _():
        y = _apply_act(acc_ref[...] + bias_ref[...], act)
        o_ref[...] = y.astype(o_ref.dtype)
        if with_stats:
            # Per-channel partial batch statistics for a following BatchNorm,
            # produced in the epilogue so BN needs no extra HBM read pass.
            # Only row 0 of the (8, tn) stats block is written (one masked
            # store, not an 8x-broadcast through the vst slot).
            sum_ref[0:1, :] = jnp.sum(y, axis=0, keepdims=True)
            sq_ref[0:1, :] = jnp.sum(y * y, axis=0, keepdims=True)


def matmul_bias_act(a, b, bias, act, *, with_stats=False,
                    out_dtype=jnp.bfloat16,
                    tile_m=256, tile_n=256, tile_k=512):
    """act(a @ b + bias).  a:(M,K), b:(K,N), bias:(N,) or None (= zeros).

    Operands are padded to lane/sublane-aligned tiles and fed to the MXU in
    bf16; accumulation and the bias/activation epilogue stay in f32 and the
    result is stored as `out_dtype` (bf16 for intermediate activations).

    with_stats=True additionally returns per-column (sum, sum-of-squares) of
    the output for fusing BatchNorm batch statistics.  Exactness requires zero
    bias, identity activation and zero-valued padded rows (asserted).
    """
    if with_stats:
        assert bias is None and act == "none", (
            "with_stats needs zero bias + identity activation, otherwise the "
            "padded rows bias the BatchNorm statistics")

    M, K = a.shape
    _, N = b.shape
    # bf16 LHS: keep the sublane tile a multiple of 16 (16 rows per vreg).
    tm = min(tile_m, _round_up(M, 16))
    tn = min(tile_n, _round_up(N, 128))
    tk = min(tile_k, _round_up(K, 128))
    # v7x has two TensorCores: make sure at least one *parallel* grid axis has
    # >= 2 blocks so both cores get work (one extra cheap step on 1-TC chips).
    if _round_up(M, tm) == tm and _round_up(N, tn) == tn:
        if M > 16:
            tm = _round_up((tm + 1) // 2, 16)
        elif N > 128:
            tn = _round_up((tn + 1) // 2, 128)
    Mp, Kp, Np = _round_up(M, tm), _round_up(K, tk), _round_up(N, tn)
    gm, gn, gk = Mp // tm, Np // tn, Kp // tk

    a_p = a if (Mp, Kp) == (M, K) else jnp.pad(a, ((0, Mp - M), (0, Kp - K)))
    if a_p.dtype != jnp.bfloat16:
        a_p = a_p.astype(jnp.bfloat16)
    b_p = b.astype(jnp.bfloat16)
    if (Kp, Np) != (K, N):
        b_p = jnp.pad(b_p, ((0, Kp - K), (0, Np - N)))
    if bias is None:
        bias_p = jnp.zeros((1, Np), jnp.float32)
    else:
        bias_p = jnp.pad(jnp.asarray(bias, jnp.float32).reshape(1, N),
                         ((0, 0), (0, Np - N)))

    out_shapes = [jax.ShapeDtypeStruct((Mp, Np), out_dtype)]
    out_specs = [pl.BlockSpec((tm, tn), lambda i, j, k: (i, j))]
    if with_stats:
        # One stats row per (M-tile, N-tile); stored in row 0 of an 8-row
        # block so the output block keeps the (8, 128) layout.
        out_shapes += [jax.ShapeDtypeStruct((gm * 8, Np), jnp.float32)] * 2
        out_specs += [pl.BlockSpec((8, tn), lambda i, j, k: (i, j))] * 2

    out_itemsize = jnp.dtype(out_dtype).itemsize
    bytes_accessed = (Mp * Kp * 2 + Kp * Np * 2 + Np * 4
                      + Mp * Np * out_itemsize)
    if with_stats:
        bytes_accessed += 2 * gm * 8 * Np * 4
    cost = pl.CostEstimate(
        flops=2 * Mp * Np * Kp,
        transcendentals=Mp * Np if act == "tanh" else 0,
        bytes_accessed=bytes_accessed)

    outs = pl.pallas_call(
        functools.partial(matmul_bias_act_kernel, act=act,
                          with_stats=with_stats),
        out_shape=tuple(out_shapes),
        grid_spec=pltpu.PrefetchScalarGridSpec(
            num_scalar_prefetch=0,
            grid=(gm, gn, gk),
            in_specs=[
                pl.BlockSpec((tm, tk), lambda i, j, k: (i, k)),
                pl.BlockSpec((tk, tn), lambda i, j, k: (k, j)),
                pl.BlockSpec((1, tn), lambda i, j, k: (0, j)),
            ],
            out_specs=tuple(out_specs),
            scratch_shapes=[pltpu.VMEM((tm, tn), jnp.float32)],
        ),
        compiler_params=pltpu.CompilerParams(
            dimension_semantics=("parallel", "parallel", "arbitrary"),
            vmem_limit_bytes=_vmem_limit_bytes(),
        ),
        cost_estimate=cost,
    )(a_p, b_p, bias_p)

    out = outs[0][:M, :N]
    if with_stats:
        colsum = outs[1][0::8, :].sum(axis=0)[:N]
        colsq = outs[2][0::8, :].sum(axis=0)[:N]
        return out, colsum, colsq
    return out


# ---------------------- Pallas scale/shift + act kernel ----------------------

def scale_shift_act_kernel(x_ref, s_ref, t_ref, o_ref, *, act):
    y = x_ref[...].astype(jnp.float32) * s_ref[...] + t_ref[...]
    o_ref[...] = _apply_act(y, act).astype(o_ref.dtype)


def scale_shift_act(x, scale, shift, act, *, tile_m=512, tile_c=512):
    """act(x * scale + shift) on (rows, channels), per-channel scale/shift.

    bf16 in / bf16 out, f32 math.  When the channel dim is not 128-aligned the
    block uses the full channel extent (allowed: block dim == array dim), so
    no pad/slice HBM passes are added.
    """
    M, C = x.shape
    tm = min(tile_m, _round_up(M, 16))
    Mp = _round_up(M, tm)
    tc = C if (C % 128 != 0 or C <= tile_c) else 128
    x_p = x if Mp == M else jnp.pad(x, ((0, Mp - M), (0, 0)))
    s = jnp.asarray(scale, jnp.float32).reshape(1, C)
    t = jnp.asarray(shift, jnp.float32).reshape(1, C)
    out = pl.pallas_call(
        functools.partial(scale_shift_act_kernel, act=act),
        out_shape=jax.ShapeDtypeStruct((Mp, C), x.dtype),
        grid_spec=pltpu.PrefetchScalarGridSpec(
            num_scalar_prefetch=0,
            grid=(Mp // tm, C // tc),
            in_specs=[
                pl.BlockSpec((tm, tc), lambda i, j: (i, j)),
                pl.BlockSpec((1, tc), lambda i, j: (0, j)),
                pl.BlockSpec((1, tc), lambda i, j: (0, j)),
            ],
            out_specs=pl.BlockSpec((tm, tc), lambda i, j: (i, j)),
        ),
        compiler_params=pltpu.CompilerParams(
            dimension_semantics=("parallel", "parallel"),
            vmem_limit_bytes=_vmem_limit_bytes(),
        ),
        cost_estimate=pl.CostEstimate(
            flops=2 * Mp * C, transcendentals=0,
            bytes_accessed=2 * Mp * C * jnp.dtype(x.dtype).itemsize + 8 * C),
    )(x_p, s, t)
    return out[:M]


# ------------------------------- JAX glue -----------------------------------

def im2col_nhwc(x, k, stride, pad):
    """x: (N,H,W,C) -> patches (N*Ho*Wo, k*k*C), column order (kh, kw, c).

    TODO(synk): stream these patches straight from the padded NHWC tensor via
    a (kh,kw)-folded K grid axis + BlockSpec index_map instead of
    materializing them in HBM (dominant HBM traffic once H, W grow).
    """
    N, H, W, C = x.shape
    xp = jnp.pad(x, ((0, 0), (pad, pad), (pad, pad), (0, 0)))
    Ho = (H + 2 * pad - k) // stride + 1
    Wo = (W + 2 * pad - k) // stride + 1
    cols = []
    for i in range(k):
        for j in range(k):
            cols.append(xp[:, i:i + stride * (Ho - 1) + 1:stride,
                           j:j + stride * (Wo - 1) + 1:stride, :])
    patches = jnp.concatenate(cols, axis=-1)          # (N, Ho, Wo, k*k*C)
    return patches.reshape(N * Ho * Wo, k * k * C), Ho, Wo


def conv2d_nhwc(x, w, b, stride, pad, act, *, with_stats=False,
                out_dtype=jnp.bfloat16):
    """Conv2d on NHWC input; w in PyTorch layout (Cout, Cin, k, k)."""
    N = x.shape[0]
    Cout, Cin, k, _ = w.shape
    a, Ho, Wo = im2col_nhwc(x, k, stride, pad)
    B = jnp.transpose(w, (2, 3, 1, 0)).reshape(k * k * Cin, Cout)
    if with_stats:
        assert b is None
        rows, csum, csq = matmul_bias_act(a, B, None, act, with_stats=True,
                                          out_dtype=out_dtype)
        return rows.reshape(N, Ho, Wo, Cout), csum, csq
    rows = matmul_bias_act(a, B, b, act, out_dtype=out_dtype)
    return rows.reshape(N, Ho, Wo, Cout)


def conv_transpose2d_nhwc(x, w, b, act, *, out_dtype=jnp.bfloat16):
    """ConvTranspose2d(k=4, stride=2, pad=1) via sub-pixel decomposition.

    Output pixel (2m+a, 2j+b) only sees a 2x2 input window, so one stride-1
    im2col with 2x2 windows (pad=1) feeds a single matmul against a combined
    (4*Cin, 4*Cout) weight; the four phase outputs are then interleaved.
    w is in PyTorch layout (Cin, Cout, 4, 4).
    """
    Cin, Cout, k, _ = w.shape
    assert k == 4
    N, H, W, _ = x.shape
    a, _, _ = im2col_nhwc(x, 2, 1, 1)                  # (N*(H+1)*(W+1), 4*Cin)

    # kernel tap index for window offset r/s and phase a/b: ky = 3 - 2r - a
    idx = 3 - 2 * jnp.arange(2)[:, None] - jnp.arange(2)[None, :]  # (tap, phase)
    Wg = w[:, :, idx][:, :, :, :, idx]                 # (Cin, Cout, r, a, s, b)
    W6 = jnp.transpose(Wg, (2, 4, 0, 3, 5, 1))         # (r, s, Cin, a, b, Cout)
    B = W6.reshape(4 * Cin, 4 * Cout)
    bias = None if b is None else jnp.tile(b, 4)       # column order (a,b,cout)

    rows = matmul_bias_act(a, B, bias, act, out_dtype=out_dtype)
    R = rows.reshape(N, H + 1, W + 1, 2, 2, Cout)
    # phase (pa,pb) output at (m,j) lives at window (m+pa, j+pb), block (pa,pb)
    z = jnp.stack(
        [jnp.stack([R[:, pa:pa + H, pb:pb + W, pa, pb, :] for pb in range(2)],
                   axis=3)
         for pa in range(2)], axis=2)                  # (N, H, 2, W, 2, Cout)
    return z.reshape(N, 2 * H, 2 * W, Cout)


def batchnorm_act_nhwc(h, gamma, beta, act, *, colsum=None, colsq=None,
                       eps=1e-5):
    """Training-mode BatchNorm2d (+ fused activation) on NHWC activations.

    Per-channel sum / sum-of-squares from the producing matmul epilogue are
    reused if given; otherwise they are reduced here in f32.  Valid only for
    training-mode BN with batch statistics (what the PyTorch module's forward
    uses); eval-mode running stats would need the dropped conv bias restored.
    """
    N, H, W, C = h.shape
    rows = h.reshape(N * H * W, C)
    m = rows.shape[0]
    if colsum is None:
        # TODO(synk): compute these inside the transposed-conv matmul epilogue
        # with a mask over the unused boundary (window, phase) rows instead of
        # this extra HBM reduction pass.
        rows32 = rows.astype(jnp.float32)
        colsum = jnp.sum(rows32, axis=0)
        colsq = jnp.sum(rows32 * rows32, axis=0)
    mean = colsum / m
    var = jnp.maximum(colsq / m - mean * mean, 0.0)    # guard f32 cancellation
    scale = gamma / jnp.sqrt(var + eps)
    shift = beta - mean * scale
    out = scale_shift_act(rows, scale, shift, act)
    return out.reshape(N, H, W, C)


# ------------------------------- Generator ----------------------------------

def init_params(key):
    ks = jax.random.split(key, 8)
    p = {}
    p["w1"] = 0.05 * jax.random.normal(ks[0], (64, 1, 4, 4), jnp.float32)
    p["b1"] = 0.05 * jax.random.normal(ks[1], (64,), jnp.float32)
    p["w2"] = 0.05 * jax.random.normal(ks[2], (128, 64, 4, 4), jnp.float32)
    p["b2"] = 0.05 * jax.random.normal(ks[3], (128,), jnp.float32)
    p["bn2_g"] = jnp.ones((128,), jnp.float32)         # PyTorch BN init
    p["bn2_b"] = jnp.zeros((128,), jnp.float32)
    p["w3"] = 0.05 * jax.random.normal(ks[4], (128, 64, 4, 4), jnp.float32)
    p["b3"] = 0.05 * jax.random.normal(ks[5], (64,), jnp.float32)
    p["bn3_g"] = jnp.ones((64,), jnp.float32)
    p["bn3_b"] = jnp.zeros((64,), jnp.float32)
    p["w4"] = 0.05 * jax.random.normal(ks[6], (64, 3, 4, 4), jnp.float32)
    p["b4"] = 0.05 * jax.random.normal(ks[7], (3,), jnp.float32)
    return p


def generator_forward(params, x_nchw):
    # NCHW -> NHWC once; intermediate activations live in bf16.
    x = jnp.transpose(x_nchw, (0, 2, 3, 1)).astype(jnp.bfloat16)

    # Conv2d(1,64,4,2,1) + LeakyReLU(0.2)
    h = conv2d_nhwc(x, params["w1"], params["b1"], 2, 1, "leaky_relu")

    # Conv2d(64,128,4,2,1) + BatchNorm2d(128) + LeakyReLU(0.2)
    # The conv bias cancels exactly inside training-mode BatchNorm (mean
    # shift), so it is omitted; BN batch stats come fused from the matmul
    # epilogue.
    h, csum, csq = conv2d_nhwc(h, params["w2"], None, 2, 1, "none",
                               with_stats=True)
    h = batchnorm_act_nhwc(h, params["bn2_g"], params["bn2_b"], "leaky_relu",
                           colsum=csum, colsq=csq)

    # ConvTranspose2d(128,64,4,2,1) + BatchNorm2d(64) + ReLU
    h = conv_transpose2d_nhwc(h, params["w3"], None, "none")  # bias cancels in BN
    h = batchnorm_act_nhwc(h, params["bn3_g"], params["bn3_b"], "relu")

    # ConvTranspose2d(64,3,4,2,1) + Tanh (final output stays f32)
    h = conv_transpose2d_nhwc(h, params["w4"], params["b4"], "tanh",
                              out_dtype=jnp.float32)

    return jnp.transpose(h, (0, 3, 1, 2))              # NHWC -> NCHW (once)


if __name__ == "__main__":
    key = jax.random.PRNGKey(0)
    k_param, k_x = jax.random.split(key)
    params = init_params(k_param)

    # NCHW input, single channel (as the first Conv2d requires).
    x = jax.random.normal(k_x, (2, 1, 16, 16), jnp.float32)

    y = jax.jit(generator_forward)(params, x)
    y = jax.block_until_ready(y)

    assert y.shape == (2, 3, 16, 16), y.shape
    assert y.dtype == jnp.float32
    assert bool(jnp.all(jnp.isfinite(y)))
    assert bool(jnp.all(jnp.abs(y) <= 1.0))            # tanh output range
    print("KERNEL_OK")
</pallas_src>

<mosaic_0001>
module attributes {stable_mosaic.version = 11 : i64} {
  func.func @matmul_bias_act_kernel(%arg0: i32, %arg1: i32, %arg2: i32, %arg3: memref<64x128xbf16, #tpu.memory_space<vmem>>, %arg4: memref<128x128xbf16, #tpu.memory_space<vmem>>, %arg5: memref<1x128xf32, #tpu.memory_space<vmem>>, %arg6: memref<64x128xbf16, #tpu.memory_space<vmem>>, %arg7: memref<64x128xf32, #tpu.memory_space<vmem>>) attributes {dimension_semantics = [#tpu.dimension_semantics<parallel>, #tpu.dimension_semantics<parallel>, #tpu.dimension_semantics<arbitrary>], iteration_bounds = array<i64: 2, 1, 1>, scalar_prefetch = 0 : i64, scratch_operands = 1 : i64, tpu.core_type = #tpu.core_type<tc>, window_params = [{transform_indices = @transform_0, window_bounds = array<i64: 64, 128>}, {transform_indices = @transform_1, window_bounds = array<i64: 128, 128>}, {transform_indices = @transform_2, window_bounds = array<i64: 1, 128>}, {transform_indices = @transform_3, window_bounds = array<i64: 64, 128>}]} {
    %c0_i32 = arith.constant 0 : i32
    %0 = arith.cmpi eq, %arg2, %c0_i32 : i32
    %1 = arith.extui %0 : i1 to i32
    %c0_i32_0 = arith.constant 0 : i32
    %2 = arith.cmpi ne, %1, %c0_i32_0 : i32
    scf.if %2 {
      %cst_10 = arith.constant 0.000000e+00 : f32
      %12 = vector.broadcast %cst_10 : f32 to vector<64x128xf32>
      %c0_11 = arith.constant 0 : index
      %c0_12 = arith.constant 0 : index
      %13 = vector.load %arg7[%c0_11, %c0_12] : memref<64x128xf32, #tpu.memory_space<vmem>>, vector<64x128xf32>
      tpu.vector_store %arg7[%c0_11, %c0_12], %12 {strides = array<i32>} : memref<64x128xf32, #tpu.memory_space<vmem>>, vector<64x128xf32>,
    } else {
    }
    %c0 = arith.constant 0 : index
    %c0_1 = arith.constant 0 : index
    %3 = vector.load %arg7[%c0, %c0_1] : memref<64x128xf32, #tpu.memory_space<vmem>>, vector<64x128xf32>
    %c0_2 = arith.constant 0 : index
    %c0_3 = arith.constant 0 : index
    %4 = vector.load %arg3[%c0_2, %c0_3] : memref<64x128xbf16, #tpu.memory_space<vmem>>, vector<64x128xbf16>
    %c0_4 = arith.constant 0 : index
    %c0_5 = arith.constant 0 : index
    %5 = vector.load %arg4[%c0_4, %c0_5] : memref<128x128xbf16, #tpu.memory_space<vmem>>, vector<128x128xbf16>
    %cst = arith.constant dense<0.000000e+00> : vector<64x128xf32>
    %6 = tpu.matmul %4, %5, %cst {dimension_numbers = #tpu.dot_dimension_numbers<[1], [0], [0], [1], [0, 0, 1, 1], [], []>} : vector<64x128xbf16>, vector<128x128xbf16>, vector<64x128xf32> -> vector<64x128xf32>
    %7 = arith.addf %3, %6 : vector<64x128xf32>
    %c0_6 = arith.constant 0 : index
    %c0_7 = arith.constant 0 : index
    %8 = vector.load %arg7[%c0_6, %c0_7] : memref<64x128xf32, #tpu.memory_space<vmem>>, vector<64x128xf32>
    tpu.vector_store %arg7[%c0_6, %c0_7], %7 {strides = array<i32>} : memref<64x128xf32, #tpu.memory_space<vmem>>, vector<64x128xf32>,
    %c0_i32_8 = arith.constant 0 : i32
    %9 = arith.cmpi eq, %arg2, %c0_i32_8 : i32
    %10 = arith.extui %9 : i1 to i32
    %c0_i32_9 = arith.constant 0 : i32
    %11 = arith.cmpi ne, %10, %c0_i32_9 : i32
    scf.if %11 {
      %c0_10 = arith.constant 0 : index
      %c0_11 = arith.constant 0 : index
      %12 = vector.load %arg7[%c0_10, %c0_11] : memref<64x128xf32, #tpu.memory_space<vmem>>, vector<64x128xf32>
      %c0_12 = arith.constant 0 : index
      %c0_13 = arith.constant 0 : index
      %13 = vector.load %arg5[%c0_12, %c0_13] : memref<1x128xf32, #tpu.memory_space<vmem>>, vector<1x128xf32>
      %14 = vector.broadcast %13 : vector<1x128xf32> to vector<64x128xf32>
      %15 = arith.addf %12, %14 : vector<64x128xf32>
      %cst_14 = arith.constant 0.000000e+00 : f32
      %16 = vector.broadcast %cst_14 : f32 to vector<64x128xf32>
      %17 = arith.cmpf ogt, %15, %16 : vector<64x128xf32>
      %cst_15 = arith.constant 2.000000e-01 : f32
      %18 = vector.broadcast %cst_15 : f32 to vector<64x128xf32>
      %19 = arith.mulf %18, %15 : vector<64x128xf32>
      %20 = arith.select %17, %15, %19 : vector<64x128xi1>, vector<64x128xf32>
      %21 = arith.truncf %20 : vector<64x128xf32> to vector<64x128xbf16>
      %c0_16 = arith.constant 0 : index
      %c0_17 = arith.constant 0 : index
      %22 = vector.load %arg6[%c0_16, %c0_17] : memref<64x128xbf16, #tpu.memory_space<vmem>>, vector<64x128xbf16>
      tpu.vector_store %arg6[%c0_16, %c0_17], %21 {strides = array<i32>} : memref<64x128xbf16, #tpu.memory_space<vmem>>, vector<64x128xbf16>,
    } else {
    }
    return
  }
  func.func @transform_0(%arg0: i32, %arg1: i32, %arg2: i32) -> (i32, i32) {
    %c0_i32 = arith.constant 0 : i32
    return %arg0, %arg2 : i32, i32
  }
  func.func @transform_1(%arg0: i32, %arg1: i32, %arg2: i32) -> (i32, i32) {
    %c0_i32 = arith.constant 0 : i32
    return %arg2, %arg1 : i32, i32
  }
  func.func @transform_2(%arg0: i32, %arg1: i32, %arg2: i32) -> (i32, i32) {
    %c0_i32 = arith.constant 0 : i32
    %c0_i32_0 = arith.constant 0 : i32
    return %c0_i32, %arg1 : i32, i32
  }
  func.func @transform_3(%arg0: i32, %arg1: i32, %arg2: i32) -> (i32, i32) {
    %c0_i32 = arith.constant 0 : i32
    return %arg0, %arg1 : i32, i32
  }
}

module attributes {stable_mosaic.version = 11 : i64} {
  func.func @matmul_bias_act_kernel(%arg0: i32, %arg1: i32, %arg2: i32, %arg3: memref<16x512xbf16, #tpu.memory_space<vmem>>, %arg4: memref<512x128xbf16, #tpu.memory_space<vmem>>, %arg5: memref<1x128xf32, #tpu.memory_space<vmem>>, %arg6: memref<16x128xbf16, #tpu.memory_space<vmem>>, %arg7: memref<8x128xf32, #tpu.memory_space<vmem>>, %arg8: memref<8x128xf32, #tpu.memory_space<vmem>>, %arg9: memref<16x128xf32, #tpu.memory_space<vmem>>) attributes {dimension_semantics = [#tpu.dimension_semantics<parallel>, #tpu.dimension_semantics<parallel>, #tpu.dimension_semantics<arbitrary>], iteration_bounds = array<i64: 2, 1, 2>, scalar_prefetch = 0 : i64, scratch_operands = 1 : i64, tpu.core_type = #tpu.core_type<tc>, window_params = [{transform_indices = @transform_0, window_bounds = array<i64: 16, 512>}, {transform_indices = @transform_1, window_bounds = array<i64: 512, 128>}, {transform_indices = @transform_2, window_bounds = array<i64: 1, 128>}, {transform_indices = @transform_3, window_bounds = array<i64: 16, 128>}, {transform_indices = @transform_4, window_bounds = array<i64: 8, 128>}, {transform_indices = @transform_5, window_bounds = array<i64: 8, 128>}]} {
    %c0_i32 = arith.constant 0 : i32
    %0 = arith.cmpi eq, %arg2, %c0_i32 : i32
    %1 = arith.extui %0 : i1 to i32
    %c0_i32_0 = arith.constant 0 : i32
    %2 = arith.cmpi ne, %1, %c0_i32_0 : i32
    scf.if %2 {
      %cst_9 = arith.constant 0.000000e+00 : f32
      %12 = vector.broadcast %cst_9 : f32 to vector<16x128xf32>
      %c0_10 = arith.constant 0 : index
      %c0_11 = arith.constant 0 : index
      %13 = vector.load %arg9[%c0_10, %c0_11] : memref<16x128xf32, #tpu.memory_space<vmem>>, vector<16x128xf32>
      tpu.vector_store %arg9[%c0_10, %c0_11], %12 {strides = array<i32>} : memref<16x128xf32, #tpu.memory_space<vmem>>, vector<16x128xf32>,
    } else {
    }
    %c0 = arith.constant 0 : index
    %c0_1 = arith.constant 0 : index
    %3 = vector.load %arg9[%c0, %c0_1] : memref<16x128xf32, #tpu.memory_space<vmem>>, vector<16x128xf32>
    %c0_2 = arith.constant 0 : index
    %c0_3 = arith.constant 0 : index
    %4 = vector.load %arg3[%c0_2, %c0_3] : memref<16x512xbf16, #tpu.memory_space<vmem>>, vector<16x512xbf16>
    %c0_4 = arith.constant 0 : index
    %c0_5 = arith.constant 0 : index
    %5 = vector.load %arg4[%c0_4, %c0_5] : memref<512x128xbf16, #tpu.memory_space<vmem>>, vector<512x128xbf16>
    %cst = arith.constant dense<0.000000e+00> : vector<16x128xf32>
    %6 = tpu.matmul %4, %5, %cst {dimension_numbers = #tpu.dot_dimension_numbers<[1], [0], [0], [1], [0, 0, 1, 1], [], []>} : vector<16x512xbf16>, vector<512x128xbf16>, vector<16x128xf32> -> vector<16x128xf32>
    %7 = arith.addf %3, %6 : vector<16x128xf32>
    %c0_6 = arith.constant 0 : index
    %c0_7 = arith.constant 0 : index
    %8 = vector.load %arg9[%c0_6, %c0_7] : memref<16x128xf32, #tpu.memory_space<vmem>>, vector<16x128xf32>
    tpu.vector_store %arg9[%c0_6, %c0_7], %7 {strides = array<i32>} : memref<16x128xf32, #tpu.memory_space<vmem>>, vector<16x128xf32>,
    %c1_i32 = arith.constant 1 : i32
    %9 = arith.cmpi eq, %arg2, %c1_i32 : i32
    %10 = arith.extui %9 : i1 to i32
    %c0_i32_8 = arith.constant 0 : i32
    %11 = arith.cmpi ne, %10, %c0_i32_8 : i32
    scf.if %11 {
      %c0_9 = arith.constant 0 : index
      %c0_10 = arith.constant 0 : index
      %12 = vector.load %arg9[%c0_9, %c0_10] : memref<16x128xf32, #tpu.memory_space<vmem>>, vector<16x128xf32>
      %c0_11 = arith.constant 0 : index
      %c0_12 = arith.constant 0 : index
      %13 = vector.load %arg5[%c0_11, %c0_12] : memref<1x128xf32, #tpu.memory_space<vmem>>, vector<1x128xf32>
      %14 = vector.broadcast %13 : vector<1x128xf32> to vector<16x128xf32>
      %15 = arith.addf %12, %14 : vector<16x128xf32>
      %16 = arith.truncf %15 : vector<16x128xf32> to vector<16x128xbf16>
      %c0_13 = arith.constant 0 : index
      %c0_14 = arith.constant 0 : index
      %17 = vector.load %arg6[%c0_13, %c0_14] : memref<16x128xbf16, #tpu.memory_space<vmem>>, vector<16x128xbf16>
      tpu.vector_store %arg6[%c0_13, %c0_14], %16 {strides = array<i32>} : memref<16x128xbf16, #tpu.memory_space<vmem>>, vector<16x128xbf16>,
      %cst_15 = arith.constant dense<0.000000e+00> : vector<128xf32>
      %18 = vector.multi_reduction <add>, %15, %cst_15 [0] : vector<16x128xf32> to vector<128xf32>
      %19 = vector.shape_cast %18 : vector<128xf32> to vector<1x128xf32>
      %c0_16 = arith.constant 0 : index
      %c0_17 = arith.constant 0 : index
      %20 = vector.load %arg7[%c0_16, %c0_17] : memref<8x128xf32, #tpu.memory_space<vmem>>, vector<1x128xf32>
      tpu.vector_store %arg7[%c0_16, %c0_17], %19 {strides = array<i32>} : memref<8x128xf32, #tpu.memory_space<vmem>>, vector<1x128xf32>,
      %21 = arith.mulf %15, %15 : vector<16x128xf32>
      %cst_18 = arith.constant dense<0.000000e+00> : vector<128xf32>
      %22 = vector.multi_reduction <add>, %21, %cst_18 [0] : vector<16x128xf32> to vector<128xf32>
      %23 = vector.shape_cast %22 : vector<128xf32> to vector<1x128xf32>
      %c0_19 = arith.constant 0 : index
      %c0_20 = arith.constant 0 : index
      %24 = vector.load %arg8[%c0_19, %c0_20] : memref<8x128xf32, #tpu.memory_space<vmem>>, vector<1x128xf32>
      tpu.vector_store %arg8[%c0_19, %c0_20], %23 {strides = array<i32>} : memref<8x128xf32, #tpu.memory_space<vmem>>, vector<1x128xf32>,
    } else {
    }
    return
  }
  func.func @transform_0(%arg0: i32, %arg1: i32, %arg2: i32) -> (i32, i32) {
    %c0_i32 = arith.constant 0 : i32
    return %arg0, %arg2 : i32, i32
  }
  func.func @transform_1(%arg0: i32, %arg1: i32, %arg2: i32) -> (i32, i32) {
    %c0_i32 = arith.constant 0 : i32
    return %arg2, %arg1 : i32, i32
  }
  func.func @transform_2(%arg0: i32, %arg1: i32, %arg2: i32) -> (i32, i32) {
    %c0_i32 = arith.constant 0 : i32
    %c0_i32_0 = arith.constant 0 : i32
    return %c0_i32, %arg1 : i32, i32
  }
  func.func @transform_3(%arg0: i32, %arg1: i32, %arg2: i32) -> (i32, i32) {
    %c0_i32 = arith.constant 0 : i32
    return %arg0, %arg1 : i32, i32
  }
  func.func @transform_4(%arg0: i32, %arg1: i32, %arg2: i32) -> (i32, i32) {
    %c0_i32 = arith.constant 0 : i32
    return %arg0, %arg1 : i32, i32
  }
  func.func @transform_5(%arg0: i32, %arg1: i32, %arg2: i32) -> (i32, i32) {
    %c0_i32 = arith.constant 0 : i32
    return %arg0, %arg1 : i32, i32
  }
}

module attributes {stable_mosaic.version = 11 : i64} {
  func.func @scale_shift_act_kernel(%arg0: i32, %arg1: i32, %arg2: memref<32x128xbf16, #tpu.memory_space<vmem>>, %arg3: memref<1x128xf32, #tpu.memory_space<vmem>>, %arg4: memref<1x128xf32, #tpu.memory_space<vmem>>, %arg5: memref<32x128xbf16, #tpu.memory_space<vmem>>) attributes {dimension_semantics = [#tpu.dimension_semantics<parallel>, #tpu.dimension_semantics<parallel>], iteration_bounds = array<i64: 1, 1>, scalar_prefetch = 0 : i64, scratch_operands = 0 : i64, tpu.core_type = #tpu.core_type<tc>, window_params = [{transform_indices = @transform_0, window_bounds = array<i64: 32, 128>}, {transform_indices = @transform_1, window_bounds = array<i64: 1, 128>}, {transform_indices = @transform_2, window_bounds = array<i64: 1, 128>}, {transform_indices = @transform_3, window_bounds = array<i64: 32, 128>}]} {
    %c0 = arith.constant 0 : index
    %c0_0 = arith.constant 0 : index
    %0 = vector.load %arg2[%c0, %c0_0] : memref<32x128xbf16, #tpu.memory_space<vmem>>, vector<32x128xbf16>
    %1 = arith.extf %0 : vector<32x128xbf16> to vector<32x128xf32>
    %c0_1 = arith.constant 0 : index
    %c0_2 = arith.constant 0 : index
    %2 = vector.load %arg3[%c0_1, %c0_2] : memref<1x128xf32, #tpu.memory_space<vmem>>, vector<1x128xf32>
    %3 = vector.broadcast %2 : vector<1x128xf32> to vector<32x128xf32>
    %4 = arith.mulf %1, %3 : vector<32x128xf32>
    %c0_3 = arith.constant 0 : index
    %c0_4 = arith.constant 0 : index
    %5 = vector.load %arg4[%c0_3, %c0_4] : memref<1x128xf32, #tpu.memory_space<vmem>>, vector<1x128xf32>
    %6 = vector.broadcast %5 : vector<1x128xf32> to vector<32x128xf32>
    %7 = arith.addf %4, %6 : vector<32x128xf32>
    %cst = arith.constant 0.000000e+00 : f32
    %8 = vector.broadcast %cst : f32 to vector<32x128xf32>
    %9 = arith.cmpf ogt, %7, %8 : vector<32x128xf32>
    %cst_5 = arith.constant 2.000000e-01 : f32
    %10 = vector.broadcast %cst_5 : f32 to vector<32x128xf32>
    %11 = arith.mulf %10, %7 : vector<32x128xf32>
    %12 = arith.select %9, %7, %11 : vector<32x128xi1>, vector<32x128xf32>
    %13 = arith.truncf %12 : vector<32x128xf32> to vector<32x128xbf16>
    %c0_6 = arith.constant 0 : index
    %c0_7 = arith.constant 0 : index
    %14 = vector.load %arg5[%c0_6, %c0_7] : memref<32x128xbf16, #tpu.memory_space<vmem>>, vector<32x128xbf16>
    tpu.vector_store %arg5[%c0_6, %c0_7], %13 {strides = array<i32>} : memref<32x128xbf16, #tpu.memory_space<vmem>>, vector<32x128xbf16>,
    return
  }
  func.func @transform_0(%arg0: i32, %arg1: i32) -> (i32, i32) {
    %c0_i32 = arith.constant 0 : i32
    return %arg0, %arg1 : i32, i32
  }
  func.func @transform_1(%arg0: i32, %arg1: i32) -> (i32, i32) {
    %c0_i32 = arith.constant 0 : i32
    %c0_i32_0 = arith.constant 0 : i32
    return %c0_i32, %arg1 : i32, i32
  }
  func.func @transform_2(%arg0: i32, %arg1: i32) -> (i32, i32) {
    %c0_i32 = arith.constant 0 : i32
    %c0_i32_0 = arith.constant 0 : i32
    return %c0_i32, %arg1 : i32, i32
  }
  func.func @transform_3(%arg0: i32, %arg1: i32) -> (i32, i32) {
    %c0_i32 = arith.constant 0 : i32
    return %arg0, %arg1 : i32, i32
  }
}

module attributes {stable_mosaic.version = 11 : i64} {
  func.func @matmul_bias_act_kernel(%arg0: i32, %arg1: i32, %arg2: i32, %arg3: memref<32x512xbf16, #tpu.memory_space<vmem>>, %arg4: memref<512x256xbf16, #tpu.memory_space<vmem>>, %arg5: memref<1x256xf32, #tpu.memory_space<vmem>>, %arg6: memref<32x256xbf16, #tpu.memory_space<vmem>>, %arg7: memref<32x256xf32, #tpu.memory_space<vmem>>) attributes {dimension_semantics = [#tpu.dimension_semantics<parallel>, #tpu.dimension_semantics<parallel>, #tpu.dimension_semantics<arbitrary>], iteration_bounds = array<i64: 2, 1, 1>, scalar_prefetch = 0 : i64, scratch_operands = 1 : i64, tpu.core_type = #tpu.core_type<tc>, window_params = [{transform_indices = @transform_0, window_bounds = array<i64: 32, 512>}, {transform_indices = @transform_1, window_bounds = array<i64: 512, 256>}, {transform_indices = @transform_2, window_bounds = array<i64: 1, 256>}, {transform_indices = @transform_3, window_bounds = array<i64: 32, 256>}]} {
    %c0_i32 = arith.constant 0 : i32
    %0 = arith.cmpi eq, %arg2, %c0_i32 : i32
    %1 = arith.extui %0 : i1 to i32
    %c0_i32_0 = arith.constant 0 : i32
    %2 = arith.cmpi ne, %1, %c0_i32_0 : i32
    scf.if %2 {
      %cst_10 = arith.constant 0.000000e+00 : f32
      %12 = vector.broadcast %cst_10 : f32 to vector<32x256xf32>
      %c0_11 = arith.constant 0 : index
      %c0_12 = arith.constant 0 : index
      %13 = vector.load %arg7[%c0_11, %c0_12] : memref<32x256xf32, #tpu.memory_space<vmem>>, vector<32x256xf32>
      tpu.vector_store %arg7[%c0_11, %c0_12], %12 {strides = array<i32>} : memref<32x256xf32, #tpu.memory_space<vmem>>, vector<32x256xf32>,
    } else {
    }
    %c0 = arith.constant 0 : index
    %c0_1 = arith.constant 0 : index
    %3 = vector.load %arg7[%c0, %c0_1] : memref<32x256xf32, #tpu.memory_space<vmem>>, vector<32x256xf32>
    %c0_2 = arith.constant 0 : index
    %c0_3 = arith.constant 0 : index
    %4 = vector.load %arg3[%c0_2, %c0_3] : memref<32x512xbf16, #tpu.memory_space<vmem>>, vector<32x512xbf16>
    %c0_4 = arith.constant 0 : index
    %c0_5 = arith.constant 0 : index
    %5 = vector.load %arg4[%c0_4, %c0_5] : memref<512x256xbf16, #tpu.memory_space<vmem>>, vector<512x256xbf16>
    %cst = arith.constant dense<0.000000e+00> : vector<32x256xf32>
    %6 = tpu.matmul %4, %5, %cst {dimension_numbers = #tpu.dot_dimension_numbers<[1], [0], [0], [1], [0, 0, 1, 1], [], []>} : vector<32x512xbf16>, vector<512x256xbf16>, vector<32x256xf32> -> vector<32x256xf32>
    %7 = arith.addf %3, %6 : vector<32x256xf32>
    %c0_6 = arith.constant 0 : index
    %c0_7 = arith.constant 0 : index
    %8 = vector.load %arg7[%c0_6, %c0_7] : memref<32x256xf32, #tpu.memory_space<vmem>>, vector<32x256xf32>
    tpu.vector_store %arg7[%c0_6, %c0_7], %7 {strides = array<i32>} : memref<32x256xf32, #tpu.memory_space<vmem>>, vector<32x256xf32>,
    %c0_i32_8 = arith.constant 0 : i32
    %9 = arith.cmpi eq, %arg2, %c0_i32_8 : i32
    %10 = arith.extui %9 : i1 to i32
    %c0_i32_9 = arith.constant 0 : i32
    %11 = arith.cmpi ne, %10, %c0_i32_9 : i32
    scf.if %11 {
      %c0_10 = arith.constant 0 : index
      %c0_11 = arith.constant 0 : index
      %12 = vector.load %arg7[%c0_10, %c0_11] : memref<32x256xf32, #tpu.memory_space<vmem>>, vector<32x256xf32>
      %c0_12 = arith.constant 0 : index
      %c0_13 = arith.constant 0 : index
      %13 = vector.load %arg5[%c0_12, %c0_13] : memref<1x256xf32, #tpu.memory_space<vmem>>, vector<1x256xf32>
      %14 = vector.broadcast %13 : vector<1x256xf32> to vector<32x256xf32>
      %15 = arith.addf %12, %14 : vector<32x256xf32>
      %16 = arith.truncf %15 : vector<32x256xf32> to vector<32x256xbf16>
      %c0_14 = arith.constant 0 : index
      %c0_15 = arith.constant 0 : index
      %17 = vector.load %arg6[%c0_14, %c0_15] : memref<32x256xbf16, #tpu.memory_space<vmem>>, vector<32x256xbf16>
      tpu.vector_store %arg6[%c0_14, %c0_15], %16 {strides = array<i32>} : memref<32x256xbf16, #tpu.memory_space<vmem>>, vector<32x256xbf16>,
    } else {
    }
    return
  }
  func.func @transform_0(%arg0: i32, %arg1: i32, %arg2: i32) -> (i32, i32) {
    %c0_i32 = arith.constant 0 : i32
    return %arg0, %arg2 : i32, i32
  }
  func.func @transform_1(%arg0: i32, %arg1: i32, %arg2: i32) -> (i32, i32) {
    %c0_i32 = arith.constant 0 : i32
    return %arg2, %arg1 : i32, i32
  }
  func.func @transform_2(%arg0: i32, %arg1: i32, %arg2: i32) -> (i32, i32) {
    %c0_i32 = arith.constant 0 : i32
    %c0_i32_0 = arith.constant 0 : i32
    return %c0_i32, %arg1 : i32, i32
  }
  func.func @transform_3(%arg0: i32, %arg1: i32, %arg2: i32) -> (i32, i32) {
    %c0_i32 = arith.constant 0 : i32
    return %arg0, %arg1 : i32, i32
  }
}

module attributes {stable_mosaic.version = 11 : i64} {
  func.func @scale_shift_act_kernel(%arg0: i32, %arg1: i32, %arg2: memref<128x64xbf16, #tpu.memory_space<vmem>>, %arg3: memref<1x64xf32, #tpu.memory_space<vmem>>, %arg4: memref<1x64xf32, #tpu.memory_space<vmem>>, %arg5: memref<128x64xbf16, #tpu.memory_space<vmem>>) attributes {dimension_semantics = [#tpu.dimension_semantics<parallel>, #tpu.dimension_semantics<parallel>], iteration_bounds = array<i64: 1, 1>, scalar_prefetch = 0 : i64, scratch_operands = 0 : i64, tpu.core_type = #tpu.core_type<tc>, window_params = [{transform_indices = @transform_0, window_bounds = array<i64: 128, 64>}, {transform_indices = @transform_1, window_bounds = array<i64: 1, 64>}, {transform_indices = @transform_2, window_bounds = array<i64: 1, 64>}, {transform_indices = @transform_3, window_bounds = array<i64: 128, 64>}]} {
    %c0 = arith.constant 0 : index
    %c0_0 = arith.constant 0 : index
    %0 = vector.load %arg2[%c0, %c0_0] : memref<128x64xbf16, #tpu.memory_space<vmem>>, vector<128x64xbf16>
    %1 = arith.extf %0 : vector<128x64xbf16> to vector<128x64xf32>
    %c0_1 = arith.constant 0 : index
    %c0_2 = arith.constant 0 : index
    %2 = vector.load %arg3[%c0_1, %c0_2] : memref<1x64xf32, #tpu.memory_space<vmem>>, vector<1x64xf32>
    %3 = vector.broadcast %2 : vector<1x64xf32> to vector<128x64xf32>
    %4 = arith.mulf %1, %3 : vector<128x64xf32>
    %c0_3 = arith.constant 0 : index
    %c0_4 = arith.constant 0 : index
    %5 = vector.load %arg4[%c0_3, %c0_4] : memref<1x64xf32, #tpu.memory_space<vmem>>, vector<1x64xf32>
    %6 = vector.broadcast %5 : vector<1x64xf32> to vector<128x64xf32>
    %7 = arith.addf %4, %6 : vector<128x64xf32>
    %cst = arith.constant 0.000000e+00 : f32
    %8 = vector.broadcast %cst : f32 to vector<128x64xf32>
    %9 = arith.maximumf %7, %8 : vector<128x64xf32>
    %10 = arith.truncf %9 : vector<128x64xf32> to vector<128x64xbf16>
    %c0_5 = arith.constant 0 : index
    %c0_6 = arith.constant 0 : index
    %11 = vector.load %arg5[%c0_5, %c0_6] : memref<128x64xbf16, #tpu.memory_space<vmem>>, vector<128x64xbf16>
    tpu.vector_store %arg5[%c0_5, %c0_6], %10 {strides = array<i32>} : memref<128x64xbf16, #tpu.memory_space<vmem>>, vector<128x64xbf16>,
    return
  }
  func.func @transform_0(%arg0: i32, %arg1: i32) -> (i32, i32) {
    %c0_i32 = arith.constant 0 : i32
    return %arg0, %arg1 : i32, i32
  }
  func.func @transform_1(%arg0: i32, %arg1: i32) -> (i32, i32) {
    %c0_i32 = arith.constant 0 : i32
    %c0_i32_0 = arith.constant 0 : i32
    return %c0_i32, %arg1 : i32, i32
  }
  func.func @transform_2(%arg0: i32, %arg1: i32) -> (i32, i32) {
    %c0_i32 = arith.constant 0 : i32
    %c0_i32_0 = arith.constant 0 : i32
    return %c0_i32, %arg1 : i32, i32
  }
  func.func @transform_3(%arg0: i32, %arg1: i32) -> (i32, i32) {
    %c0_i32 = arith.constant 0 : i32
    return %arg0, %arg1 : i32, i32
  }
}

module attributes {stable_mosaic.version = 11 : i64} {
  func.func @matmul_bias_act_kernel(%arg0: i32, %arg1: i32, %arg2: i32, %arg3: memref<96x256xbf16, #tpu.memory_space<vmem>>, %arg4: memref<256x128xbf16, #tpu.memory_space<vmem>>, %arg5: memref<1x128xf32, #tpu.memory_space<vmem>>, %arg6: memref<96x128xf32, #tpu.memory_space<vmem>>, %arg7: memref<96x128xf32, #tpu.memory_space<vmem>>) attributes {dimension_semantics = [#tpu.dimension_semantics<parallel>, #tpu.dimension_semantics<parallel>, #tpu.dimension_semantics<arbitrary>], iteration_bounds = array<i64: 2, 1, 1>, scalar_prefetch = 0 : i64, scratch_operands = 1 : i64, tpu.core_type = #tpu.core_type<tc>, window_params = [{transform_indices = @transform_0, window_bounds = array<i64: 96, 256>}, {transform_indices = @transform_1, window_bounds = array<i64: 256, 128>}, {transform_indices = @transform_2, window_bounds = array<i64: 1, 128>}, {transform_indices = @transform_3, window_bounds = array<i64: 96, 128>}]} {
    %c0_i32 = arith.constant 0 : i32
    %0 = arith.cmpi eq, %arg2, %c0_i32 : i32
    %1 = arith.extui %0 : i1 to i32
    %c0_i32_0 = arith.constant 0 : i32
    %2 = arith.cmpi ne, %1, %c0_i32_0 : i32
    scf.if %2 {
      %cst_10 = arith.constant 0.000000e+00 : f32
      %12 = vector.broadcast %cst_10 : f32 to vector<96x128xf32>
      %c0_11 = arith.constant 0 : index
      %c0_12 = arith.constant 0 : index
      %13 = vector.load %arg7[%c0_11, %c0_12] : memref<96x128xf32, #tpu.memory_space<vmem>>, vector<96x128xf32>
      tpu.vector_store %arg7[%c0_11, %c0_12], %12 {strides = array<i32>} : memref<96x128xf32, #tpu.memory_space<vmem>>, vector<96x128xf32>,
    } else {
    }
    %c0 = arith.constant 0 : index
    %c0_1 = arith.constant 0 : index
    %3 = vector.load %arg7[%c0, %c0_1] : memref<96x128xf32, #tpu.memory_space<vmem>>, vector<96x128xf32>
    %c0_2 = arith.constant 0 : index
    %c0_3 = arith.constant 0 : index
    %4 = vector.load %arg3[%c0_2, %c0_3] : memref<96x256xbf16, #tpu.memory_space<vmem>>, vector<96x256xbf16>
    %c0_4 = arith.constant 0 : index
    %c0_5 = arith.constant 0 : index
    %5 = vector.load %arg4[%c0_4, %c0_5] : memref<256x128xbf16, #tpu.memory_space<vmem>>, vector<256x128xbf16>
    %cst = arith.constant dense<0.000000e+00> : vector<96x128xf32>
    %6 = tpu.matmul %4, %5, %cst {dimension_numbers = #tpu.dot_dimension_numbers<[1], [0], [0], [1], [0, 0, 1, 1], [], []>} : vector<96x256xbf16>, vector<256x128xbf16>, vector<96x128xf32> -> vector<96x128xf32>
    %7 = arith.addf %3, %6 : vector<96x128xf32>
    %c0_6 = arith.constant 0 : index
    %c0_7 = arith.constant 0 : index
    %8 = vector.load %arg7[%c0_6, %c0_7] : memref<96x128xf32, #tpu.memory_space<vmem>>, vector<96x128xf32>
    tpu.vector_store %arg7[%c0_6, %c0_7], %7 {strides = array<i32>} : memref<96x128xf32, #tpu.memory_space<vmem>>, vector<96x128xf32>,
    %c0_i32_8 = arith.constant 0 : i32
    %9 = arith.cmpi eq, %arg2, %c0_i32_8 : i32
    %10 = arith.extui %9 : i1 to i32
    %c0_i32_9 = arith.constant 0 : i32
    %11 = arith.cmpi ne, %10, %c0_i32_9 : i32
    scf.if %11 {
      %c0_10 = arith.constant 0 : index
      %c0_11 = arith.constant 0 : index
      %12 = vector.load %arg7[%c0_10, %c0_11] : memref<96x128xf32, #tpu.memory_space<vmem>>, vector<96x128xf32>
      %c0_12 = arith.constant 0 : index
      %c0_13 = arith.constant 0 : index
      %13 = vector.load %arg5[%c0_12, %c0_13] : memref<1x128xf32, #tpu.memory_space<vmem>>, vector<1x128xf32>
      %14 = vector.broadcast %13 : vector<1x128xf32> to vector<96x128xf32>
      %15 = arith.addf %12, %14 : vector<96x128xf32>
      %16 = math.tanh %15 : vector<96x128xf32>
      %c0_14 = arith.constant 0 : index
      %c0_15 = arith.constant 0 : index
      %17 = vector.load %arg6[%c0_14, %c0_15] : memref<96x128xf32, #tpu.memory_space<vmem>>, vector<96x128xf32>
      tpu.vector_store %arg6[%c0_14, %c0_15], %16 {strides = array<i32>} : memref<96x128xf32, #tpu.memory_space<vmem>>, vector<96x128xf32>,
    } else {
    }
    return
  }
  func.func @transform_0(%arg0: i32, %arg1: i32, %arg2: i32) -> (i32, i32) {
    %c0_i32 = arith.constant 0 : i32
    return %arg0, %arg2 : i32, i32
  }
  func.func @transform_1(%arg0: i32, %arg1: i32, %arg2: i32) -> (i32, i32) {
    %c0_i32 = arith.constant 0 : i32
    return %arg2, %arg1 : i32, i32
  }
  func.func @transform_2(%arg0: i32, %arg1: i32, %arg2: i32) -> (i32, i32) {
    %c0_i32 = arith.constant 0 : i32
    %c0_i32_0 = arith.constant 0 : i32
    return %c0_i32, %arg1 : i32, i32
  }
  func.func @transform_3(%arg0: i32, %arg1: i32, %arg2: i32) -> (i32, i32) {
    %c0_i32 = arith.constant 0 : i32
    return %arg0, %arg1 : i32, i32
  }
}

</mosaic_0001>

<llo_original>
// kernel: generator_forward.6
$region0: #{generator_forward.6}
  #allocation0 [shape = 'u32[]', space=smem, size = 0x4, offset = 0x4, fixed_abs, tag = 'smem constant byte address 0x4 - core index']
  #allocation1 [shape = 'u32[144,128]{1,0:T(1,128)}', space=vmem, size = 0x12000, scoped, tag = 'internal scratch']
  #allocation2 [shape = 'f32[64,128]{1,0:T(8,128)}', space=vmem, size = 0x8000, scoped, tag = 'scratch operand']
  %s0 = inlined_call_operand.vmem [shape: bf16[128,128], index: 0, kind: input, shape index: {}]
  %s1 = inlined_call_operand.vmem [shape: bf16[128,128], index: 1, kind: input, shape index: {}]
  %s2 = inlined_call_operand.vmem [shape: f32[1,128], index: 2, kind: input, shape index: {}]
  %s3 = inlined_call_operand.vmem [shape: bf16[128,128], index: 3, kind: output, shape index: {}]
  %s4 = sld [smem:[#allocation0]]
  $region53: #{generator_forward.6} parent=0
    _
  %s6 = ssub.s32 1, %s4
  %s7 = scalar_select 0, %s6, %s4
  loop: start=0, step=1, limit=4
  $region2: #{generator_forward.6} parent=0 // loop_pre_header
    _
  $region3: #{generator_forward.6} parent=0 // loop_header
    %s9 = sphi 0, %s13
    %p10 = scmp.ge.s32.totalorder %s9, 4
    %s16 = sphi 0, %s35
    %s17 = sphi 0, %s31
    %s18 = sphi 0, %s27
    %s19 = sphi 0, %s16
    %s20 = sphi 0, %s17
    %s21 = sphi 0, %s18
    %s22 = sphi 0, %s19
    %s23 = sphi 0, %s20
    %s24 = sphi 0, %s21
    %s40 = sphi 0, %s42
    %s43 = sphi 0, %s40
    %s44 = sphi 0, %s43
    %s60 = sphi 0, %s44
    %s68 = sphi 0, %s70
    %s71 = sphi 0, %s68
    %s72 = sphi 0, %s71
    %s88 = sphi 0, %s72
    %s94 = sphi 0, %s96
    %s97 = sphi 0, %s94
    %s98 = sphi 0, %s97
    %s114 = sphi 0, %s98
    %s122 = sphi 0, %s124
    %s125 = sphi 0, %s122
    %s126 = sphi 0, %s125
    %s142 = sphi 0, %s126
  $region4: #{generator_forward.6} parent=0 // loop_header_branch
    %12 = sbr.rel (%p10) target = $region8
  $region5: #{generator_forward.6} parent=0 // loop_body
    %s14 = ssub.s32 %s9, 1
    %s15 = ssub.s32 %s9, 2
    %s25 = sadd.s32 1, %s18
    %p26 = scmp.ge.s32.totalorder %s25, 1
    %s27 = scalar_select %p26, 0, %s25
    %s28 = sadd.s32 1, %s17
    %s29 = scalar_select %p26, %s28, %s17
    %p30 = scmp.ge.s32.totalorder %s29, 1
    %s31 = scalar_select %p30, 0, %s29
    %s32 = sadd.s32 1, %s16
    %s33 = scalar_select %p30, %s32, %s16
    %p34 = scmp.ge.s32.totalorder %s33, 2
    %s35 = scalar_select %p34, 0, %s33
    %s36 = ssub.s32 %s16, %s35
    %s37 = ssub.s32 %s18, %s27
    %s38 = sor.u32 %s36, %s37
    %p39 = scmp.eq.s32.totalorder %s38, 0
    %s41 = sadd.s32 %s40, 1
    %s42 = scalar_select %p39, %s40, %s41
    %p45 = pneg %p39
    %p46 = scmp.eq.s32.totalorder %s9, 1
    %p47 = por %p45, %p46
    %p48 = scmp.ne.s32.totalorder %s40, %s43
    %p49 = scmp.eq.s32.totalorder %s9, 0
    %p50 = por %p48, %p49
    %p51 = scmp.ne.s32.totalorder %s40, %s43
    %p52 = scmp.eq.s32.totalorder %s14, 1
    %p53 = por %p51, %p52
    %p54 = scmp.ne.s32.totalorder %s43, %s44
    %p55 = scmp.eq.s32.totalorder %s14, 0
    %p56 = por %p54, %p55
    %p57 = scmp.ne.s32.totalorder %s43, %s44
    %p58 = scmp.eq.s32.totalorder %s15, 1
    %p59 = por %p57, %p58
    %p61 = scmp.ne.s32.totalorder %s44, %s60
    %p62 = scmp.eq.s32.totalorder %s15, 0
    %p63 = por %p61, %p62
    %s64 = ssub.s32 %s18, %s27
    %s65 = ssub.s32 %s17, %s31
    %s66 = sor.u32 %s64, %s65
    %p67 = scmp.eq.s32.totalorder %s66, 0
    %s69 = sadd.s32 %s68, 1
    %s70 = scalar_select %p67, %s68, %s69
    %p73 = pneg %p67
    %p74 = scmp.eq.s32.totalorder %s9, 1
    %p75 = por %p73, %p74
    %p76 = scmp.ne.s32.totalorder %s68, %s71
    %p77 = scmp.eq.s32.totalorder %s9, 0
    %p78 = por %p76, %p77
    %p79 = scmp.ne.s32.totalorder %s68, %s71
    %p80 = scmp.eq.s32.totalorder %s14, 1
    %p81 = por %p79, %p80
    %p82 = scmp.ne.s32.totalorder %s71, %s72
    %p83 = scmp.eq.s32.totalorder %s14, 0
    %p84 = por %p82, %p83
    %p85 = scmp.ne.s32.totalorder %s71, %s72
    %p86 = scmp.eq.s32.totalorder %s15, 1
    %p87 = por %p85, %p86
    %p89 = scmp.ne.s32.totalorder %s72, %s88
    %p90 = scmp.eq.s32.totalorder %s15, 0
    %p91 = por %p89, %p90
    %s92 = ssub.s32 %s17, %s31
    %p93 = scmp.eq.s32.totalorder %s92, 0
    %s95 = sadd.s32 %s94, 1
    %s96 = scalar_select %p93, %s94, %s95
    %p99 = pneg %p93
    %p100 = scmp.eq.s32.totalorder %s9, 1
    %p101 = por %p99, %p100
    %p102 = scmp.ne.s32.totalorder %s94, %s97
    %p103 = scmp.eq.s32.totalorder %s9, 0
    %p104 = por %p102, %p103
    %p105 = scmp.ne.s32.totalorder %s94, %s97
    %p106 = scmp.eq.s32.totalorder %s14, 1
    %p107 = por %p105, %p106
    %p108 = scmp.ne.s32.totalorder %s97, %s98
    %p109 = scmp.eq.s32.totalorder %s14, 0
    %p110 = por %p108, %p109
    %p111 = scmp.ne.s32.totalorder %s97, %s98
    %p112 = scmp.eq.s32.totalorder %s15, 1
    %p113 = por %p111, %p112
    %p115 = scmp.ne.s32.totalorder %s98, %s114
    %p116 = scmp.eq.s32.totalorder %s15, 0
    %p117 = por %p115, %p116
    %s118 = ssub.s32 %s16, %s35
    %s119 = ssub.s32 %s17, %s31
    %s120 = sor.u32 %s118, %s119
    %p121 = scmp.eq.s32.totalorder %s120, 0
    %s123 = sadd.s32 %s122, 1
    %s124 = scalar_select %p121, %s122, %s123
    %p127 = pneg %p121
    %p128 = scmp.eq.s32.totalorder %s9, 1
    %p129 = por %p127, %p128
    %p130 = scmp.ne.s32.totalorder %s122, %s125
    %p131 = scmp.eq.s32.totalorder %s9, 0
    %p132 = por %p130, %p131
    %p133 = scmp.ne.s32.totalorder %s122, %s125
    %p134 = scmp.eq.s32.totalorder %s14, 1
    %p135 = por %p133, %p134
    %p136 = scmp.ne.s32.totalorder %s125, %s126
    %p137 = scmp.eq.s32.totalorder %s14, 0
    %p138 = por %p136, %p137
    %p139 = scmp.ne.s32.totalorder %s125, %s126
    %p140 = scmp.eq.s32.totalorder %s15, 1
    %p141 = por %p139, %p140
    %p143 = scmp.ne.s32.totalorder %s126, %s142
    %p144 = scmp.eq.s32.totalorder %s15, 0
    %p145 = por %p143, %p144
    %p146 = scmp.le.s32.totalorder 1, %s9
    %p147 = scmp.lt.s32.totalorder %s9, 3
    %p148 = pnand %p146, %p147
    %p149 = pneg %p148
    // Predicated region
    $region9: #{generator_forward.6} parent=5 // pred_check
      _
    $region10: #{generator_forward.6} parent=5 // pred_check_branch
      %151 = sbr.rel (%p148) target = $region12
    $region11: #{generator_forward.6} parent=5 // pred_region
      %s152 = ssub.s32 %s9, 1
      // Predicated region
      $region13: #{generator_forward.6} parent=11 // pred_check
        %p153 = pneg %p84
      $region14: #{generator_forward.6} parent=11 // pred_check_branch
        %155 = sbr.rel (%p153) target = $region16
      $region15: #{generator_forward.6} parent=11 // pred_region
        %s156 = smul.u32 16, %s21
        %p157 = scmp.lt.s32.totalorder %s156, 15
        %s158 = scalar_select %p157, %s156, 15
        %p159 = scmp.lt.s32.totalorder %s20, 0
        %s160 = scalar_select %p159, %s20, 0
        %s161 = sadd.s32 %s160, %s158
        %s162 = smul.addr %s161, 4
        %s163 = scalar_lea.vmem %s1, %s162
        %s164 = smul.u32 16, %s21
      $region16: #{generator_forward.6} parent=11 // pred_fallthru
        _
      // Predicated region
      $region17: #{generator_forward.6} parent=11 // pred_check
        %p165 = pneg %p110
      $region18: #{generator_forward.6} parent=11 // pred_check_branch
        %167 = sbr.rel (%p165) target = $region20
      $region19: #{generator_forward.6} parent=11 // pred_region
        %p168 = scmp.lt.s32.totalorder %s20, 0
        %s169 = scalar_select %p168, %s20, 0
        %s170 = scalar_lea.vmem %s2, %s169
      $region20: #{generator_forward.6} parent=11 // pred_fallthru
        _
    $region12: #{generator_forward.6} parent=5 // pred_fallthru
      _
    %p171 = scmp.lt.s32.totalorder %s9, 2
    // Predicated region
    $region21: #{generator_forward.6} parent=5 // pred_check
      %p172 = pneg %p171
    $region22: #{generator_forward.6} parent=5 // pred_check_branch
      %174 = sbr.rel (%p172) target = $region24
    $region23: #{generator_forward.6} parent=5 // pred_region
      // Predicated region
      $region25: #{generator_forward.6} parent=23 // pred_check
        %p175 = pneg %p50
      $region26: #{generator_forward.6} parent=23 // pred_check_branch
        %177 = sbr.rel (%p175) target = $region28
      $region27: #{generator_forward.6} parent=23 // pred_region
        %s178 = smul.u32 8, %s16
        %p179 = scmp.lt.s32.totalorder %s178, 15
        %s180 = scalar_select %p179, %s178, 15
        %p181 = scmp.lt.s32.totalorder %s18, 0
        %s182 = scalar_select %p181, %s18, 0
        %s183 = sadd.s32 %s182, %s180
        %s184 = smul.addr %s183, 4
        %s185 = scalar_lea.vmem %s0, %s184
        %s186 = smul.u32 8, %s16
      $region28: #{generator_forward.6} parent=23 // pred_fallthru
        _
    $region24: #{generator_forward.6} parent=5 // pred_fallthru
      _
    %p187 = scmp.le.s32.totalorder 1, %s9
    %p188 = scmp.lt.s32.totalorder %s9, 3
    %p189 = pnand %p187, %p188
    %p190 = pneg %p189
    // Predicated region
    $region29: #{generator_forward.6} parent=5 // pred_check
      _
    $region30: #{generator_forward.6} parent=5 // pred_check_branch
      %192 = sbr.rel (%p189) target = $region32
    $region31: #{generator_forward.6} parent=5 // pred_region
      %s193 = ssub.s32 %s9, 1
      %s194 = smul.u32 8, %s19
      %p195 = scmp.lt.s32.totalorder %s194, 15
      %s196 = scalar_select %p195, %s194, 15
      %p197 = scmp.lt.s32.totalorder %s21, 0
      %s198 = scalar_select %p197, %s21, 0
      %s199 = sadd.s32 %s198, %s196
      %s200 = smul.addr %s199, 4
      %s201 = scalar_lea.vmem %s0, %s200
      %p202 = pneg %p56
      %p203 = pneg %p53
      %s204 = smul.u32 16, %s21
      %p205 = scmp.lt.s32.totalorder %s204, 15
      %s206 = scalar_select %p205, %s204, 15
      %p207 = scmp.lt.s32.totalorder %s20, 0
      %s208 = scalar_select %p207, %s20, 0
      %s209 = sadd.s32 %s208, %s206
      %s210 = smul.addr %s209, 4
      %s211 = scalar_lea.vmem %s1, %s210
      %p212 = pneg %p84
      %p213 = pneg %p81
      %p214 = scmp.lt.s32.totalorder %s20, 0
      %s215 = scalar_select %p214, %s20, 0
      %s216 = scalar_lea.vmem %s2, %s215
      %p217 = pneg %p110
      %p218 = pneg %p107
      %p219 = pneg %p138
      %p220 = pneg %p135
      %s221 = smul.u32 8, %s19
      %p222 = scmp.lt.s32.totalorder %s221, 15
      %s223 = scalar_select %p222, %s221, 15
      %p224 = scmp.lt.s32.totalorder %s20, 0
      %s225 = scalar_select %p224, %s20, 0
      %s226 = sadd.s32 %s225, %s223
      %s227 = smul.addr %s226, 4
      %s228 = scalar_lea.vmem %s3, %s227
      %s229 = smul.u32 8, %s19
      %p230 = scmp.lt.s32.totalorder %s229, 15
      %s231 = scalar_select %p230, %s229, 15
      %p232 = scmp.lt.s32.totalorder %s21, 0
      %s233 = scalar_select %p232, %s21, 0
      %s234 = sadd.s32 %s233, %s231
      %s235 = smul.addr %s234, 4
      %s236 = scalar_lea.vmem %s0, %s235
      %s237 = smul.u32 8, %s19
      %s238 = smul.u32 16, %s21
      %p239 = scmp.lt.s32.totalorder %s238, 15
      %s240 = scalar_select %p239, %s238, 15
      %p241 = scmp.lt.s32.totalorder %s20, 0
      %s242 = scalar_select %p241, %s20, 0
      %s243 = sadd.s32 %s242, %s240
      %s244 = smul.addr %s243, 4
      %s245 = scalar_lea.vmem %s1, %s244
      %s246 = smul.u32 16, %s21
      %p247 = scmp.lt.s32.totalorder %s20, 0
      %s248 = scalar_select %p247, %s20, 0
      %s249 = scalar_lea.vmem %s2, %s248
      %s250 = smul.u32 8, %s19
      %p251 = scmp.lt.s32.totalorder %s250, 15
      %s252 = scalar_select %p251, %s250, 15
      %p253 = scmp.lt.s32.totalorder %s20, 0
      %s254 = scalar_select %p253, %s20, 0
      %s255 = sadd.s32 %s254, %s252
      %s256 = smul.addr %s255, 4
      %s257 = scalar_lea.vmem %s3, %s256
      %s258 = smul.u32 8, %s19
      %p260 = scmp.eq.s32.totalorder %s21, 0
      // Predicated region
      $region33: #{generator_forward.6} parent=31 // pred_check
        %p261 = pneg %p260
      $region34: #{generator_forward.6} parent=31 // pred_check_branch
        %263 = sbr.rel (%p261) target = $region36
      $region35: #{generator_forward.6} parent=31 // pred_region
        %264 = vst [vmem:[#allocation2] sm:$0xff] 0.0
        %265 = vst [vmem:[#allocation2 + $0x8] sm:$0xff] 0.0
        %266 = vst [vmem:[#allocation2 + $0x10] sm:$0xff] 0.0
        %267 = vst [vmem:[#allocation2 + $0x18] sm:$0xff] 0.0
        %268 = vst [vmem:[#allocation2 + $0x20] sm:$0xff] 0.0
        %269 = vst [vmem:[#allocation2 + $0x28] sm:$0xff] 0.0
        %270 = vst [vmem:[#allocation2 + $0x30] sm:$0xff] 0.0
        %271 = vst [vmem:[#allocation2 + $0x38] sm:$0xff] 0.0
      $region36: #{generator_forward.6} parent=31 // pred_fallthru
        _
      %v272 = vld [vmem:[#allocation2] sm:$0xff]
      %v273 = vld [vmem:[#allocation2 + $0x8] sm:$0xff]
      %v274 = vld [vmem:[#allocation2 + $0x10] sm:$0xff]
      %v275 = vld [vmem:[#allocation2 + $0x18] sm:$0xff]
      %v276 = vld [vmem:[#allocation2 + $0x20] sm:$0xff]
      %v277 = vld [vmem:[#allocation2 + $0x28] sm:$0xff]
      %v278 = vld [vmem:[#allocation2 + $0x30] sm:$0xff]
      %v279 = vld [vmem:[#allocation2 + $0x38] sm:$0xff]
      %v280 = vld [vmem:[%s236] sm:$0xf]
      %v281 = vld [vmem:[%s236 + $0x4] sm:$0xf]
      %v282 = vld [vmem:[%s236 + $0x8] sm:$0xf]
      %v283 = vld [vmem:[%s236 + $0xc] sm:$0xf]
      %v284 = vld [vmem:[%s236 + $0x10] sm:$0xf]
      %v285 = vld [vmem:[%s236 + $0x14] sm:$0xf]
      %v286 = vld [vmem:[%s236 + $0x18] sm:$0xf]
      %v287 = vld [vmem:[%s236 + $0x1c] sm:$0xf]
      %v288 = vld [vmem:[%s245] sm:$0xf]
      %v289 = vld [vmem:[%s245 + $0x4] sm:$0xf]
      %v290 = vld [vmem:[%s245 + $0x8] sm:$0xf]
      %v291 = vld [vmem:[%s245 + $0xc] sm:$0xf]
      %v292 = vld [vmem:[%s245 + $0x10] sm:$0xf]
      %v293 = vld [vmem:[%s245 + $0x14] sm:$0xf]
      %v294 = vld [vmem:[%s245 + $0x18] sm:$0xf]
      %v295 = vld [vmem:[%s245 + $0x1c] sm:$0xf]
      %v296 = vld [vmem:[%s245 + $0x20] sm:$0xf]
      %v297 = vld [vmem:[%s245 + $0x24] sm:$0xf]
      %v298 = vld [vmem:[%s245 + $0x28] sm:$0xf]
      %v299 = vld [vmem:[%s245 + $0x2c] sm:$0xf]
      %v300 = vld [vmem:[%s245 + $0x30] sm:$0xf]
      %v301 = vld [vmem:[%s245 + $0x34] sm:$0xf]
      %v302 = vld [vmem:[%s245 + $0x38] sm:$0xf]
      %v303 = vld [vmem:[%s245 + $0x3c] sm:$0xf]
      %v312 = vunpack.c.l.b16 %v280
      %v313 = vunpack.c.l.b16 %v281
      %v314 = vunpack.c.l.b16 %v282
      %v315 = vunpack.c.l.b16 %v283
      %v316 = vunpack.c.l.b16 %v284
      %v317 = vunpack.c.l.b16 %v285
      %v318 = vunpack.c.l.b16 %v286
      %v319 = vunpack.c.l.b16 %v287
      %v320 = vpack.c.b16 %v313, %v312
      %v321 = vpack.c.b16 %v315, %v314
      %v322 = vpack.c.b16 %v317, %v316
      %v323 = vpack.c.b16 %v319, %v318
      %v344 = vunpack.c.l.b16 %v288
      %v345 = vunpack.c.l.b16 %v289
      %v346 = vunpack.c.l.b16 %v290
      %v347 = vunpack.c.l.b16 %v291
      %v348 = vunpack.c.l.b16 %v292
      %v349 = vunpack.c.l.b16 %v293
      %v350 = vunpack.c.l.b16 %v294
      %v351 = vunpack.c.l.b16 %v295
      %v352 = vunpack.c.l.b16 %v296
      %v353 = vunpack.c.l.b16 %v297
      %v354 = vunpack.c.l.b16 %v298
      %v355 = vunpack.c.l.b16 %v299
      %v356 = vunpack.c.l.b16 %v300
      %v357 = vunpack.c.l.b16 %v301
      %v358 = vunpack.c.l.b16 %v302
      %v359 = vunpack.c.l.b16 %v303
      %v360 = vpack.c.b16 %v345, %v344
      %v361 = vpack.c.b16 %v347, %v346
      %v362 = vpack.c.b16 %v349, %v348
      %v363 = vpack.c.b16 %v351, %v350
      %v364 = vpack.c.b16 %v353, %v352
      %v365 = vpack.c.b16 %v355, %v354
      %v366 = vpack.c.b16 %v357, %v356
      %v367 = vpack.c.b16 %v359, %v358
      %376 = vmatprep.subr.bf16.mxu0 0
      %377 = vmatpush1.bf16.msra.mxu0 %v367
      %378 = vmatprep.subr.bf16.mxu0 0
      %379 = vmatpush1.bf16.msra.mxu0 %v366
      %380 = vmatprep.subr.bf16.mxu0 0
      %381 = vmatpush1.bf16.msra.mxu0 %v365
      %382 = vmatprep.subr.bf16.mxu0 0
      %383 = vmatpush1.bf16.msra.mxu0 %v364
      %384 = vmatprep.subr.bf16.mxu0 0
      %385 = vmatpush1.bf16.msra.mxu0 %v363
      %386 = vmatprep.subr.bf16.mxu0 0
      %387 = vmatpush1.bf16.msra.mxu0 %v362
      %388 = vmatprep.subr.bf16.mxu0 0
      %389 = vmatpush1.bf16.msra.mxu0 %v361
      %390 = vmatprep.subr.bf16.mxu0 0
      %391 = vmatpush1.bf16.msra.mxu0 %v360
      %392 = vmatprep.subr.bf16.mxu0 0
      %393 = vmatpush2.bf16.msra.mxu0 0
      %394 = vmatprep.subr.bf16.mxu0 0
      %395 = vmatpush2.bf16.msra.mxu0 0
      %396 = vmatprep.subr.bf16.mxu0 0
      %397 = vmatpush2.bf16.msra.mxu0 0
      %398 = vmatprep.subr.bf16.mxu0 0
      %399 = vmatpush2.bf16.msra.mxu0 0
      %400 = vmatprep.subr.bf16.mxu0 0
      %401 = vmatpush2.bf16.msra.mxu0 0
      %402 = vmatprep.subr.bf16.mxu0 0
      %403 = vmatpush2.bf16.msra.mxu0 0
      %404 = vmatprep.subr.bf16.mxu0 0
      %405 = vmatpush2.bf16.msra.mxu0 0
      %406 = vmatprep.subr.bf16.mxu0 0
      %407 = vmatpush2.bf16.msra.mxu0 0
      %408 = vmatprep.mubr.bf16.mxu0 0
      %409 = vmatmul.mubr.bf16.gmra.mxu0 %v320
      %v410 = vpop.f32.mrf.mxu0
      %v411 = vadd.f32 0.0, %v410
      %v412 = vpop.f32.mrf.mxu0
      %v413 = vpop.f32.mrf.mxu0
      %v414 = vadd.f32 0.0, %v413
      %v415 = vpop.f32.mrf.mxu0
      %416 = vmatprep.mubr.bf16.mxu0 0
      %417 = vmatmul.mubr.bf16.gmra.mxu0 %v321
      %v418 = vpop.f32.mrf.mxu0
      %v419 = vadd.f32 0.0, %v418
      %v420 = vpop.f32.mrf.mxu0
      %v421 = vpop.f32.mrf.mxu0
      %v422 = vadd.f32 0.0, %v421
      %v423 = vpop.f32.mrf.mxu0
      %424 = vmatprep.mubr.bf16.mxu0 0
      %425 = vmatmul.mubr.bf16.gmra.mxu0 %v322
      %v426 = vpop.f32.mrf.mxu0
      %v427 = vadd.f32 0.0, %v426
      %v428 = vpop.f32.mrf.mxu0
      %v429 = vpop.f32.mrf.mxu0
      %v430 = vadd.f32 0.0, %v429
      %v431 = vpop.f32.mrf.mxu0
      %432 = vmatprep.mubr.bf16.mxu0 0
      %433 = vmatmul.mubr.bf16.gmra.mxu0 %v323
      %v434 = vpop.f32.mrf.mxu0
      %v435 = vadd.f32 0.0, %v434
      %v436 = vpop.f32.mrf.mxu0
      %v437 = vpop.f32.mrf.mxu0
      %v438 = vadd.f32 0.0, %v437
      %v439 = vpop.f32.mrf.mxu0
      %440 = vdwg.mxu0
      %v441 = vadd.f32 %v272, %v411
      %v442 = vadd.f32 %v273, %v414
      %v443 = vadd.f32 %v274, %v419
      %v444 = vadd.f32 %v275, %v422
      %v445 = vadd.f32 %v276, %v427
      %v446 = vadd.f32 %v277, %v430
      %v447 = vadd.f32 %v278, %v435
      %v448 = vadd.f32 %v279, %v438
      %449 = vst [vmem:[#allocation2] sm:$0xff] %v441
      %450 = vst [vmem:[#allocation2 + $0x8] sm:$0xff] %v442
      %451 = vst [vmem:[#allocation2 + $0x10] sm:$0xff] %v443
      %452 = vst [vmem:[#allocation2 + $0x18] sm:$0xff] %v444
      %453 = vst [vmem:[#allocation2 + $0x20] sm:$0xff] %v445
      %454 = vst [vmem:[#allocation2 + $0x28] sm:$0xff] %v446
      %455 = vst [vmem:[#allocation2 + $0x30] sm:$0xff] %v447
      %456 = vst [vmem:[#allocation2 + $0x38] sm:$0xff] %v448
      // Predicated region
      $region37: #{generator_forward.6} parent=31 // pred_check
        %p457 = pneg %p260
      $region38: #{generator_forward.6} parent=31 // pred_check_branch
        %459 = sbr.rel (%p457) target = $region40
      $region39: #{generator_forward.6} parent=31 // pred_region
        %v460 = vld [vmem:[#allocation2] sm:$0xff]
        %v461 = vld [vmem:[#allocation2 + $0x8] sm:$0xff]
        %v462 = vld [vmem:[#allocation2 + $0x10] sm:$0xff]
        %v463 = vld [vmem:[#allocation2 + $0x18] sm:$0xff]
        %v464 = vld [vmem:[#allocation2 + $0x20] sm:$0xff]
        %v465 = vld [vmem:[#allocation2 + $0x28] sm:$0xff]
        %v466 = vld [vmem:[#allocation2 + $0x30] sm:$0xff]
        %v467 = vld [vmem:[#allocation2 + $0x38] sm:$0xff]
        %v468 = vld [vmem:[%s249] sm:$0x1]
        %v470 = vlaneseq
        %v471 = vshrl.u32 %v470, 7
        %v472 = vsub.s32 0, %v471
        %v473 = vrot.slane %v468, %v472
        %v475 = vadd.f32 %v460, %v473
        %v476 = vadd.f32 %v461, %v473
        %v477 = vadd.f32 %v462, %v473
        %v478 = vadd.f32 %v463, %v473
        %v479 = vadd.f32 %v464, %v473
        %v480 = vadd.f32 %v465, %v473
        %v481 = vadd.f32 %v466, %v473
        %v482 = vadd.f32 %v467, %v473
        %vm483 = vcmp.gt.f32.partialorder %v475, 0.0
        %vm484 = vcmp.gt.f32.partialorder %v476, 0.0
        %vm485 = vcmp.gt.f32.partialorder %v477, 0.0
        %vm486 = vcmp.gt.f32.partialorder %v478, 0.0
        %vm487 = vcmp.gt.f32.partialorder %v479, 0.0
        %vm488 = vcmp.gt.f32.partialorder %v480, 0.0
        %vm489 = vcmp.gt.f32.partialorder %v481, 0.0
        %vm490 = vcmp.gt.f32.partialorder %v482, 0.0
        %v491 = vmul.f32 %v475, 0.2
        %v492 = vmul.f32 %v476, 0.2
        %v493 = vmul.f32 %v477, 0.2
        %v494 = vmul.f32 %v478, 0.2
        %v495 = vmul.f32 %v479, 0.2
        %v496 = vmul.f32 %v480, 0.2
        %v497 = vmul.f32 %v481, 0.2
        %v498 = vmul.f32 %v482, 0.2
        %v499 = vsel %vm483, %v475, %v491
        %v500 = vsel %vm484, %v476, %v492
        %v501 = vsel %vm485, %v477, %v493
        %v502 = vsel %vm486, %v478, %v494
        %v503 = vsel %vm487, %v479, %v495
        %v504 = vsel %vm488, %v480, %v496
        %v505 = vsel %vm489, %v481, %v497
        %v506 = vsel %vm490, %v482, %v498
        %v507 = vpack.c.bf16 %v500, %v499
        %v508 = vpack.c.bf16 %v502, %v501
        %v509 = vpack.c.bf16 %v504, %v503
        %v510 = vpack.c.bf16 %v506, %v505
        %v515 = vunpack.c.l.b16 %v507
        %v516 = vunpack.c.h.b16 %v507
        %v517 = vunpack.c.l.b16 %v508
        %v518 = vunpack.c.h.b16 %v508
        %v519 = vunpack.c.l.b16 %v509
        %v520 = vunpack.c.h.b16 %v509
        %v521 = vunpack.c.l.b16 %v510
        %v522 = vunpack.c.h.b16 %v510
        %v523 = vpack.c.b16 %v515, %v515
        %v524 = vpack.c.b16 %v516, %v516
        %v525 = vpack.c.b16 %v517, %v517
        %v526 = vpack.c.b16 %v518, %v518
        %v527 = vpack.c.b16 %v519, %v519
        %v528 = vpack.c.b16 %v520, %v520
        %v529 = vpack.c.b16 %v521, %v521
        %v530 = vpack.c.b16 %v522, %v522
        %539 = vst [vmem:[%s257] sm:$0xf] %v523
        %540 = vst [vmem:[%s257 + $0x4] sm:$0xf] %v524
        %541 = vst [vmem:[%s257 + $0x8] sm:$0xf] %v525
        %542 = vst [vmem:[%s257 + $0xc] sm:$0xf] %v526
        %543 = vst [vmem:[%s257 + $0x10] sm:$0xf] %v527
        %544 = vst [vmem:[%s257 + $0x14] sm:$0xf] %v528
        %545 = vst [vmem:[%s257 + $0x18] sm:$0xf] %v529
        %546 = vst [vmem:[%s257 + $0x1c] sm:$0xf] %v530
      $region40: #{generator_forward.6} parent=31 // pred_fallthru
        _
      %s547 = smul.u32 8, %s19
      %p548 = scmp.lt.s32.totalorder %s547, 15
      %s549 = scalar_select %p548, %s547, 15
      %p550 = scmp.lt.s32.totalorder %s20, 0
      %s551 = scalar_select %p550, %s20, 0
      %s552 = sadd.s32 %s551, %s549
      %s553 = smul.addr %s552, 4
      %s554 = scalar_lea.vmem %s3, %s553
      // Predicated region
      $region41: #{generator_forward.6} parent=31 // pred_check
        %p555 = pneg %p135
      $region42: #{generator_forward.6} parent=31 // pred_check_branch
        %557 = sbr.rel (%p555) target = $region44
      $region43: #{generator_forward.6} parent=31 // pred_region
        %s558 = smul.u32 8, %s19
      $region44: #{generator_forward.6} parent=31 // pred_fallthru
        _
    $region32: #{generator_forward.6} parent=5 // pred_fallthru
      _
    %p559 = scmp.le.s32.totalorder 2, %s9
    // Predicated region
    $region45: #{generator_forward.6} parent=5 // pred_check
      %p560 = pneg %p559
    $region46: #{generator_forward.6} parent=5 // pred_check_branch
      %562 = sbr.rel (%p560) target = $region48
    $region47: #{generator_forward.6} parent=5 // pred_region
      %s563 = ssub.s32 %s9, 2
      // Predicated region
      $region49: #{generator_forward.6} parent=47 // pred_check
        %p564 = pneg %p141
      $region50: #{generator_forward.6} parent=47 // pred_check_branch
        %566 = sbr.rel (%p564) target = $region52
      $region51: #{generator_forward.6} parent=47 // pred_region
        %s567 = smul.u32 8, %s22
        %p568 = scmp.lt.s32.totalorder %s567, 15
        %s569 = scalar_select %p568, %s567, 15
        %p570 = scmp.lt.s32.totalorder %s23, 0
        %s571 = scalar_select %p570, %s23, 0
        %s572 = sadd.s32 %s571, %s569
        %s573 = smul.addr %s572, 4
        %s574 = scalar_lea.vmem %s3, %s573
      $region52: #{generator_forward.6} parent=47 // pred_fallthru
        _
    $region48: #{generator_forward.6} parent=5 // pred_fallthru
      _
  $region6: #{generator_forward.6} parent=0 // loop_footer
    %s13 = sadd.s32 1, %s9
  $region7: #{generator_forward.6} parent=0 // loop_footer_branch
    %8 = sbr.rel target = $region3
  $region8: #{generator_forward.6} parent=0 // loop_exit
    _

// kernel: generator_forward.7
$region0: #{generator_forward.7}
  #allocation0 [shape = 'u32[]', space=smem, size = 0x4, offset = 0x4, fixed_abs, tag = 'smem constant byte address 0x4 - core index']
  #allocation1 [shape = 'u32[144,128]{1,0:T(1,128)}', space=vmem, size = 0x12000, scoped, tag = 'internal scratch']
  #allocation2 [shape = 'f32[16,128]{1,0:T(8,128)}', space=vmem, size = 0x2000, scoped, tag = 'scratch operand']
  %s0 = inlined_call_operand.vmem [shape: bf16[32,1024], index: 0, kind: input, shape index: {}]
  %s1 = inlined_call_operand.vmem [shape: bf16[1024,128], index: 1, kind: input, shape index: {}]
  %s2 = inlined_call_operand.vmem [shape: f32[1,128], index: 2, kind: input, shape index: {}]
  %s3 = inlined_call_operand.vmem [shape: bf16[32,128], index: 3, kind: output, shape index: {0}]
  %s4 = inlined_call_operand.vmem [shape: f32[16,128], index: 4, kind: output, shape index: {1}]
  %s5 = inlined_call_operand.vmem [shape: f32[16,128], index: 5, kind: output, shape index: {2}]
  %6 = xla_tuple %s3, %s4, %s5
  %s7 = sld [smem:[#allocation0]]
  $region92: #{generator_forward.7} parent=0
    _
  %s9 = ssub.s32 1, %s7
  %s10 = scalar_select 0, %s9, %s7
  $region1: #{generator_forward.7} parent=0
    #allocation3 [shape = 'u8[32768]{0}', space=vmem, size = 0x8000, scoped, tag = 'input window, operand 0']
    loop: start=0, step=1, limit=6
    $region2: #{generator_forward.7} parent=1 // loop_pre_header
      _
    $region3: #{generator_forward.7} parent=1 // loop_header
      %s12 = sphi 0, %s16
      %p13 = scmp.ge.s32.totalorder %s12, 6
      %s19 = sphi 0, %s38
      %s20 = sphi 0, %s34
      %s21 = sphi 0, %s30
      %s22 = sphi 0, %s19
      %s23 = sphi 0, %s20
      %s24 = sphi 0, %s21
      %s25 = sphi 0, %s22
      %s26 = sphi 0, %s23
      %s27 = sphi 0, %s24
      %s43 = sphi 0, %s45
      %s46 = sphi 0, %s43
      %s47 = sphi 0, %s46
      %s63 = sphi 0, %s47
      %s71 = sphi 0, %s73
      %s74 = sphi 0, %s71
      %s75 = sphi 0, %s74
      %s91 = sphi 0, %s75
      %s97 = sphi 0, %s99
      %s100 = sphi 0, %s97
      %s101 = sphi 0, %s100
      %s117 = sphi 0, %s101
      %s125 = sphi 0, %s127
      %s128 = sphi 0, %s125
      %s129 = sphi 0, %s128
      %s145 = sphi 0, %s129
      %s153 = sphi 0, %s155
      %s156 = sphi 0, %s153
      %s157 = sphi 0, %s156
      %s173 = sphi 0, %s157
      %s181 = sphi 0, %s183
      %s184 = sphi 0, %s181
      %s185 = sphi 0, %s184
      %s201 = sphi 0, %s185
    $region4: #{generator_forward.7} parent=1 // loop_header_branch
      %15 = sbr.rel (%p13) target = $region8
    $region5: #{generator_forward.7} parent=1 // loop_body
      %s17 = ssub.s32 %s12, 1
      %s18 = ssub.s32 %s12, 2
      %s28 = sadd.s32 1, %s21
      %p29 = scmp.ge.s32.totalorder %s28, 2
      %s30 = scalar_select %p29, 0, %s28
      %s31 = sadd.s32 1, %s20
      %s32 = scalar_select %p29, %s31, %s20
      %p33 = scmp.ge.s32.totalorder %s32, 1
      %s34 = scalar_select %p33, 0, %s32
      %s35 = sadd.s32 1, %s19
      %s36 = scalar_select %p33, %s35, %s19
      %p37 = scmp.ge.s32.totalorder %s36, 2
      %s38 = scalar_select %p37, 0, %s36
      %s39 = ssub.s32 %s19, %s38
      %s40 = ssub.s32 %s21, %s30
      %s41 = sor.u32 %s39, %s40
      %p42 = scmp.eq.s32.totalorder %s41, 0
      %s44 = sadd.s32 %s43, 1
      %s45 = scalar_select %p42, %s43, %s44
      %p48 = pneg %p42
      %p49 = scmp.eq.s32.totalorder %s12, 3
      %p50 = por %p48, %p49
      %p51 = scmp.ne.s32.totalorder %s43, %s46
      %p52 = scmp.eq.s32.totalorder %s12, 0
      %p53 = por %p51, %p52
      %p54 = scmp.ne.s32.totalorder %s43, %s46
      %p55 = scmp.eq.s32.totalorder %s17, 3
      %p56 = por %p54, %p55
      %p57 = scmp.ne.s32.totalorder %s46, %s47
      %p58 = scmp.eq.s32.totalorder %s17, 0
      %p59 = por %p57, %p58
      %p60 = scmp.ne.s32.totalorder %s46, %s47
      %p61 = scmp.eq.s32.totalorder %s18, 3
      %p62 = por %p60, %p61
      %p64 = scmp.ne.s32.totalorder %s47, %s63
      %p65 = scmp.eq.s32.totalorder %s18, 0
      %p66 = por %p64, %p65
      %s67 = ssub.s32 %s21, %s30
      %s68 = ssub.s32 %s20, %s34
      %s69 = sor.u32 %s67, %s68
      %p70 = scmp.eq.s32.totalorder %s69, 0
      %s72 = sadd.s32 %s71, 1
      %s73 = scalar_select %p70, %s71, %s72
      %p76 = pneg %p70
      %p77 = scmp.eq.s32.totalorder %s12, 3
      %p78 = por %p76, %p77
      %p79 = scmp.ne.s32.totalorder %s71, %s74
      %p80 = scmp.eq.s32.totalorder %s12, 0
      %p81 = por %p79, %p80
      %p82 = scmp.ne.s32.totalorder %s71, %s74
      %p83 = scmp.eq.s32.totalorder %s17, 3
      %p84 = por %p82, %p83
      %p85 = scmp.ne.s32.totalorder %s74, %s75
      %p86 = scmp.eq.s32.totalorder %s17, 0
      %p87 = por %p85, %p86
      %p88 = scmp.ne.s32.totalorder %s74, %s75
      %p89 = scmp.eq.s32.totalorder %s18, 3
      %p90 = por %p88, %p89
      %p92 = scmp.ne.s32.totalorder %s75, %s91
      %p93 = scmp.eq.s32.totalorder %s18, 0
      %p94 = por %p92, %p93
      %s95 = ssub.s32 %s20, %s34
      %p96 = scmp.eq.s32.totalorder %s95, 0
      %s98 = sadd.s32 %s97, 1
      %s99 = scalar_select %p96, %s97, %s98
      %p102 = pneg %p96
      %p103 = scmp.eq.s32.totalorder %s12, 3
      %p104 = por %p102, %p103
      %p105 = scmp.ne.s32.totalorder %s97, %s100
      %p106 = scmp.eq.s32.totalorder %s12, 0
      %p107 = por %p105, %p106
      %p108 = scmp.ne.s32.totalorder %s97, %s100
      %p109 = scmp.eq.s32.totalorder %s17, 3
      %p110 = por %p108, %p109
      %p111 = scmp.ne.s32.totalorder %s100, %s101
      %p112 = scmp.eq.s32.totalorder %s17, 0
      %p113 = por %p111, %p112
      %p114 = scmp.ne.s32.totalorder %s100, %s101
      %p115 = scmp.eq.s32.totalorder %s18, 3
      %p116 = por %p114, %p115
      %p118 = scmp.ne.s32.totalorder %s101, %s117
      %p119 = scmp.eq.s32.totalorder %s18, 0
      %p120 = por %p118, %p119
      %s121 = ssub.s32 %s19, %s38
      %s122 = ssub.s32 %s20, %s34
      %s123 = sor.u32 %s121, %s122
      %p124 = scmp.eq.s32.totalorder %s123, 0
      %s126 = sadd.s32 %s125, 1
      %s127 = scalar_select %p124, %s125, %s126
      %p130 = pneg %p124
      %p131 = scmp.eq.s32.totalorder %s12, 3
      %p132 = por %p130, %p131
      %p133 = scmp.ne.s32.totalorder %s125, %s128
      %p134 = scmp.eq.s32.totalorder %s12, 0
      %p135 = por %p133, %p134
      %p136 = scmp.ne.s32.totalorder %s125, %s128
      %p137 = scmp.eq.s32.totalorder %s17, 3
      %p138 = por %p136, %p137
      %p139 = scmp.ne.s32.totalorder %s128, %s129
      %p140 = scmp.eq.s32.totalorder %s17, 0
      %p141 = por %p139, %p140
      %p142 = scmp.ne.s32.totalorder %s128, %s129
      %p143 = scmp.eq.s32.totalorder %s18, 3
      %p144 = por %p142, %p143
      %p146 = scmp.ne.s32.totalorder %s129, %s145
      %p147 = scmp.eq.s32.totalorder %s18, 0
      %p148 = por %p146, %p147
      %s149 = ssub.s32 %s19, %s38
      %s150 = ssub.s32 %s20, %s34
      %s151 = sor.u32 %s149, %s150
      %p152 = scmp.eq.s32.totalorder %s151, 0
      %s154 = sadd.s32 %s153, 1
      %s155 = scalar_select %p152, %s153, %s154
      %p158 = pneg %p152
      %p159 = scmp.eq.s32.totalorder %s12, 3
      %p160 = por %p158, %p159
      %p161 = scmp.ne.s32.totalorder %s153, %s156
      %p162 = scmp.eq.s32.totalorder %s12, 0
      %p163 = por %p161, %p162
      %p164 = scmp.ne.s32.totalorder %s153, %s156
      %p165 = scmp.eq.s32.totalorder %s17, 3
      %p166 = por %p164, %p165
      %p167 = scmp.ne.s32.totalorder %s156, %s157
      %p168 = scmp.eq.s32.totalorder %s17, 0
      %p169 = por %p167, %p168
      %p170 = scmp.ne.s32.totalorder %s156, %s157
      %p171 = scmp.eq.s32.totalorder %s18, 3
      %p172 = por %p170, %p171
      %p174 = scmp.ne.s32.totalorder %s157, %s173
      %p175 = scmp.eq.s32.totalorder %s18, 0
      %p176 = por %p174, %p175
      %s177 = ssub.s32 %s19, %s38
      %s178 = ssub.s32 %s20, %s34
      %s179 = sor.u32 %s177, %s178
      %p180 = scmp.eq.s32.totalorder %s179, 0
      %s182 = sadd.s32 %s181, 1
      %s183 = scalar_select %p180, %s181, %s182
      %p186 = pneg %p180
      %p187 = scmp.eq.s32.totalorder %s12, 3
      %p188 = por %p186, %p187
      %p189 = scmp.ne.s32.totalorder %s181, %s184
      %p190 = scmp.eq.s32.totalorder %s12, 0
      %p191 = por %p189, %p190
      %p192 = scmp.ne.s32.totalorder %s181, %s184
      %p193 = scmp.eq.s32.totalorder %s17, 3
      %p194 = por %p192, %p193
      %p195 = scmp.ne.s32.totalorder %s184, %s185
      %p196 = scmp.eq.s32.totalorder %s17, 0
      %p197 = por %p195, %p196
      %p198 = scmp.ne.s32.totalorder %s184, %s185
      %p199 = scmp.eq.s32.totalorder %s18, 3
      %p200 = por %p198, %p199
      %p202 = scmp.ne.s32.totalorder %s185, %s201
      %p203 = scmp.eq.s32.totalorder %s18, 0
      %p204 = por %p202, %p203
      %p205 = scmp.le.s32.totalorder 1, %s12
      %p206 = scmp.lt.s32.totalorder %s12, 5
      %p207 = pnand %p205, %p206
      %p208 = pneg %p207
      // Predicated region
      $region9: #{generator_forward.7} parent=5 // pred_check
        _
      $region10: #{generator_forward.7} parent=5 // pred_check_branch
        %210 = sbr.rel (%p207) target = $region12
      $region11: #{generator_forward.7} parent=5 // pred_region
        %s211 = ssub.s32 %s12, 1
        // Predicated region
        $region13: #{generator_forward.7} parent=11 // pred_check
          %p212 = pneg %p113
        $region14: #{generator_forward.7} parent=11 // pred_check_branch
          %214 = sbr.rel (%p212) target = $region16
        $region15: #{generator_forward.7} parent=11 // pred_region
          %p215 = scmp.lt.s32.totalorder %s23, 0
          %s216 = scalar_select %p215, %s23, 0
          %s217 = scalar_lea.vmem %s2, %s216
        $region16: #{generator_forward.7} parent=11 // pred_fallthru
          _
      $region12: #{generator_forward.7} parent=5 // pred_fallthru
        _
      %p218 = scmp.lt.s32.totalorder %s12, 4
      // Predicated region
      $region17: #{generator_forward.7} parent=5 // pred_check
        %p219 = pneg %p218
      $region18: #{generator_forward.7} parent=5 // pred_check_branch
        %221 = sbr.rel (%p219) target = $region20
      $region19: #{generator_forward.7} parent=5 // pred_region
        // Predicated region
        $region21: #{generator_forward.7} parent=19 // pred_check
          %p222 = pneg %p53
        $region22: #{generator_forward.7} parent=19 // pred_check_branch
          %224 = sbr.rel (%p222) target = $region24
        $region23: #{generator_forward.7} parent=19 // pred_region
          %s225 = sand.u32 %s43, 1
          %s226 = sand.u32 %s43, 1
          %s227 = smul.addr %s226, 32
          %s228 = scalar_lea.vmem [#allocation3], %s227
          %s229 = smul.u32 2, %s19
          %s230 = smul.u32 4, %s21
          %s231 = smul.addr %s229, 8
          %s232 = sadd.s32 %s230, %s231
          %s233 = smul.addr %s232, 4
          %s234 = scalar_lea.vmem %s0, %s233
          // Predicated region
          $region25: #{generator_forward.7} parent=23 // pred_check
            _
          $region26: #{generator_forward.7} parent=23 // pred_check_branch
            %236 = sbr.rel (0) target = $region28
          $region27: #{generator_forward.7} parent=23 // pred_region
            // Predicated region
            $region29: #{generator_forward.7} parent=27 // pred_check
              _
            $region30: #{generator_forward.7} parent=27 // pred_check_branch
              %238 = sbr.rel (0) target = $region32
            $region31: #{generator_forward.7} parent=27 // pred_region
              loop: start=0, step=1, limit=1
              $region33: #{generator_forward.7} parent=31 // loop_pre_header
                _
              $region34: #{generator_forward.7} parent=31 // loop_header
                %s240 = sphi 0, %s244
                %p241 = scmp.ge.s32.totalorder %s240, 1
                %s245 = sphi %s234, %s234
                %s246 = sphi %s228, %s228
              $region35: #{generator_forward.7} parent=31 // loop_header_branch
                %243 = sbr.rel (%p241) target = $region39
              $region36: #{generator_forward.7} parent=31 // loop_body
                %v247 = vld [vmem:[%s245] sm:$0xff]
                %248 = vst [vmem:[%s246] sm:$0xff] %v247
                %v249 = vld [vmem:[%s245 + $0x8] sm:$0xff]
                %250 = vst [vmem:[%s246 + $0x8] sm:$0xff] %v249
                %v251 = vld [vmem:[%s245 + $0x20] sm:$0xff]
                %252 = vst [vmem:[%s246 + $0x10] sm:$0xff] %v251
                %v253 = vld [vmem:[%s245 + $0x28] sm:$0xff]
                %254 = vst [vmem:[%s246 + $0x18] sm:$0xff] %v253
              $region37: #{generator_forward.7} parent=31 // loop_footer
                %s244 = sadd.s32 1, %s240
              $region38: #{generator_forward.7} parent=31 // loop_footer_branch
                %239 = sbr.rel target = $region34
              $region39: #{generator_forward.7} parent=31 // loop_exit
                _
            $region32: #{generator_forward.7} parent=27 // pred_fallthru
              _
            // Predicated region
            $region40: #{generator_forward.7} parent=27 // pred_check
              _
            $region41: #{generator_forward.7} parent=27 // pred_check_branch
              %256 = sbr.rel target = $region43
            $region42: #{generator_forward.7} parent=27 // pred_region
              _
            $region43: #{generator_forward.7} parent=27 // pred_fallthru
              _
          $region28: #{generator_forward.7} parent=23 // pred_fallthru
            _
          %257 = vnop
        $region24: #{generator_forward.7} parent=19 // pred_fallthru
          _
        // Predicated region
        $region44: #{generator_forward.7} parent=19 // pred_check
          %p258 = pneg %p81
        $region45: #{generator_forward.7} parent=19 // pred_check_branch
          %260 = sbr.rel (%p258) target = $region47
        $region46: #{generator_forward.7} parent=19 // pred_region
          %s261 = smul.u32 64, %s21
          %p262 = scmp.lt.s32.totalorder %s261, 127
          %s263 = scalar_select %p262, %s261, 127
          %p264 = scmp.lt.s32.totalorder %s20, 0
          %s265 = scalar_select %p264, %s20, 0
          %s266 = sadd.s32 %s265, %s263
          %s267 = smul.addr %s266, 4
          %s268 = scalar_lea.vmem %s1, %s267
          %s269 = smul.u32 64, %s21
        $region47: #{generator_forward.7} parent=19 // pred_fallthru
          _
      $region20: #{generator_forward.7} parent=5 // pred_fallthru
        _
      %p270 = scmp.le.s32.totalorder 1, %s12
      %p271 = scmp.lt.s32.totalorder %s12, 5
      %p272 = pnand %p270, %p271
      %p273 = pneg %p272
      // Predicated region
      $region48: #{generator_forward.7} parent=5 // pred_check
        _
      $region49: #{generator_forward.7} parent=5 // pred_check_branch
        %275 = sbr.rel (%p272) target = $region51
      $region50: #{generator_forward.7} parent=5 // pred_region
        %s276 = ssub.s32 %s12, 1
        %s277 = sand.u32 %s46, 1
        %s278 = sand.u32 %s46, 1
        %s279 = smul.addr %s278, 32
        %s280 = scalar_lea.vmem [#allocation3], %s279
        // Predicated region
        $region52: #{generator_forward.7} parent=50 // pred_check
          %p281 = pneg %p59
        $region53: #{generator_forward.7} parent=50 // pred_check_branch
          %283 = sbr.rel (%p281) target = $region55
        $region54: #{generator_forward.7} parent=50 // pred_region
          _
        $region55: #{generator_forward.7} parent=50 // pred_fallthru
          _
        %s284 = sand.u32 %s46, 1
        %s285 = sand.u32 %s46, 1
        %s286 = smul.addr %s285, 32
        %s287 = scalar_lea.vmem [#allocation3], %s286
        %p288 = pneg %p59
        %p289 = pneg %p56
        %s290 = smul.u32 64, %s24
        %p291 = scmp.lt.s32.totalorder %s290, 127
        %s292 = scalar_select %p291, %s290, 127
        %p293 = scmp.lt.s32.totalorder %s23, 0
        %s294 = scalar_select %p293, %s23, 0
        %s295 = sadd.s32 %s294, %s292
        %s296 = smul.addr %s295, 4
        %s297 = scalar_lea.vmem %s1, %s296
        %p298 = pneg %p87
        %p299 = pneg %p84
        %p300 = scmp.lt.s32.totalorder %s23, 0
        %s301 = scalar_select %p300, %s23, 0
        %s302 = scalar_lea.vmem %s2, %s301
        %p303 = pneg %p113
        %p304 = pneg %p110
        %p305 = pneg %p141
        %p306 = pneg %p138
        %s307 = smul.u32 2, %s22
        %p308 = scmp.lt.s32.totalorder %s307, 3
        %s309 = scalar_select %p308, %s307, 3
        %p310 = scmp.lt.s32.totalorder %s23, 0
        %s311 = scalar_select %p310, %s23, 0
        %s312 = sadd.s32 %s311, %s309
        %s313 = smul.addr %s312, 4
        %s314 = scalar_lea.vmem %s3, %s313
        %p315 = pneg %p169
        %p316 = pneg %p166
        %p317 = scmp.lt.s32.totalorder %s22, 1
        %s318 = scalar_select %p317, %s22, 1
        %p319 = scmp.lt.s32.totalorder %s23, 0
        %s320 = scalar_select %p319, %s23, 0
        %s321 = sadd.s32 %s320, %s318
        %s322 = smul.addr %s321, 8
        %s323 = scalar_lea.vmem %s4, %s322
        %p324 = pneg %p197
        %p325 = pneg %p194
        %p326 = scmp.lt.s32.totalorder %s22, 1
        %s327 = scalar_select %p326, %s22, 1
        %p328 = scmp.lt.s32.totalorder %s23, 0
        %s329 = scalar_select %p328, %s23, 0
        %s330 = sadd.s32 %s329, %s327
        %s331 = smul.addr %s330, 8
        %s332 = scalar_lea.vmem %s5, %s331
        %s333 = smul.u32 2, %s22
        %s334 = smul.u32 4, %s24
        %s335 = smul.u32 64, %s24
        %p336 = scmp.lt.s32.totalorder %s335, 127
        %s337 = scalar_select %p336, %s335, 127
        %p338 = scmp.lt.s32.totalorder %s23, 0
        %s339 = scalar_select %p338, %s23, 0
        %s340 = sadd.s32 %s339, %s337
        %s341 = smul.addr %s340, 4
        %s342 = scalar_lea.vmem %s1, %s341
        %s343 = smul.u32 64, %s24
        %p344 = scmp.lt.s32.totalorder %s23, 0
        %s345 = scalar_select %p344, %s23, 0
        %s346 = scalar_lea.vmem %s2, %s345
        %s347 = smul.u32 2, %s22
        %p348 = scmp.lt.s32.totalorder %s347, 3
        %s349 = scalar_select %p348, %s347, 3
        %p350 = scmp.lt.s32.totalorder %s23, 0
        %s351 = scalar_select %p350, %s23, 0
        %s352 = sadd.s32 %s351, %s349
        %s353 = smul.addr %s352, 4
        %s354 = scalar_lea.vmem %s3, %s353
        %s355 = smul.u32 2, %s22
        %p356 = scmp.lt.s32.totalorder %s22, 1
        %s357 = scalar_select %p356, %s22, 1
        %p358 = scmp.lt.s32.totalorder %s23, 0
        %s359 = scalar_select %p358, %s23, 0
        %s360 = sadd.s32 %s359, %s357
        %s361 = smul.addr %s360, 8
        %s362 = scalar_lea.vmem %s4, %s361
        %p363 = scmp.lt.s32.totalorder %s22, 1
        %s364 = scalar_select %p363, %s22, 1
        %p365 = scmp.lt.s32.totalorder %s23, 0
        %s366 = scalar_select %p365, %s23, 0
        %s367 = sadd.s32 %s366, %s364
        %s368 = smul.addr %s367, 8
        %s369 = scalar_lea.vmem %s5, %s368
        %p371 = scmp.eq.s32.totalorder %s24, 0
        // Predicated region
        $region56: #{generator_forward.7} parent=50 // pred_check
          %p372 = pneg %p371
        $region57: #{generator_forward.7} parent=50 // pred_check_branch
          %374 = sbr.rel (%p372) target = $region59
        $region58: #{generator_forward.7} parent=50 // pred_region
          %375 = vst [vmem:[#allocation2] sm:$0xff] 0.0
          %376 = vst [vmem:[#allocation2 + $0x8] sm:$0xff] 0.0
        $region59: #{generator_forward.7} parent=50 // pred_fallthru
          _
        %v377 = vld [vmem:[#allocation2] sm:$0xff]
        %v378 = vld [vmem:[#allocation2 + $0x8] sm:$0xff]
        %v379 = vld [vmem:[%s280] sm:$0xff]
        %v380 = vld [vmem:[%s280 + $0x8] sm:$0xff]
        %v381 = vld [vmem:[%s280 + $0x10] sm:$0xff]
        %v382 = vld [vmem:[%s280 + $0x18] sm:$0xff]
        %v383 = vld [vmem:[%s342] sm:$0xf]
        %v384 = vld [vmem:[%s342 + $0x4] sm:$0xf]
        %v385 = vld [vmem:[%s342 + $0x8] sm:$0xf]
        %v386 = vld [vmem:[%s342 + $0xc] sm:$0xf]
        %v387 = vld [vmem:[%s342 + $0x10] sm:$0xf]
        %v388 = vld [vmem:[%s342 + $0x14] sm:$0xf]
        %v389 = vld [vmem:[%s342 + $0x18] sm:$0xf]
        %v390 = vld [vmem:[%s342 + $0x1c] sm:$0xf]
        %v391 = vld [vmem:[%s342 + $0x20] sm:$0xf]
        %v392 = vld [vmem:[%s342 + $0x24] sm:$0xf]
        %v393 = vld [vmem:[%s342 + $0x28] sm:$0xf]
        %v394 = vld [vmem:[%s342 + $0x2c] sm:$0xf]
        %v395 = vld [vmem:[%s342 + $0x30] sm:$0xf]
        %v396 = vld [vmem:[%s342 + $0x34] sm:$0xf]
        %v397 = vld [vmem:[%s342 + $0x38] sm:$0xf]
        %v398 = vld [vmem:[%s342 + $0x3c] sm:$0xf]
        %v399 = vld [vmem:[%s342 + $0x40] sm:$0xf]
        %v400 = vld [vmem:[%s342 + $0x44] sm:$0xf]
        %v401 = vld [vmem:[%s342 + $0x48] sm:$0xf]
        %v402 = vld [vmem:[%s342 + $0x4c] sm:$0xf]
        %v403 = vld [vmem:[%s342 + $0x50] sm:$0xf]
        %v404 = vld [vmem:[%s342 + $0x54] sm:$0xf]
        %v405 = vld [vmem:[%s342 + $0x58] sm:$0xf]
        %v406 = vld [vmem:[%s342 + $0x5c] sm:$0xf]
        %v407 = vld [vmem:[%s342 + $0x60] sm:$0xf]
        %v408 = vld [vmem:[%s342 + $0x64] sm:$0xf]
        %v409 = vld [vmem:[%s342 + $0x68] sm:$0xf]
        %v410 = vld [vmem:[%s342 + $0x6c] sm:$0xf]
        %v411 = vld [vmem:[%s342 + $0x70] sm:$0xf]
        %v412 = vld [vmem:[%s342 + $0x74] sm:$0xf]
        %v413 = vld [vmem:[%s342 + $0x78] sm:$0xf]
        %v414 = vld [vmem:[%s342 + $0x7c] sm:$0xf]
        %v415 = vld [vmem:[%s342 + $0x80] sm:$0xf]
        %v416 = vld [vmem:[%s342 + $0x84] sm:$0xf]
        %v417 = vld [vmem:[%s342 + $0x88] sm:$0xf]
        %v418 = vld [vmem:[%s342 + $0x8c] sm:$0xf]
        %v419 = vld [vmem:[%s342 + $0x90] sm:$0xf]
        %v420 = vld [vmem:[%s342 + $0x94] sm:$0xf]
        %v421 = vld [vmem:[%s342 + $0x98] sm:$0xf]
        %v422 = vld [vmem:[%s342 + $0x9c] sm:$0xf]
        %v423 = vld [vmem:[%s342 + $0xa0] sm:$0xf]
        %v424 = vld [vmem:[%s342 + $0xa4] sm:$0xf]
        %v425 = vld [vmem:[%s342 + $0xa8] sm:$0xf]
        %v426 = vld [vmem:[%s342 + $0xac] sm:$0xf]
        %v427 = vld [vmem:[%s342 + $0xb0] sm:$0xf]
        %v428 = vld [vmem:[%s342 + $0xb4] sm:$0xf]
        %v429 = vld [vmem:[%s342 + $0xb8] sm:$0xf]
        %v430 = vld [vmem:[%s342 + $0xbc] sm:$0xf]
        %v431 = vld [vmem:[%s342 + $0xc0] sm:$0xf]
        %v432 = vld [vmem:[%s342 + $0xc4] sm:$0xf]
        %v433 = vld [vmem:[%s342 + $0xc8] sm:$0xf]
        %v434 = vld [vmem:[%s342 + $0xcc] sm:$0xf]
        %v435 = vld [vmem:[%s342 + $0xd0] sm:$0xf]
        %v436 = vld [vmem:[%s342 + $0xd4] sm:$0xf]
        %v437 = vld [vmem:[%s342 + $0xd8] sm:$0xf]
        %v438 = vld [vmem:[%s342 + $0xdc] sm:$0xf]
        %v439 = vld [vmem:[%s342 + $0xe0] sm:$0xf]
        %v440 = vld [vmem:[%s342 + $0xe4] sm:$0xf]
        %v441 = vld [vmem:[%s342 + $0xe8] sm:$0xf]
        %v442 = vld [vmem:[%s342 + $0xec] sm:$0xf]
        %v443 = vld [vmem:[%s342 + $0xf0] sm:$0xf]
        %v444 = vld [vmem:[%s342 + $0xf4] sm:$0xf]
        %v445 = vld [vmem:[%s342 + $0xf8] sm:$0xf]
        %v446 = vld [vmem:[%s342 + $0xfc] sm:$0xf]
        %v451 = vunpack.c.l.b16 %v379
        %v452 = vunpack.c.h.b16 %v379
        %v453 = vunpack.c.l.b16 %v380
        %v454 = vunpack.c.h.b16 %v380
        %v455 = vunpack.c.l.b16 %v381
        %v456 = vunpack.c.h.b16 %v381
        %v457 = vunpack.c.l.b16 %v382
        %v458 = vunpack.c.h.b16 %v382
        %v459 = vpack.c.b16 %v455, %v451
        %v460 = vpack.c.b16 %v456, %v452
        %v461 = vpack.c.b16 %v457, %v453
        %v462 = vpack.c.b16 %v458, %v454
        %v531 = vunpack.c.l.b16 %v383
        %v532 = vunpack.c.l.b16 %v384
        %v533 = vunpack.c.l.b16 %v385
        %v534 = vunpack.c.l.b16 %v386
        %v535 = vunpack.c.l.b16 %v387
        %v536 = vunpack.c.l.b16 %v388
        %v537 = vunpack.c.l.b16 %v389
        %v538 = vunpack.c.l.b16 %v390
        %v539 = vunpack.c.l.b16 %v391
        %v540 = vunpack.c.l.b16 %v392
        %v541 = vunpack.c.l.b16 %v393
        %v542 = vunpack.c.l.b16 %v394
        %v543 = vunpack.c.l.b16 %v395
        %v544 = vunpack.c.l.b16 %v396
        %v545 = vunpack.c.l.b16 %v397
        %v546 = vunpack.c.l.b16 %v398
        %v547 = vunpack.c.l.b16 %v399
        %v548 = vunpack.c.l.b16 %v400
        %v549 = vunpack.c.l.b16 %v401
        %v550 = vunpack.c.l.b16 %v402
        %v551 = vunpack.c.l.b16 %v403
        %v552 = vunpack.c.l.b16 %v404
        %v553 = vunpack.c.l.b16 %v405
        %v554 = vunpack.c.l.b16 %v406
        %v555 = vunpack.c.l.b16 %v407
        %v556 = vunpack.c.l.b16 %v408
        %v557 = vunpack.c.l.b16 %v409
        %v558 = vunpack.c.l.b16 %v410
        %v559 = vunpack.c.l.b16 %v411
        %v560 = vunpack.c.l.b16 %v412
        %v561 = vunpack.c.l.b16 %v413
        %v562 = vunpack.c.l.b16 %v414
        %v563 = vunpack.c.l.b16 %v415
        %v564 = vunpack.c.l.b16 %v416
        %v565 = vunpack.c.l.b16 %v417
        %v566 = vunpack.c.l.b16 %v418
        %v567 = vunpack.c.l.b16 %v419
        %v568 = vunpack.c.l.b16 %v420
        %v569 = vunpack.c.l.b16 %v421
        %v570 = vunpack.c.l.b16 %v422
        %v571 = vunpack.c.l.b16 %v423
        %v572 = vunpack.c.l.b16 %v424
        %v573 = vunpack.c.l.b16 %v425
        %v574 = vunpack.c.l.b16 %v426
        %v575 = vunpack.c.l.b16 %v427
        %v576 = vunpack.c.l.b16 %v428
        %v577 = vunpack.c.l.b16 %v429
        %v578 = vunpack.c.l.b16 %v430
        %v579 = vunpack.c.l.b16 %v431
        %v580 = vunpack.c.l.b16 %v432
        %v581 = vunpack.c.l.b16 %v433
        %v582 = vunpack.c.l.b16 %v434
        %v583 = vunpack.c.l.b16 %v435
        %v584 = vunpack.c.l.b16 %v436
        %v585 = vunpack.c.l.b16 %v437
        %v586 = vunpack.c.l.b16 %v438
        %v587 = vunpack.c.l.b16 %v439
        %v588 = vunpack.c.l.b16 %v440
        %v589 = vunpack.c.l.b16 %v441
        %v590 = vunpack.c.l.b16 %v442
        %v591 = vunpack.c.l.b16 %v443
        %v592 = vunpack.c.l.b16 %v444
        %v593 = vunpack.c.l.b16 %v445
        %v594 = vunpack.c.l.b16 %v446
        %v595 = vpack.c.b16 %v532, %v531
        %v596 = vpack.c.b16 %v534, %v533
        %v597 = vpack.c.b16 %v536, %v535
        %v598 = vpack.c.b16 %v538, %v537
        %v599 = vpack.c.b16 %v540, %v539
        %v600 = vpack.c.b16 %v542, %v541
        %v601 = vpack.c.b16 %v544, %v543
        %v602 = vpack.c.b16 %v546, %v545
        %v603 = vpack.c.b16 %v548, %v547
        %v604 = vpack.c.b16 %v550, %v549
        %v605 = vpack.c.b16 %v552, %v551
        %v606 = vpack.c.b16 %v554, %v553
        %v607 = vpack.c.b16 %v556, %v555
        %v608 = vpack.c.b16 %v558, %v557
        %v609 = vpack.c.b16 %v560, %v559
        %v610 = vpack.c.b16 %v562, %v561
        %v611 = vpack.c.b16 %v564, %v563
        %v612 = vpack.c.b16 %v566, %v565
        %v613 = vpack.c.b16 %v568, %v567
        %v614 = vpack.c.b16 %v570, %v569
        %v615 = vpack.c.b16 %v572, %v571
        %v616 = vpack.c.b16 %v574, %v573
        %v617 = vpack.c.b16 %v576, %v575
        %v618 = vpack.c.b16 %v578, %v577
        %v619 = vpack.c.b16 %v580, %v579
        %v620 = vpack.c.b16 %v582, %v581
        %v621 = vpack.c.b16 %v584, %v583
        %v622 = vpack.c.b16 %v586, %v585
        %v623 = vpack.c.b16 %v588, %v587
        %v624 = vpack.c.b16 %v590, %v589
        %v625 = vpack.c.b16 %v592, %v591
        %v626 = vpack.c.b16 %v594, %v593
        %659 = vmatprep.subr.bf16.mxu0 0
        %660 = vmatpush1.bf16.msra.mxu0 %v602
        %661 = vmatprep.subr.bf16.mxu0 0
        %662 = vmatpush1.bf16.msra.mxu0 %v601
        %663 = vmatprep.subr.bf16.mxu0 0
        %664 = vmatpush1.bf16.msra.mxu0 %v600
        %665 = vmatprep.subr.bf16.mxu0 0
        %666 = vmatpush1.bf16.msra.mxu0 %v599
        %667 = vmatprep.subr.bf16.mxu0 0
        %668 = vmatpush1.bf16.msra.mxu0 %v598
        %669 = vmatprep.subr.bf16.mxu0 0
        %670 = vmatpush1.bf16.msra.mxu0 %v597
        %671 = vmatprep.subr.bf16.mxu0 0
        %672 = vmatpush1.bf16.msra.mxu0 %v596
        %673 = vmatprep.subr.bf16.mxu0 0
        %674 = vmatpush1.bf16.msra.mxu0 %v595
        %675 = vmatprep.subr.bf16.mxu0 0
        %676 = vmatpush2.bf16.msra.mxu0 %v610
        %677 = vmatprep.subr.bf16.mxu0 0
        %678 = vmatpush2.bf16.msra.mxu0 %v609
        %679 = vmatprep.subr.bf16.mxu0 0
        %680 = vmatpush2.bf16.msra.mxu0 %v608
        %681 = vmatprep.subr.bf16.mxu0 0
        %682 = vmatpush2.bf16.msra.mxu0 %v607
        %683 = vmatprep.subr.bf16.mxu0 0
        %684 = vmatpush2.bf16.msra.mxu0 %v606
        %685 = vmatprep.subr.bf16.mxu0 0
        %686 = vmatpush2.bf16.msra.mxu0 %v605
        %687 = vmatprep.subr.bf16.mxu0 0
        %688 = vmatpush2.bf16.msra.mxu0 %v604
        %689 = vmatprep.subr.bf16.mxu0 0
        %690 = vmatpush2.bf16.msra.mxu0 %v603
        %691 = vmatprep.mubr.bf16.mxu0 %v460
        %692 = vmatmul.mubr.bf16.gmra.mxu0 %v459
        %v693 = vpop.f32.mrf.mxu0
        %v694 = vadd.f32 0.0, %v693
        %v695 = vpop.f32.mrf.mxu0
        %v696 = vpop.f32.mrf.mxu0
        %v697 = vadd.f32 0.0, %v696
        %v698 = vpop.f32.mrf.mxu0
        %699 = vdwg.mxu0
        %700 = vmatprep.subr.bf16.mxu0 0
        %701 = vmatpush1.bf16.msra.mxu0 %v618
        %702 = vmatprep.subr.bf16.mxu0 0
        %703 = vmatpush1.bf16.msra.mxu0 %v617
        %704 = vmatprep.subr.bf16.mxu0 0
        %705 = vmatpush1.bf16.msra.mxu0 %v616
        %706 = vmatprep.subr.bf16.mxu0 0
        %707 = vmatpush1.bf16.msra.mxu0 %v615
        %708 = vmatprep.subr.bf16.mxu0 0
        %709 = vmatpush1.bf16.msra.mxu0 %v614
        %710 = vmatprep.subr.bf16.mxu0 0
        %711 = vmatpush1.bf16.msra.mxu0 %v613
        %712 = vmatprep.subr.bf16.mxu0 0
        %713 = vmatpush1.bf16.msra.mxu0 %v612
        %714 = vmatprep.subr.bf16.mxu0 0
        %715 = vmatpush1.bf16.msra.mxu0 %v611
        %716 = vmatprep.subr.bf16.mxu0 0
        %717 = vmatpush2.bf16.msra.mxu0 %v626
        %718 = vmatprep.subr.bf16.mxu0 0
        %719 = vmatpush2.bf16.msra.mxu0 %v625
        %720 = vmatprep.subr.bf16.mxu0 0
        %721 = vmatpush2.bf16.msra.mxu0 %v624
        %722 = vmatprep.subr.bf16.mxu0 0
        %723 = vmatpush2.bf16.msra.mxu0 %v623
        %724 = vmatprep.subr.bf16.mxu0 0
        %725 = vmatpush2.bf16.msra.mxu0 %v622
        %726 = vmatprep.subr.bf16.mxu0 0
        %727 = vmatpush2.bf16.msra.mxu0 %v621
        %728 = vmatprep.subr.bf16.mxu0 0
        %729 = vmatpush2.bf16.msra.mxu0 %v620
        %730 = vmatprep.subr.bf16.mxu0 0
        %731 = vmatpush2.bf16.msra.mxu0 %v619
        %732 = vmatprep.mubr.bf16.mxu0 %v462
        %733 = vmatmul.mubr.bf16.gmra.mxu0 %v461
        %v734 = vpop.f32.mrf.mxu0
        %v735 = vadd.f32 %v694, %v734
        %v736 = vpop.f32.mrf.mxu0
        %v737 = vpop.f32.mrf.mxu0
        %v738 = vadd.f32 %v697, %v737
        %v739 = vpop.f32.mrf.mxu0
        %740 = vdwg.mxu0
        %v741 = vadd.f32 %v377, %v735
        %v742 = vadd.f32 %v378, %v738
        %743 = vst [vmem:[#allocation2] sm:$0xff] %v741
        %744 = vst [vmem:[#allocation2 + $0x8] sm:$0xff] %v742
        %p745 = scmp.eq.s32.totalorder %s24, 1
        // Predicated region
        $region60: #{generator_forward.7} parent=50 // pred_check
          %p746 = pneg %p745
        $region61: #{generator_forward.7} parent=50 // pred_check_branch
          %748 = sbr.rel (%p746) target = $region63
        $region62: #{generator_forward.7} parent=50 // pred_region
          %v749 = vld [vmem:[#allocation2] sm:$0xff]
          %v750 = vld [vmem:[#allocation2 + $0x8] sm:$0xff]
          %v751 = vld [vmem:[%s346] sm:$0x1]
          %v753 = vlaneseq
          %v754 = vshrl.u32 %v753, 7
          %v755 = vsub.s32 0, %v754
          %v756 = vrot.slane %v751, %v755
          %v758 = vadd.f32 %v749, %v756
          %v759 = vadd.f32 %v750, %v756
          %v760 = vpack.c.bf16 %v759, %v758
          %v762 = vunpack.c.l.b16 %v760
          %v763 = vunpack.c.h.b16 %v760
          %v764 = vpack.c.b16 %v762, %v762
          %v765 = vpack.c.b16 %v763, %v763
          %768 = vst [vmem:[%s354] sm:$0xf] %v764
          %769 = vst [vmem:[%s354 + $0x4] sm:$0xf] %v765
          %v770 = vadd.f32 %v758, %v759
          %v771 = vrot.slane %v770, 4
          %v772 = vadd.f32 %v770, %v771
          %v773 = vrot.slane %v772, 2
          %v774 = vadd.f32 %v772, %v773
          %v775 = vrot.slane %v774, 1
          %v776 = vadd.f32 %v774, %v775
          %777 = vst [vmem:[%s362] sm:$0x1] %v776
          %v778 = vmul.f32 %v758, %v758
          %v779 = vmul.f32 %v759, %v759
          %v780 = vadd.f32 %v778, %v779
          %v781 = vrot.slane %v780, 4
          %v782 = vadd.f32 %v780, %v781
          %v783 = vrot.slane %v782, 2
          %v784 = vadd.f32 %v782, %v783
          %v785 = vrot.slane %v784, 1
          %v786 = vadd.f32 %v784, %v785
          %787 = vst [vmem:[%s369] sm:$0x1] %v786
        $region63: #{generator_forward.7} parent=50 // pred_fallthru
          _
        %s788 = smul.u32 2, %s22
        %p789 = scmp.lt.s32.totalorder %s788, 3
        %s790 = scalar_select %p789, %s788, 3
        %p791 = scmp.lt.s32.totalorder %s23, 0
        %s792 = scalar_select %p791, %s23, 0
        %s793 = sadd.s32 %s792, %s790
        %s794 = smul.addr %s793, 4
        %s795 = scalar_lea.vmem %s3, %s794
        %p796 = scmp.lt.s32.totalorder %s22, 1
        %s797 = scalar_select %p796, %s22, 1
        %p798 = scmp.lt.s32.totalorder %s23, 0
        %s799 = scalar_select %p798, %s23, 0
        %s800 = sadd.s32 %s799, %s797
        %s801 = smul.addr %s800, 8
        %s802 = scalar_lea.vmem %s4, %s801
        %p803 = scmp.lt.s32.totalorder %s22, 1
        %s804 = scalar_select %p803, %s22, 1
        %p805 = scmp.lt.s32.totalorder %s23, 0
        %s806 = scalar_select %p805, %s23, 0
        %s807 = sadd.s32 %s806, %s804
        %s808 = smul.addr %s807, 8
        %s809 = scalar_lea.vmem %s5, %s808
        // Predicated region
        $region64: #{generator_forward.7} parent=50 // pred_check
          %p810 = pneg %p138
        $region65: #{generator_forward.7} parent=50 // pred_check_branch
          %812 = sbr.rel (%p810) target = $region67
        $region66: #{generator_forward.7} parent=50 // pred_region
          %s813 = smul.u32 2, %s22
        $region67: #{generator_forward.7} parent=50 // pred_fallthru
          _
        // Predicated region
        $region68: #{generator_forward.7} parent=50 // pred_check
          %p814 = pneg %p166
        $region69: #{generator_forward.7} parent=50 // pred_check_branch
          %816 = sbr.rel (%p814) target = $region71
        $region70: #{generator_forward.7} parent=50 // pred_region
          _
        $region71: #{generator_forward.7} parent=50 // pred_fallthru
          _
        // Predicated region
        $region72: #{generator_forward.7} parent=50 // pred_check
          %p817 = pneg %p194
        $region73: #{generator_forward.7} parent=50 // pred_check_branch
          %819 = sbr.rel (%p817) target = $region75
        $region74: #{generator_forward.7} parent=50 // pred_region
          _
        $region75: #{generator_forward.7} parent=50 // pred_fallthru
          _
      $region51: #{generator_forward.7} parent=5 // pred_fallthru
        _
      %p820 = scmp.le.s32.totalorder 2, %s12
      // Predicated region
      $region76: #{generator_forward.7} parent=5 // pred_check
        %p821 = pneg %p820
      $region77: #{generator_forward.7} parent=5 // pred_check_branch
        %823 = sbr.rel (%p821) target = $region79
      $region78: #{generator_forward.7} parent=5 // pred_region
        %s824 = ssub.s32 %s12, 2
        // Predicated region
        $region80: #{generator_forward.7} parent=78 // pred_check
          %p825 = pneg %p144
        $region81: #{generator_forward.7} parent=78 // pred_check_branch
          %827 = sbr.rel (%p825) target = $region83
        $region82: #{generator_forward.7} parent=78 // pred_region
          %s828 = smul.u32 2, %s25
          %p829 = scmp.lt.s32.totalorder %s828, 3
          %s830 = scalar_select %p829, %s828, 3
          %p831 = scmp.lt.s32.totalorder %s26, 0
          %s832 = scalar_select %p831, %s26, 0
          %s833 = sadd.s32 %s832, %s830
          %s834 = smul.addr %s833, 4
          %s835 = scalar_lea.vmem %s3, %s834
        $region83: #{generator_forward.7} parent=78 // pred_fallthru
          _
        // Predicated region
        $region84: #{generator_forward.7} parent=78 // pred_check
          %p836 = pneg %p172
        $region85: #{generator_forward.7} parent=78 // pred_check_branch
          %838 = sbr.rel (%p836) target = $region87
        $region86: #{generator_forward.7} parent=78 // pred_region
          %p839 = scmp.lt.s32.totalorder %s25, 1
          %s840 = scalar_select %p839, %s25, 1
          %p841 = scmp.lt.s32.totalorder %s26, 0
          %s842 = scalar_select %p841, %s26, 0
          %s843 = sadd.s32 %s842, %s840
          %s844 = smul.addr %s843, 8
          %s845 = scalar_lea.vmem %s4, %s844
        $region87: #{generator_forward.7} parent=78 // pred_fallthru
          _
        // Predicated region
        $region88: #{generator_forward.7} parent=78 // pred_check
          %p846 = pneg %p200
        $region89: #{generator_forward.7} parent=78 // pred_check_branch
          %848 = sbr.rel (%p846) target = $region91
        $region90: #{generator_forward.7} parent=78 // pred_region
          %p849 = scmp.lt.s32.totalorder %s25, 1
          %s850 = scalar_select %p849, %s25, 1
          %p851 = scmp.lt.s32.totalorder %s26, 0
          %s852 = scalar_select %p851, %s26, 0
          %s853 = sadd.s32 %s852, %s850
          %s854 = smul.addr %s853, 8
          %s855 = scalar_lea.vmem %s5, %s854
        $region91: #{generator_forward.7} parent=78 // pred_fallthru
          _
      $region79: #{generator_forward.7} parent=5 // pred_fallthru
        _
    $region6: #{generator_forward.7} parent=1 // loop_footer
      %s16 = sadd.s32 1, %s12
    $region7: #{generator_forward.7} parent=1 // loop_footer_branch
      %11 = sbr.rel target = $region3
    $region8: #{generator_forward.7} parent=1 // loop_exit
      _

// kernel: generator_forward.8
$region0: #{generator_forward.8}
  #allocation0 [shape = 'u32[]', space=smem, size = 0x4, offset = 0x4, fixed_abs, tag = 'smem constant byte address 0x4 - core index']
  #allocation1 [shape = 'u32[144,128]{1,0:T(1,128)}', space=vmem, size = 0x12000, scoped, tag = 'internal scratch']
  %s0 = inlined_call_operand.vmem [shape: bf16[32,128], index: 0, kind: input, shape index: {}]
  %s1 = inlined_call_operand.vmem [shape: f32[1,128], index: 1, kind: input, shape index: {}]
  %s2 = inlined_call_operand.vmem [shape: f32[1,128], index: 2, kind: input, shape index: {}]
  %s3 = inlined_call_operand.vmem [shape: bf16[32,128], index: 3, kind: output, shape index: {}]
  %s4 = sld [smem:[#allocation0]]
  $region22: #{generator_forward.8} parent=0
    _
  %s6 = ssub.s32 1, %s4
  %s7 = scalar_select 0, %s6, %s4
  // Predicated region
  $region2: #{generator_forward.8} parent=0 // pred_check
    _
  $region3: #{generator_forward.8} parent=0 // pred_check_branch
    %9 = sbr.rel (0) target = $region5
  $region4: #{generator_forward.8} parent=0 // pred_region
    _
  $region5: #{generator_forward.8} parent=0 // pred_fallthru
    _
  // Predicated region
  $region6: #{generator_forward.8} parent=0 // pred_check
    _
  $region7: #{generator_forward.8} parent=0 // pred_check_branch
    %11 = sbr.rel (0) target = $region9
  $region8: #{generator_forward.8} parent=0 // pred_region
    _
  $region9: #{generator_forward.8} parent=0 // pred_fallthru
    _
  // Predicated region
  $region10: #{generator_forward.8} parent=0 // pred_check
    _
  $region11: #{generator_forward.8} parent=0 // pred_check_branch
    %13 = sbr.rel (0) target = $region13
  $region12: #{generator_forward.8} parent=0 // pred_region
    _
  $region13: #{generator_forward.8} parent=0 // pred_fallthru
    _
  %v14 = vld [vmem:[%s0] sm:$0xf]
  %v15 = vld [vmem:[%s0 + $0x4] sm:$0xf]
  %v16 = vld [vmem:[%s0 + $0x8] sm:$0xf]
  %v17 = vld [vmem:[%s0 + $0xc] sm:$0xf]
  %v18 = vunpack.c.l.bf16 %v14
  %v19 = vunpack.c.l.bf16 %v15
  %v20 = vunpack.c.l.bf16 %v16
  %v21 = vunpack.c.l.bf16 %v17
  %v22 = vld [vmem:[%s1] sm:$0x1]
  %v24 = vlaneseq
  %v25 = vshrl.u32 %v24, 7
  %v26 = vsub.s32 0, %v25
  %v27 = vrot.slane %v22, %v26
  %v29 = vmul.f32 %v18, %v27
  %v30 = vmul.f32 %v19, %v27
  %v31 = vmul.f32 %v20, %v27
  %v32 = vmul.f32 %v21, %v27
  %v33 = vld [vmem:[%s2] sm:$0x1]
  %v35 = vlaneseq
  %v36 = vshrl.u32 %v35, 7
  %v37 = vsub.s32 0, %v36
  %v38 = vrot.slane %v33, %v37
  %v40 = vadd.f32 %v29, %v38
  %v41 = vadd.f32 %v30, %v38
  %v42 = vadd.f32 %v31, %v38
  %v43 = vadd.f32 %v32, %v38
  %vm44 = vcmp.gt.f32.partialorder %v40, 0.0
  %vm45 = vcmp.gt.f32.partialorder %v41, 0.0
  %vm46 = vcmp.gt.f32.partialorder %v42, 0.0
  %vm47 = vcmp.gt.f32.partialorder %v43, 0.0
  %v48 = vmul.f32 %v40, 0.2
  %v49 = vmul.f32 %v41, 0.2
  %v50 = vmul.f32 %v42, 0.2
  %v51 = vmul.f32 %v43, 0.2
  %v52 = vsel %vm44, %v40, %v48
  %v53 = vsel %vm45, %v41, %v49
  %v54 = vsel %vm46, %v42, %v50
  %v55 = vsel %vm47, %v43, %v51
  %v56 = vpack.c.bf16 %v53, %v52
  %v57 = vpack.c.bf16 %v55, %v54
  %v60 = vunpack.c.l.b16 %v56
  %v61 = vunpack.c.h.b16 %v56
  %v62 = vunpack.c.l.b16 %v57
  %v63 = vunpack.c.h.b16 %v57
  %v64 = vpack.c.b16 %v60, %v60
  %v65 = vpack.c.b16 %v61, %v61
  %v66 = vpack.c.b16 %v62, %v62
  %v67 = vpack.c.b16 %v63, %v63
  %72 = vst [vmem:[%s3] sm:$0xf] %v64
  %73 = vst [vmem:[%s3 + $0x4] sm:$0xf] %v65
  %74 = vst [vmem:[%s3 + $0x8] sm:$0xf] %v66
  %75 = vst [vmem:[%s3 + $0xc] sm:$0xf] %v67
  // Predicated region
  $region14: #{generator_forward.8} parent=0 // pred_check
    _
  $region15: #{generator_forward.8} parent=0 // pred_check_branch
    %77 = sbr.rel (0) target = $region17
  $region16: #{generator_forward.8} parent=0 // pred_region
    _
  $region17: #{generator_forward.8} parent=0 // pred_fallthru
    _
  // Predicated region
  $region18: #{generator_forward.8} parent=0 // pred_check
    _
  $region19: #{generator_forward.8} parent=0 // pred_check_branch
    %79 = sbr.rel (0) target = $region21
  $region20: #{generator_forward.8} parent=0 // pred_region
    _
  $region21: #{generator_forward.8} parent=0 // pred_fallthru
    _

// kernel: generator_forward.9
$region0: #{generator_forward.9}
  #allocation0 [shape = 'u32[]', space=smem, size = 0x4, offset = 0x4, fixed_abs, tag = 'smem constant byte address 0x4 - core index']
  #allocation1 [shape = 'u32[144,128]{1,0:T(1,128)}', space=vmem, size = 0x12000, scoped, tag = 'internal scratch']
  #allocation2 [shape = 'f32[32,256]{1,0:T(8,128)}', space=vmem, size = 0x8000, scoped, tag = 'scratch operand']
  %s0 = inlined_call_operand.vmem [shape: bf16[64,512], index: 0, kind: input, shape index: {}]
  %s1 = inlined_call_operand.vmem [shape: bf16[512,256], index: 1, kind: input, shape index: {}]
  %s2 = inlined_call_operand.vmem [shape: f32[1,256], index: 2, kind: input, shape index: {}]
  %s3 = inlined_call_operand.vmem [shape: bf16[64,256], index: 3, kind: output, shape index: {}]
  %s4 = sld [smem:[#allocation0]]
  $region53: #{generator_forward.9} parent=0
    _
  %s6 = ssub.s32 1, %s4
  %s7 = scalar_select 0, %s6, %s4
  loop: start=0, step=1, limit=4
  $region2: #{generator_forward.9} parent=0 // loop_pre_header
    _
  $region3: #{generator_forward.9} parent=0 // loop_header
    %s9 = sphi 0, %s13
    %p10 = scmp.ge.s32.totalorder %s9, 4
    %s16 = sphi 0, %s35
    %s17 = sphi 0, %s31
    %s18 = sphi 0, %s27
    %s19 = sphi 0, %s16
    %s20 = sphi 0, %s17
    %s21 = sphi 0, %s18
    %s22 = sphi 0, %s19
    %s23 = sphi 0, %s20
    %s24 = sphi 0, %s21
    %s40 = sphi 0, %s42
    %s43 = sphi 0, %s40
    %s44 = sphi 0, %s43
    %s60 = sphi 0, %s44
    %s68 = sphi 0, %s70
    %s71 = sphi 0, %s68
    %s72 = sphi 0, %s71
    %s88 = sphi 0, %s72
    %s94 = sphi 0, %s96
    %s97 = sphi 0, %s94
    %s98 = sphi 0, %s97
    %s114 = sphi 0, %s98
    %s122 = sphi 0, %s124
    %s125 = sphi 0, %s122
    %s126 = sphi 0, %s125
    %s142 = sphi 0, %s126
  $region4: #{generator_forward.9} parent=0 // loop_header_branch
    %12 = sbr.rel (%p10) target = $region8
  $region5: #{generator_forward.9} parent=0 // loop_body
    %s14 = ssub.s32 %s9, 1
    %s15 = ssub.s32 %s9, 2
    %s25 = sadd.s32 1, %s18
    %p26 = scmp.ge.s32.totalorder %s25, 1
    %s27 = scalar_select %p26, 0, %s25
    %s28 = sadd.s32 1, %s17
    %s29 = scalar_select %p26, %s28, %s17
    %p30 = scmp.ge.s32.totalorder %s29, 1
    %s31 = scalar_select %p30, 0, %s29
    %s32 = sadd.s32 1, %s16
    %s33 = scalar_select %p30, %s32, %s16
    %p34 = scmp.ge.s32.totalorder %s33, 2
    %s35 = scalar_select %p34, 0, %s33
    %s36 = ssub.s32 %s16, %s35
    %s37 = ssub.s32 %s18, %s27
    %s38 = sor.u32 %s36, %s37
    %p39 = scmp.eq.s32.totalorder %s38, 0
    %s41 = sadd.s32 %s40, 1
    %s42 = scalar_select %p39, %s40, %s41
    %p45 = pneg %p39
    %p46 = scmp.eq.s32.totalorder %s9, 1
    %p47 = por %p45, %p46
    %p48 = scmp.ne.s32.totalorder %s40, %s43
    %p49 = scmp.eq.s32.totalorder %s9, 0
    %p50 = por %p48, %p49
    %p51 = scmp.ne.s32.totalorder %s40, %s43
    %p52 = scmp.eq.s32.totalorder %s14, 1
    %p53 = por %p51, %p52
    %p54 = scmp.ne.s32.totalorder %s43, %s44
    %p55 = scmp.eq.s32.totalorder %s14, 0
    %p56 = por %p54, %p55
    %p57 = scmp.ne.s32.totalorder %s43, %s44
    %p58 = scmp.eq.s32.totalorder %s15, 1
    %p59 = por %p57, %p58
    %p61 = scmp.ne.s32.totalorder %s44, %s60
    %p62 = scmp.eq.s32.totalorder %s15, 0
    %p63 = por %p61, %p62
    %s64 = ssub.s32 %s18, %s27
    %s65 = ssub.s32 %s17, %s31
    %s66 = sor.u32 %s64, %s65
    %p67 = scmp.eq.s32.totalorder %s66, 0
    %s69 = sadd.s32 %s68, 1
    %s70 = scalar_select %p67, %s68, %s69
    %p73 = pneg %p67
    %p74 = scmp.eq.s32.totalorder %s9, 1
    %p75 = por %p73, %p74
    %p76 = scmp.ne.s32.totalorder %s68, %s71
    %p77 = scmp.eq.s32.totalorder %s9, 0
    %p78 = por %p76, %p77
    %p79 = scmp.ne.s32.totalorder %s68, %s71
    %p80 = scmp.eq.s32.totalorder %s14, 1
    %p81 = por %p79, %p80
    %p82 = scmp.ne.s32.totalorder %s71, %s72
    %p83 = scmp.eq.s32.totalorder %s14, 0
    %p84 = por %p82, %p83
    %p85 = scmp.ne.s32.totalorder %s71, %s72
    %p86 = scmp.eq.s32.totalorder %s15, 1
    %p87 = por %p85, %p86
    %p89 = scmp.ne.s32.totalorder %s72, %s88
    %p90 = scmp.eq.s32.totalorder %s15, 0
    %p91 = por %p89, %p90
    %s92 = ssub.s32 %s17, %s31
    %p93 = scmp.eq.s32.totalorder %s92, 0
    %s95 = sadd.s32 %s94, 1
    %s96 = scalar_select %p93, %s94, %s95
    %p99 = pneg %p93
    %p100 = scmp.eq.s32.totalorder %s9, 1
    %p101 = por %p99, %p100
    %p102 = scmp.ne.s32.totalorder %s94, %s97
    %p103 = scmp.eq.s32.totalorder %s9, 0
    %p104 = por %p102, %p103
    %p105 = scmp.ne.s32.totalorder %s94, %s97
    %p106 = scmp.eq.s32.totalorder %s14, 1
    %p107 = por %p105, %p106
    %p108 = scmp.ne.s32.totalorder %s97, %s98
    %p109 = scmp.eq.s32.totalorder %s14, 0
    %p110 = por %p108, %p109
    %p111 = scmp.ne.s32.totalorder %s97, %s98
    %p112 = scmp.eq.s32.totalorder %s15, 1
    %p113 = por %p111, %p112
    %p115 = scmp.ne.s32.totalorder %s98, %s114
    %p116 = scmp.eq.s32.totalorder %s15, 0
    %p117 = por %p115, %p116
    %s118 = ssub.s32 %s16, %s35
    %s119 = ssub.s32 %s17, %s31
    %s120 = sor.u32 %s118, %s119
    %p121 = scmp.eq.s32.totalorder %s120, 0
    %s123 = sadd.s32 %s122, 1
    %s124 = scalar_select %p121, %s122, %s123
    %p127 = pneg %p121
    %p128 = scmp.eq.s32.totalorder %s9, 1
    %p129 = por %p127, %p128
    %p130 = scmp.ne.s32.totalorder %s122, %s125
    %p131 = scmp.eq.s32.totalorder %s9, 0
    %p132 = por %p130, %p131
    %p133 = scmp.ne.s32.totalorder %s122, %s125
    %p134 = scmp.eq.s32.totalorder %s14, 1
    %p135 = por %p133, %p134
    %p136 = scmp.ne.s32.totalorder %s125, %s126
    %p137 = scmp.eq.s32.totalorder %s14, 0
    %p138 = por %p136, %p137
    %p139 = scmp.ne.s32.totalorder %s125, %s126
    %p140 = scmp.eq.s32.totalorder %s15, 1
    %p141 = por %p139, %p140
    %p143 = scmp.ne.s32.totalorder %s126, %s142
    %p144 = scmp.eq.s32.totalorder %s15, 0
    %p145 = por %p143, %p144
    %p146 = scmp.le.s32.totalorder 1, %s9
    %p147 = scmp.lt.s32.totalorder %s9, 3
    %p148 = pnand %p146, %p147
    %p149 = pneg %p148
    // Predicated region
    $region9: #{generator_forward.9} parent=5 // pred_check
      _
    $region10: #{generator_forward.9} parent=5 // pred_check_branch
      %151 = sbr.rel (%p148) target = $region12
    $region11: #{generator_forward.9} parent=5 // pred_region
      %s152 = ssub.s32 %s9, 1
      // Predicated region
      $region13: #{generator_forward.9} parent=11 // pred_check
        %p153 = pneg %p84
      $region14: #{generator_forward.9} parent=11 // pred_check_branch
        %155 = sbr.rel (%p153) target = $region16
      $region15: #{generator_forward.9} parent=11 // pred_region
        %s156 = smul.u32 64, %s21
        %s157 = smul.u32 2, %s20
        %p158 = scmp.lt.s32.totalorder %s156, 63
        %s159 = scalar_select %p158, %s156, 63
        %p160 = scmp.lt.s32.totalorder %s157, 1
        %s161 = scalar_select %p160, %s157, 1
        %s162 = smul.addr %s159, 2
        %s163 = sadd.s32 %s161, %s162
        %s164 = smul.addr %s163, 4
        %s165 = scalar_lea.vmem %s1, %s164
        %s166 = smul.u32 64, %s21
        %s167 = smul.u32 2, %s20
      $region16: #{generator_forward.9} parent=11 // pred_fallthru
        _
      // Predicated region
      $region17: #{generator_forward.9} parent=11 // pred_check
        %p168 = pneg %p110
      $region18: #{generator_forward.9} parent=11 // pred_check_branch
        %170 = sbr.rel (%p168) target = $region20
      $region19: #{generator_forward.9} parent=11 // pred_region
        %s171 = smul.u32 2, %s20
        %p172 = scmp.lt.s32.totalorder %s171, 1
        %s173 = scalar_select %p172, %s171, 1
        %s174 = scalar_lea.vmem %s2, %s173
        %s175 = smul.u32 2, %s20
      $region20: #{generator_forward.9} parent=11 // pred_fallthru
        _
    $region12: #{generator_forward.9} parent=5 // pred_fallthru
      _
    %p176 = scmp.lt.s32.totalorder %s9, 2
    // Predicated region
    $region21: #{generator_forward.9} parent=5 // pred_check
      %p177 = pneg %p176
    $region22: #{generator_forward.9} parent=5 // pred_check_branch
      %179 = sbr.rel (%p177) target = $region24
    $region23: #{generator_forward.9} parent=5 // pred_region
      // Predicated region
      $region25: #{generator_forward.9} parent=23 // pred_check
        %p180 = pneg %p50
      $region26: #{generator_forward.9} parent=23 // pred_check_branch
        %182 = sbr.rel (%p180) target = $region28
      $region27: #{generator_forward.9} parent=23 // pred_region
        %s183 = smul.u32 4, %s16
        %s184 = smul.u32 4, %s18
        %p185 = scmp.lt.s32.totalorder %s183, 7
        %s186 = scalar_select %p185, %s183, 7
        %p187 = scmp.lt.s32.totalorder %s184, 3
        %s188 = scalar_select %p187, %s184, 3
        %s189 = smul.addr %s186, 4
        %s190 = sadd.s32 %s188, %s189
        %s191 = smul.addr %s190, 4
        %s192 = scalar_lea.vmem %s0, %s191
        %s193 = smul.u32 4, %s16
        %s194 = smul.u32 4, %s18
      $region28: #{generator_forward.9} parent=23 // pred_fallthru
        _
    $region24: #{generator_forward.9} parent=5 // pred_fallthru
      _
    %p195 = scmp.le.s32.totalorder 1, %s9
    %p196 = scmp.lt.s32.totalorder %s9, 3
    %p197 = pnand %p195, %p196
    %p198 = pneg %p197
    // Predicated region
    $region29: #{generator_forward.9} parent=5 // pred_check
      _
    $region30: #{generator_forward.9} parent=5 // pred_check_branch
      %200 = sbr.rel (%p197) target = $region32
    $region31: #{generator_forward.9} parent=5 // pred_region
      %s201 = ssub.s32 %s9, 1
      %s202 = smul.u32 4, %s19
      %s203 = smul.u32 4, %s21
      %p204 = scmp.lt.s32.totalorder %s202, 7
      %s205 = scalar_select %p204, %s202, 7
      %p206 = scmp.lt.s32.totalorder %s203, 3
      %s207 = scalar_select %p206, %s203, 3
      %s208 = smul.addr %s205, 4
      %s209 = sadd.s32 %s207, %s208
      %s210 = smul.addr %s209, 4
      %s211 = scalar_lea.vmem %s0, %s210
      %p212 = pneg %p56
      %p213 = pneg %p53
      %s214 = smul.u32 64, %s21
      %s215 = smul.u32 2, %s20
      %p216 = scmp.lt.s32.totalorder %s214, 63
      %s217 = scalar_select %p216, %s214, 63
      %p218 = scmp.lt.s32.totalorder %s215, 1
      %s219 = scalar_select %p218, %s215, 1
      %s220 = smul.addr %s217, 2
      %s221 = sadd.s32 %s219, %s220
      %s222 = smul.addr %s221, 4
      %s223 = scalar_lea.vmem %s1, %s222
      %p224 = pneg %p84
      %p225 = pneg %p81
      %s226 = smul.u32 2, %s20
      %p227 = scmp.lt.s32.totalorder %s226, 1
      %s228 = scalar_select %p227, %s226, 1
      %s229 = scalar_lea.vmem %s2, %s228
      %p230 = pneg %p110
      %p231 = pneg %p107
      %p232 = pneg %p138
      %p233 = pneg %p135
      %s234 = smul.u32 4, %s19
      %s235 = smul.u32 2, %s20
      %p236 = scmp.lt.s32.totalorder %s234, 7
      %s237 = scalar_select %p236, %s234, 7
      %p238 = scmp.lt.s32.totalorder %s235, 1
      %s239 = scalar_select %p238, %s235, 1
      %s240 = smul.addr %s237, 2
      %s241 = sadd.s32 %s239, %s240
      %s242 = smul.addr %s241, 4
      %s243 = scalar_lea.vmem %s3, %s242
      %s244 = smul.u32 4, %s19
      %s245 = smul.u32 4, %s21
      %p246 = scmp.lt.s32.totalorder %s244, 7
      %s247 = scalar_select %p246, %s244, 7
      %p248 = scmp.lt.s32.totalorder %s245, 3
      %s249 = scalar_select %p248, %s245, 3
      %s250 = smul.addr %s247, 4
      %s251 = sadd.s32 %s249, %s250
      %s252 = smul.addr %s251, 4
      %s253 = scalar_lea.vmem %s0, %s252
      %s254 = smul.u32 4, %s19
      %s255 = smul.u32 4, %s21
      %s256 = smul.u32 64, %s21
      %s257 = smul.u32 2, %s20
      %p258 = scmp.lt.s32.totalorder %s256, 63
      %s259 = scalar_select %p258, %s256, 63
      %p260 = scmp.lt.s32.totalorder %s257, 1
      %s261 = scalar_select %p260, %s257, 1
      %s262 = smul.addr %s259, 2
      %s263 = sadd.s32 %s261, %s262
      %s264 = smul.addr %s263, 4
      %s265 = scalar_lea.vmem %s1, %s264
      %s266 = smul.u32 64, %s21
      %s267 = smul.u32 2, %s20
      %s268 = smul.u32 2, %s20
      %p269 = scmp.lt.s32.totalorder %s268, 1
      %s270 = scalar_select %p269, %s268, 1
      %s271 = scalar_lea.vmem %s2, %s270
      %s272 = smul.u32 2, %s20
      %s273 = smul.u32 4, %s19
      %s274 = smul.u32 2, %s20
      %p275 = scmp.lt.s32.totalorder %s273, 7
      %s276 = scalar_select %p275, %s273, 7
      %p277 = scmp.lt.s32.totalorder %s274, 1
      %s278 = scalar_select %p277, %s274, 1
      %s279 = smul.addr %s276, 2
      %s280 = sadd.s32 %s278, %s279
      %s281 = smul.addr %s280, 4
      %s282 = scalar_lea.vmem %s3, %s281
      %s283 = smul.u32 4, %s19
      %s284 = smul.u32 2, %s20
      %p285 = scmp.eq.s32.totalorder %s21, 0
      // Predicated region
      $region33: #{generator_forward.9} parent=31 // pred_check
        %p286 = pneg %p285
      $region34: #{generator_forward.9} parent=31 // pred_check_branch
        %288 = sbr.rel (%p286) target = $region36
      $region35: #{generator_forward.9} parent=31 // pred_region
        %289 = vst [vmem:[#allocation2] sm:$0xff] 0.0
        %290 = vst [vmem:[#allocation2 + $0x8] sm:$0xff] 0.0
        %291 = vst [vmem:[#allocation2 + $0x10] sm:$0xff] 0.0
        %292 = vst [vmem:[#allocation2 + $0x18] sm:$0xff] 0.0
        %293 = vst [vmem:[#allocation2 + $0x20] sm:$0xff] 0.0
        %294 = vst [vmem:[#allocation2 + $0x28] sm:$0xff] 0.0
        %295 = vst [vmem:[#allocation2 + $0x30] sm:$0xff] 0.0
        %296 = vst [vmem:[#allocation2 + $0x38] sm:$0xff] 0.0
      $region36: #{generator_forward.9} parent=31 // pred_fallthru
        _
      %v297 = vld [vmem:[#allocation2] sm:$0xff]
      %v298 = vld [vmem:[#allocation2 + $0x8] sm:$0xff]
      %v299 = vld [vmem:[#allocation2 + $0x10] sm:$0xff]
      %v300 = vld [vmem:[#allocation2 + $0x18] sm:$0xff]
      %v301 = vld [vmem:[#allocation2 + $0x20] sm:$0xff]
      %v302 = vld [vmem:[#allocation2 + $0x28] sm:$0xff]
      %v303 = vld [vmem:[#allocation2 + $0x30] sm:$0xff]
      %v304 = vld [vmem:[#allocation2 + $0x38] sm:$0xff]
      %v305 = vld [vmem:[%s253] sm:$0xff]
      %v306 = vld [vmem:[%s253 + $0x8] sm:$0xff]
      %v307 = vld [vmem:[%s253 + $0x10] sm:$0xff]
      %v308 = vld [vmem:[%s253 + $0x18] sm:$0xff]
      %v309 = vld [vmem:[%s253 + $0x20] sm:$0xff]
      %v310 = vld [vmem:[%s253 + $0x28] sm:$0xff]
      %v311 = vld [vmem:[%s253 + $0x30] sm:$0xff]
      %v312 = vld [vmem:[%s253 + $0x38] sm:$0xff]
      %v313 = vld [vmem:[%s265] sm:$0xff]
      %v314 = vld [vmem:[%s265 + $0x8] sm:$0xff]
      %v315 = vld [vmem:[%s265 + $0x10] sm:$0xff]
      %v316 = vld [vmem:[%s265 + $0x18] sm:$0xff]
      %v317 = vld [vmem:[%s265 + $0x20] sm:$0xff]
      %v318 = vld [vmem:[%s265 + $0x28] sm:$0xff]
      %v319 = vld [vmem:[%s265 + $0x30] sm:$0xff]
      %v320 = vld [vmem:[%s265 + $0x38] sm:$0xff]
      %v321 = vld [vmem:[%s265 + $0x40] sm:$0xff]
      %v322 = vld [vmem:[%s265 + $0x48] sm:$0xff]
      %v323 = vld [vmem:[%s265 + $0x50] sm:$0xff]
      %v324 = vld [vmem:[%s265 + $0x58] sm:$0xff]
      %v325 = vld [vmem:[%s265 + $0x60] sm:$0xff]
      %v326 = vld [vmem:[%s265 + $0x68] sm:$0xff]
      %v327 = vld [vmem:[%s265 + $0x70] sm:$0xff]
      %v328 = vld [vmem:[%s265 + $0x78] sm:$0xff]
      %v329 = vld [vmem:[%s265 + $0x80] sm:$0xff]
      %v330 = vld [vmem:[%s265 + $0x88] sm:$0xff]
      %v331 = vld [vmem:[%s265 + $0x90] sm:$0xff]
      %v332 = vld [vmem:[%s265 + $0x98] sm:$0xff]
      %v333 = vld [vmem:[%s265 + $0xa0] sm:$0xff]
      %v334 = vld [vmem:[%s265 + $0xa8] sm:$0xff]
      %v335 = vld [vmem:[%s265 + $0xb0] sm:$0xff]
      %v336 = vld [vmem:[%s265 + $0xb8] sm:$0xff]
      %v337 = vld [vmem:[%s265 + $0xc0] sm:$0xff]
      %v338 = vld [vmem:[%s265 + $0xc8] sm:$0xff]
      %v339 = vld [vmem:[%s265 + $0xd0] sm:$0xff]
      %v340 = vld [vmem:[%s265 + $0xd8] sm:$0xff]
      %v341 = vld [vmem:[%s265 + $0xe0] sm:$0xff]
      %v342 = vld [vmem:[%s265 + $0xe8] sm:$0xff]
      %v343 = vld [vmem:[%s265 + $0xf0] sm:$0xff]
      %v344 = vld [vmem:[%s265 + $0xf8] sm:$0xff]
      %v345 = vld [vmem:[%s265 + $0x100] sm:$0xff]
      %v346 = vld [vmem:[%s265 + $0x108] sm:$0xff]
      %v347 = vld [vmem:[%s265 + $0x110] sm:$0xff]
      %v348 = vld [vmem:[%s265 + $0x118] sm:$0xff]
      %v349 = vld [vmem:[%s265 + $0x120] sm:$0xff]
      %v350 = vld [vmem:[%s265 + $0x128] sm:$0xff]
      %v351 = vld [vmem:[%s265 + $0x130] sm:$0xff]
      %v352 = vld [vmem:[%s265 + $0x138] sm:$0xff]
      %v353 = vld [vmem:[%s265 + $0x140] sm:$0xff]
      %v354 = vld [vmem:[%s265 + $0x148] sm:$0xff]
      %v355 = vld [vmem:[%s265 + $0x150] sm:$0xff]
      %v356 = vld [vmem:[%s265 + $0x158] sm:$0xff]
      %v357 = vld [vmem:[%s265 + $0x160] sm:$0xff]
      %v358 = vld [vmem:[%s265 + $0x168] sm:$0xff]
      %v359 = vld [vmem:[%s265 + $0x170] sm:$0xff]
      %v360 = vld [vmem:[%s265 + $0x178] sm:$0xff]
      %v361 = vld [vmem:[%s265 + $0x180] sm:$0xff]
      %v362 = vld [vmem:[%s265 + $0x188] sm:$0xff]
      %v363 = vld [vmem:[%s265 + $0x190] sm:$0xff]
      %v364 = vld [vmem:[%s265 + $0x198] sm:$0xff]
      %v365 = vld [vmem:[%s265 + $0x1a0] sm:$0xff]
      %v366 = vld [vmem:[%s265 + $0x1a8] sm:$0xff]
      %v367 = vld [vmem:[%s265 + $0x1b0] sm:$0xff]
      %v368 = vld [vmem:[%s265 + $0x1b8] sm:$0xff]
      %v369 = vld [vmem:[%s265 + $0x1c0] sm:$0xff]
      %v370 = vld [vmem:[%s265 + $0x1c8] sm:$0xff]
      %v371 = vld [vmem:[%s265 + $0x1d0] sm:$0xff]
      %v372 = vld [vmem:[%s265 + $0x1d8] sm:$0xff]
      %v373 = vld [vmem:[%s265 + $0x1e0] sm:$0xff]
      %v374 = vld [vmem:[%s265 + $0x1e8] sm:$0xff]
      %v375 = vld [vmem:[%s265 + $0x1f0] sm:$0xff]
      %v376 = vld [vmem:[%s265 + $0x1f8] sm:$0xff]
      %v385 = vunpack.c.l.b16 %v305
      %v386 = vunpack.c.h.b16 %v305
      %v387 = vunpack.c.l.b16 %v306
      %v388 = vunpack.c.h.b16 %v306
      %v389 = vunpack.c.l.b16 %v307
      %v390 = vunpack.c.h.b16 %v307
      %v391 = vunpack.c.l.b16 %v308
      %v392 = vunpack.c.h.b16 %v308
      %v393 = vunpack.c.l.b16 %v309
      %v394 = vunpack.c.h.b16 %v309
      %v395 = vunpack.c.l.b16 %v310
      %v396 = vunpack.c.h.b16 %v310
      %v397 = vunpack.c.l.b16 %v311
      %v398 = vunpack.c.h.b16 %v311
      %v399 = vunpack.c.l.b16 %v312
      %v400 = vunpack.c.h.b16 %v312
      %v401 = vpack.c.b16 %v389, %v385
      %v402 = vpack.c.b16 %v390, %v386
      %v403 = vpack.c.b16 %v391, %v387
      %v404 = vpack.c.b16 %v392, %v388
      %v405 = vpack.c.b16 %v397, %v393
      %v406 = vpack.c.b16 %v398, %v394
      %v407 = vpack.c.b16 %v399, %v395
      %v408 = vpack.c.b16 %v400, %v396
      %v481 = vunpack.c.l.b16 %v313
      %v482 = vunpack.c.h.b16 %v313
      %v483 = vunpack.c.l.b16 %v314
      %v484 = vunpack.c.h.b16 %v314
      %v485 = vunpack.c.l.b16 %v315
      %v486 = vunpack.c.h.b16 %v315
      %v487 = vunpack.c.l.b16 %v316
      %v488 = vunpack.c.h.b16 %v316
      %v489 = vunpack.c.l.b16 %v317
      %v490 = vunpack.c.h.b16 %v317
      %v491 = vunpack.c.l.b16 %v318
      %v492 = vunpack.c.h.b16 %v318
      %v493 = vunpack.c.l.b16 %v319
      %v494 = vunpack.c.h.b16 %v319
      %v495 = vunpack.c.l.b16 %v320
      %v496 = vunpack.c.h.b16 %v320
      %v497 = vunpack.c.l.b16 %v321
      %v498 = vunpack.c.h.b16 %v321
      %v499 = vunpack.c.l.b16 %v322
      %v500 = vunpack.c.h.b16 %v322
      %v501 = vunpack.c.l.b16 %v323
      %v502 = vunpack.c.h.b16 %v323
      %v503 = vunpack.c.l.b16 %v324
      %v504 = vunpack.c.h.b16 %v324
      %v505 = vunpack.c.l.b16 %v325
      %v506 = vunpack.c.h.b16 %v325
      %v507 = vunpack.c.l.b16 %v326
      %v508 = vunpack.c.h.b16 %v326
      %v509 = vunpack.c.l.b16 %v327
      %v510 = vunpack.c.h.b16 %v327
      %v511 = vunpack.c.l.b16 %v328
      %v512 = vunpack.c.h.b16 %v328
      %v513 = vunpack.c.l.b16 %v329
      %v514 = vunpack.c.h.b16 %v329
      %v515 = vunpack.c.l.b16 %v330
      %v516 = vunpack.c.h.b16 %v330
      %v517 = vunpack.c.l.b16 %v331
      %v518 = vunpack.c.h.b16 %v331
      %v519 = vunpack.c.l.b16 %v332
      %v520 = vunpack.c.h.b16 %v332
      %v521 = vunpack.c.l.b16 %v333
      %v522 = vunpack.c.h.b16 %v333
      %v523 = vunpack.c.l.b16 %v334
      %v524 = vunpack.c.h.b16 %v334
      %v525 = vunpack.c.l.b16 %v335
      %v526 = vunpack.c.h.b16 %v335
      %v527 = vunpack.c.l.b16 %v336
      %v528 = vunpack.c.h.b16 %v336
      %v529 = vunpack.c.l.b16 %v337
      %v530 = vunpack.c.h.b16 %v337
      %v531 = vunpack.c.l.b16 %v338
      %v532 = vunpack.c.h.b16 %v338
      %v533 = vunpack.c.l.b16 %v339
      %v534 = vunpack.c.h.b16 %v339
      %v535 = vunpack.c.l.b16 %v340
      %v536 = vunpack.c.h.b16 %v340
      %v537 = vunpack.c.l.b16 %v341
      %v538 = vunpack.c.h.b16 %v341
      %v539 = vunpack.c.l.b16 %v342
      %v540 = vunpack.c.h.b16 %v342
      %v541 = vunpack.c.l.b16 %v343
      %v542 = vunpack.c.h.b16 %v343
      %v543 = vunpack.c.l.b16 %v344
      %v544 = vunpack.c.h.b16 %v344
      %v545 = vunpack.c.l.b16 %v345
      %v546 = vunpack.c.h.b16 %v345
      %v547 = vunpack.c.l.b16 %v346
      %v548 = vunpack.c.h.b16 %v346
      %v549 = vunpack.c.l.b16 %v347
      %v550 = vunpack.c.h.b16 %v347
      %v551 = vunpack.c.l.b16 %v348
      %v552 = vunpack.c.h.b16 %v348
      %v553 = vunpack.c.l.b16 %v349
      %v554 = vunpack.c.h.b16 %v349
      %v555 = vunpack.c.l.b16 %v350
      %v556 = vunpack.c.h.b16 %v350
      %v557 = vunpack.c.l.b16 %v351
      %v558 = vunpack.c.h.b16 %v351
      %v559 = vunpack.c.l.b16 %v352
      %v560 = vunpack.c.h.b16 %v352
      %v561 = vunpack.c.l.b16 %v353
      %v562 = vunpack.c.h.b16 %v353
      %v563 = vunpack.c.l.b16 %v354
      %v564 = vunpack.c.h.b16 %v354
      %v565 = vunpack.c.l.b16 %v355
      %v566 = vunpack.c.h.b16 %v355
      %v567 = vunpack.c.l.b16 %v356
      %v568 = vunpack.c.h.b16 %v356
      %v569 = vunpack.c.l.b16 %v357
      %v570 = vunpack.c.h.b16 %v357
      %v571 = vunpack.c.l.b16 %v358
      %v572 = vunpack.c.h.b16 %v358
      %v573 = vunpack.c.l.b16 %v359
      %v574 = vunpack.c.h.b16 %v359
      %v575 = vunpack.c.l.b16 %v360
      %v576 = vunpack.c.h.b16 %v360
      %v577 = vunpack.c.l.b16 %v361
      %v578 = vunpack.c.h.b16 %v361
      %v579 = vunpack.c.l.b16 %v362
      %v580 = vunpack.c.h.b16 %v362
      %v581 = vunpack.c.l.b16 %v363
      %v582 = vunpack.c.h.b16 %v363
      %v583 = vunpack.c.l.b16 %v364
      %v584 = vunpack.c.h.b16 %v364
      %v585 = vunpack.c.l.b16 %v365
      %v586 = vunpack.c.h.b16 %v365
      %v587 = vunpack.c.l.b16 %v366
      %v588 = vunpack.c.h.b16 %v366
      %v589 = vunpack.c.l.b16 %v367
      %v590 = vunpack.c.h.b16 %v367
      %v591 = vunpack.c.l.b16 %v368
      %v592 = vunpack.c.h.b16 %v368
      %v593 = vunpack.c.l.b16 %v369
      %v594 = vunpack.c.h.b16 %v369
      %v595 = vunpack.c.l.b16 %v370
      %v596 = vunpack.c.h.b16 %v370
      %v597 = vunpack.c.l.b16 %v371
      %v598 = vunpack.c.h.b16 %v371
      %v599 = vunpack.c.l.b16 %v372
      %v600 = vunpack.c.h.b16 %v372
      %v601 = vunpack.c.l.b16 %v373
      %v602 = vunpack.c.h.b16 %v373
      %v603 = vunpack.c.l.b16 %v374
      %v604 = vunpack.c.h.b16 %v374
      %v605 = vunpack.c.l.b16 %v375
      %v606 = vunpack.c.h.b16 %v375
      %v607 = vunpack.c.l.b16 %v376
      %v608 = vunpack.c.h.b16 %v376
      %v609 = vpack.c.b16 %v483, %v481
      %v610 = vpack.c.b16 %v484, %v482
      %v611 = vpack.c.b16 %v487, %v485
      %v612 = vpack.c.b16 %v488, %v486
      %v613 = vpack.c.b16 %v491, %v489
      %v614 = vpack.c.b16 %v492, %v490
      %v615 = vpack.c.b16 %v495, %v493
      %v616 = vpack.c.b16 %v496, %v494
      %v617 = vpack.c.b16 %v499, %v497
      %v618 = vpack.c.b16 %v500, %v498
      %v619 = vpack.c.b16 %v503, %v501
      %v620 = vpack.c.b16 %v504, %v502
      %v621 = vpack.c.b16 %v507, %v505
      %v622 = vpack.c.b16 %v508, %v506
      %v623 = vpack.c.b16 %v511, %v509
      %v624 = vpack.c.b16 %v512, %v510
      %v625 = vpack.c.b16 %v515, %v513
      %v626 = vpack.c.b16 %v516, %v514
      %v627 = vpack.c.b16 %v519, %v517
      %v628 = vpack.c.b16 %v520, %v518
      %v629 = vpack.c.b16 %v523, %v521
      %v630 = vpack.c.b16 %v524, %v522
      %v631 = vpack.c.b16 %v527, %v525
      %v632 = vpack.c.b16 %v528, %v526
      %v633 = vpack.c.b16 %v531, %v529
      %v634 = vpack.c.b16 %v532, %v530
      %v635 = vpack.c.b16 %v535, %v533
      %v636 = vpack.c.b16 %v536, %v534
      %v637 = vpack.c.b16 %v539, %v537
      %v638 = vpack.c.b16 %v540, %v538
      %v639 = vpack.c.b16 %v543, %v541
      %v640 = vpack.c.b16 %v544, %v542
      %v641 = vpack.c.b16 %v547, %v545
      %v642 = vpack.c.b16 %v548, %v546
      %v643 = vpack.c.b16 %v551, %v549
      %v644 = vpack.c.b16 %v552, %v550
      %v645 = vpack.c.b16 %v555, %v553
      %v646 = vpack.c.b16 %v556, %v554
      %v647 = vpack.c.b16 %v559, %v557
      %v648 = vpack.c.b16 %v560, %v558
      %v649 = vpack.c.b16 %v563, %v561
      %v650 = vpack.c.b16 %v564, %v562
      %v651 = vpack.c.b16 %v567, %v565
      %v652 = vpack.c.b16 %v568, %v566
      %v653 = vpack.c.b16 %v571, %v569
      %v654 = vpack.c.b16 %v572, %v570
      %v655 = vpack.c.b16 %v575, %v573
      %v656 = vpack.c.b16 %v576, %v574
      %v657 = vpack.c.b16 %v579, %v577
      %v658 = vpack.c.b16 %v580, %v578
      %v659 = vpack.c.b16 %v583, %v581
      %v660 = vpack.c.b16 %v584, %v582
      %v661 = vpack.c.b16 %v587, %v585
      %v662 = vpack.c.b16 %v588, %v586
      %v663 = vpack.c.b16 %v591, %v589
      %v664 = vpack.c.b16 %v592, %v590
      %v665 = vpack.c.b16 %v595, %v593
      %v666 = vpack.c.b16 %v596, %v594
      %v667 = vpack.c.b16 %v599, %v597
      %v668 = vpack.c.b16 %v600, %v598
      %v669 = vpack.c.b16 %v603, %v601
      %v670 = vpack.c.b16 %v604, %v602
      %v671 = vpack.c.b16 %v607, %v605
      %v672 = vpack.c.b16 %v608, %v606
      %737 = vmatprep.subr.bf16.mxu0 %v624
      %738 = vmatpush1.bf16.msra.mxu0 %v623
      %739 = vmatprep.subr.bf16.mxu0 %v622
      %740 = vmatpush1.bf16.msra.mxu0 %v621
      %741 = vmatprep.subr.bf16.mxu0 %v620
      %742 = vmatpush1.bf16.msra.mxu0 %v619
      %743 = vmatprep.subr.bf16.mxu0 %v618
      %744 = vmatpush1.bf16.msra.mxu0 %v617
      %745 = vmatprep.subr.bf16.mxu0 %v616
      %746 = vmatpush1.bf16.msra.mxu0 %v615
      %747 = vmatprep.subr.bf16.mxu0 %v614
      %748 = vmatpush1.bf16.msra.mxu0 %v613
      %749 = vmatprep.subr.bf16.mxu0 %v612
      %750 = vmatpush1.bf16.msra.mxu0 %v611
      %751 = vmatprep.subr.bf16.mxu0 %v610
      %752 = vmatpush1.bf16.msra.mxu0 %v609
      %753 = vmatprep.subr.bf16.mxu0 %v640
      %754 = vmatpush2.bf16.msra.mxu0 %v639
      %755 = vmatprep.subr.bf16.mxu0 %v638
      %756 = vmatpush2.bf16.msra.mxu0 %v637
      %757 = vmatprep.subr.bf16.mxu0 %v636
      %758 = vmatpush2.bf16.msra.mxu0 %v635
      %759 = vmatprep.subr.bf16.mxu0 %v634
      %760 = vmatpush2.bf16.msra.mxu0 %v633
      %761 = vmatprep.subr.bf16.mxu0 %v632
      %762 = vmatpush2.bf16.msra.mxu0 %v631
      %763 = vmatprep.subr.bf16.mxu0 %v630
      %764 = vmatpush2.bf16.msra.mxu0 %v629
      %765 = vmatprep.subr.bf16.mxu0 %v628
      %766 = vmatpush2.bf16.msra.mxu0 %v627
      %767 = vmatprep.subr.bf16.mxu0 %v626
      %768 = vmatpush2.bf16.msra.mxu0 %v625
      %769 = vmatprep.mubr.bf16.mxu0 %v402
      %770 = vmatmul.mubr.bf16.gmra.mxu0 %v401
      %v771 = vpop.f32.mrf.mxu0
      %v772 = vadd.f32 0.0, %v771
      %v773 = vpop.f32.mrf.mxu0
      %v774 = vadd.f32 0.0, %v773
      %v775 = vpop.f32.mrf.mxu0
      %v776 = vadd.f32 0.0, %v775
      %v777 = vpop.f32.mrf.mxu0
      %v778 = vadd.f32 0.0, %v777
      %779 = vmatprep.mubr.bf16.mxu0 %v406
      %780 = vmatmul.mubr.bf16.gmra.mxu0 %v405
      %v781 = vpop.f32.mrf.mxu0
      %v782 = vadd.f32 0.0, %v781
      %v783 = vpop.f32.mrf.mxu0
      %v784 = vadd.f32 0.0, %v783
      %v785 = vpop.f32.mrf.mxu0
      %v786 = vadd.f32 0.0, %v785
      %v787 = vpop.f32.mrf.mxu0
      %v788 = vadd.f32 0.0, %v787
      %789 = vdwg.mxu0
      %790 = vmatprep.subr.bf16.mxu0 %v656
      %791 = vmatpush1.bf16.msra.mxu0 %v655
      %792 = vmatprep.subr.bf16.mxu0 %v654
      %793 = vmatpush1.bf16.msra.mxu0 %v653
      %794 = vmatprep.subr.bf16.mxu0 %v652
      %795 = vmatpush1.bf16.msra.mxu0 %v651
      %796 = vmatprep.subr.bf16.mxu0 %v650
      %797 = vmatpush1.bf16.msra.mxu0 %v649
      %798 = vmatprep.subr.bf16.mxu0 %v648
      %799 = vmatpush1.bf16.msra.mxu0 %v647
      %800 = vmatprep.subr.bf16.mxu0 %v646
      %801 = vmatpush1.bf16.msra.mxu0 %v645
      %802 = vmatprep.subr.bf16.mxu0 %v644
      %803 = vmatpush1.bf16.msra.mxu0 %v643
      %804 = vmatprep.subr.bf16.mxu0 %v642
      %805 = vmatpush1.bf16.msra.mxu0 %v641
      %806 = vmatprep.subr.bf16.mxu0 %v672
      %807 = vmatpush2.bf16.msra.mxu0 %v671
      %808 = vmatprep.subr.bf16.mxu0 %v670
      %809 = vmatpush2.bf16.msra.mxu0 %v669
      %810 = vmatprep.subr.bf16.mxu0 %v668
      %811 = vmatpush2.bf16.msra.mxu0 %v667
      %812 = vmatprep.subr.bf16.mxu0 %v666
      %813 = vmatpush2.bf16.msra.mxu0 %v665
      %814 = vmatprep.subr.bf16.mxu0 %v664
      %815 = vmatpush2.bf16.msra.mxu0 %v663
      %816 = vmatprep.subr.bf16.mxu0 %v662
      %817 = vmatpush2.bf16.msra.mxu0 %v661
      %818 = vmatprep.subr.bf16.mxu0 %v660
      %819 = vmatpush2.bf16.msra.mxu0 %v659
      %820 = vmatprep.subr.bf16.mxu0 %v658
      %821 = vmatpush2.bf16.msra.mxu0 %v657
      %822 = vmatprep.mubr.bf16.mxu0 %v404
      %823 = vmatmul.mubr.bf16.gmra.mxu0 %v403
      %v824 = vpop.f32.mrf.mxu0
      %v825 = vadd.f32 %v772, %v824
      %v826 = vpop.f32.mrf.mxu0
      %v827 = vadd.f32 %v774, %v826
      %v828 = vpop.f32.mrf.mxu0
      %v829 = vadd.f32 %v776, %v828
      %v830 = vpop.f32.mrf.mxu0
      %v831 = vadd.f32 %v778, %v830
      %832 = vmatprep.mubr.bf16.mxu0 %v408
      %833 = vmatmul.mubr.bf16.gmra.mxu0 %v407
      %v834 = vpop.f32.mrf.mxu0
      %v835 = vadd.f32 %v782, %v834
      %v836 = vpop.f32.mrf.mxu0
      %v837 = vadd.f32 %v784, %v836
      %v838 = vpop.f32.mrf.mxu0
      %v839 = vadd.f32 %v786, %v838
      %v840 = vpop.f32.mrf.mxu0
      %v841 = vadd.f32 %v788, %v840
      %842 = vdwg.mxu0
      %v843 = vadd.f32 %v297, %v825
      %v844 = vadd.f32 %v298, %v827
      %v845 = vadd.f32 %v299, %v829
      %v846 = vadd.f32 %v300, %v831
      %v847 = vadd.f32 %v301, %v835
      %v848 = vadd.f32 %v302, %v837
      %v849 = vadd.f32 %v303, %v839
      %v850 = vadd.f32 %v304, %v841
      %851 = vst [vmem:[#allocation2] sm:$0xff] %v843
      %852 = vst [vmem:[#allocation2 + $0x8] sm:$0xff] %v844
      %853 = vst [vmem:[#allocation2 + $0x10] sm:$0xff] %v845
      %854 = vst [vmem:[#allocation2 + $0x18] sm:$0xff] %v846
      %855 = vst [vmem:[#allocation2 + $0x20] sm:$0xff] %v847
      %856 = vst [vmem:[#allocation2 + $0x28] sm:$0xff] %v848
      %857 = vst [vmem:[#allocation2 + $0x30] sm:$0xff] %v849
      %858 = vst [vmem:[#allocation2 + $0x38] sm:$0xff] %v850
      // Predicated region
      $region37: #{generator_forward.9} parent=31 // pred_check
        %p859 = pneg %p285
      $region38: #{generator_forward.9} parent=31 // pred_check_branch
        %861 = sbr.rel (%p859) target = $region40
      $region39: #{generator_forward.9} parent=31 // pred_region
        %v862 = vld [vmem:[#allocation2] sm:$0xff]
        %v863 = vld [vmem:[#allocation2 + $0x8] sm:$0xff]
        %v864 = vld [vmem:[#allocation2 + $0x10] sm:$0xff]
        %v865 = vld [vmem:[#allocation2 + $0x18] sm:$0xff]
        %v866 = vld [vmem:[#allocation2 + $0x20] sm:$0xff]
        %v867 = vld [vmem:[#allocation2 + $0x28] sm:$0xff]
        %v868 = vld [vmem:[#allocation2 + $0x30] sm:$0xff]
        %v869 = vld [vmem:[#allocation2 + $0x38] sm:$0xff]
        %v870 = vld [vmem:[%s271] sm:$0x3]
        %v872 = vlaneseq
        %v873 = vshrl.u32 %v872, 7
        %v874 = vsub.s32 0, %v873
        %v875 = vrot.slane %v870, %v874
        %v876 = vlaneseq
        %v877 = vshrl.u32 %v876, 7
        %v878 = vsub.s32 1, %v877
        %v879 = vrot.slane %v870, %v878
        %v882 = vadd.f32 %v862, %v875
        %v883 = vadd.f32 %v863, %v879
        %v884 = vadd.f32 %v864, %v875
        %v885 = vadd.f32 %v865, %v879
        %v886 = vadd.f32 %v866, %v875
        %v887 = vadd.f32 %v867, %v879
        %v888 = vadd.f32 %v868, %v875
        %v889 = vadd.f32 %v869, %v879
        %v890 = vpack.c.bf16 %v884, %v882
        %v891 = vpack.c.bf16 %v885, %v883
        %v892 = vpack.c.bf16 %v888, %v886
        %v893 = vpack.c.bf16 %v889, %v887
        %v898 = vunpack.c.l.b16 %v890
        %v899 = vunpack.c.l.b16 %v891
        %v900 = vunpack.c.h.b16 %v890
        %v901 = vunpack.c.h.b16 %v891
        %v902 = vunpack.c.l.b16 %v892
        %v903 = vunpack.c.l.b16 %v893
        %v904 = vunpack.c.h.b16 %v892
        %v905 = vunpack.c.h.b16 %v893
        %v906 = vpack.c.b16 %v899, %v898
        %v907 = vpack.c.b16 %v901, %v900
        %v908 = vpack.c.b16 %v903, %v902
        %v909 = vpack.c.b16 %v905, %v904
        %914 = vst [vmem:[%s282] sm:$0xff] %v906
        %915 = vst [vmem:[%s282 + $0x8] sm:$0xff] %v907
        %916 = vst [vmem:[%s282 + $0x10] sm:$0xff] %v908
        %917 = vst [vmem:[%s282 + $0x18] sm:$0xff] %v909
      $region40: #{generator_forward.9} parent=31 // pred_fallthru
        _
      %s918 = smul.u32 4, %s19
      %s919 = smul.u32 2, %s20
      %p920 = scmp.lt.s32.totalorder %s918, 7
      %s921 = scalar_select %p920, %s918, 7
      %p922 = scmp.lt.s32.totalorder %s919, 1
      %s923 = scalar_select %p922, %s919, 1
      %s924 = smul.addr %s921, 2
      %s925 = sadd.s32 %s923, %s924
      %s926 = smul.addr %s925, 4
      %s927 = scalar_lea.vmem %s3, %s926
      // Predicated region
      $region41: #{generator_forward.9} parent=31 // pred_check
        %p928 = pneg %p135
      $region42: #{generator_forward.9} parent=31 // pred_check_branch
        %930 = sbr.rel (%p928) target = $region44
      $region43: #{generator_forward.9} parent=31 // pred_region
        %s931 = smul.u32 4, %s19
        %s932 = smul.u32 2, %s20
      $region44: #{generator_forward.9} parent=31 // pred_fallthru
        _
    $region32: #{generator_forward.9} parent=5 // pred_fallthru
      _
    %p933 = scmp.le.s32.totalorder 2, %s9
    // Predicated region
    $region45: #{generator_forward.9} parent=5 // pred_check
      %p934 = pneg %p933
    $region46: #{generator_forward.9} parent=5 // pred_check_branch
      %936 = sbr.rel (%p934) target = $region48
    $region47: #{generator_forward.9} parent=5 // pred_region
      %s937 = ssub.s32 %s9, 2
      // Predicated region
      $region49: #{generator_forward.9} parent=47 // pred_check
        %p938 = pneg %p141
      $region50: #{generator_forward.9} parent=47 // pred_check_branch
        %940 = sbr.rel (%p938) target = $region52
      $region51: #{generator_forward.9} parent=47 // pred_region
        %s941 = smul.u32 4, %s22
        %s942 = smul.u32 2, %s23
        %p943 = scmp.lt.s32.totalorder %s941, 7
        %s944 = scalar_select %p943, %s941, 7
        %p945 = scmp.lt.s32.totalorder %s942, 1
        %s946 = scalar_select %p945, %s942, 1
        %s947 = smul.addr %s944, 2
        %s948 = sadd.s32 %s946, %s947
        %s949 = smul.addr %s948, 4
        %s950 = scalar_lea.vmem %s3, %s949
      $region52: #{generator_forward.9} parent=47 // pred_fallthru
        _
    $region48: #{generator_forward.9} parent=5 // pred_fallthru
      _
  $region6: #{generator_forward.9} parent=0 // loop_footer
    %s13 = sadd.s32 1, %s9
  $region7: #{generator_forward.9} parent=0 // loop_footer_branch
    %8 = sbr.rel target = $region3
  $region8: #{generator_forward.9} parent=0 // loop_exit
    _

// kernel: generator_forward.10
$region0: #{generator_forward.10}
  #allocation0 [shape = 'u32[]', space=smem, size = 0x4, offset = 0x4, fixed_abs, tag = 'smem constant byte address 0x4 - core index']
  #allocation1 [shape = 'u32[144,128]{1,0:T(1,128)}', space=vmem, size = 0x12000, scoped, tag = 'internal scratch']
  %s0 = inlined_call_operand.vmem [shape: bf16[128,64], index: 0, kind: input, shape index: {}]
  %s1 = inlined_call_operand.vmem [shape: f32[1,64], index: 1, kind: input, shape index: {}]
  %s2 = inlined_call_operand.vmem [shape: f32[1,64], index: 2, kind: input, shape index: {}]
  %s3 = inlined_call_operand.vmem [shape: bf16[128,64], index: 3, kind: output, shape index: {}]
  %s4 = sld [smem:[#allocation0]]
  $region22: #{generator_forward.10} parent=0
    _
  %s6 = ssub.s32 1, %s4
  %s7 = scalar_select 0, %s6, %s4
  // Predicated region
  $region2: #{generator_forward.10} parent=0 // pred_check
    _
  $region3: #{generator_forward.10} parent=0 // pred_check_branch
    %9 = sbr.rel (0) target = $region5
  $region4: #{generator_forward.10} parent=0 // pred_region
    _
  $region5: #{generator_forward.10} parent=0 // pred_fallthru
    _
  // Predicated region
  $region6: #{generator_forward.10} parent=0 // pred_check
    _
  $region7: #{generator_forward.10} parent=0 // pred_check_branch
    %11 = sbr.rel (0) target = $region9
  $region8: #{generator_forward.10} parent=0 // pred_region
    _
  $region9: #{generator_forward.10} parent=0 // pred_fallthru
    _
  // Predicated region
  $region10: #{generator_forward.10} parent=0 // pred_check
    _
  $region11: #{generator_forward.10} parent=0 // pred_check_branch
    %13 = sbr.rel (0) target = $region13
  $region12: #{generator_forward.10} parent=0 // pred_region
    _
  $region13: #{generator_forward.10} parent=0 // pred_fallthru
    _
  %v14 = vld [vmem:[%s0] sm:$0xf]
  %v15 = vld [vmem:[%s0 + $0x4] sm:$0xf]
  %v16 = vld [vmem:[%s0 + $0x8] sm:$0xf]
  %v17 = vld [vmem:[%s0 + $0xc] sm:$0xf]
  %v18 = vld [vmem:[%s0 + $0x10] sm:$0xf]
  %v19 = vld [vmem:[%s0 + $0x14] sm:$0xf]
  %v20 = vld [vmem:[%s0 + $0x18] sm:$0xf]
  %v21 = vld [vmem:[%s0 + $0x1c] sm:$0xf]
  %v22 = vld [vmem:[%s0 + $0x20] sm:$0xf]
  %v23 = vld [vmem:[%s0 + $0x24] sm:$0xf]
  %v24 = vld [vmem:[%s0 + $0x28] sm:$0xf]
  %v25 = vld [vmem:[%s0 + $0x2c] sm:$0xf]
  %v26 = vld [vmem:[%s0 + $0x30] sm:$0xf]
  %v27 = vld [vmem:[%s0 + $0x34] sm:$0xf]
  %v28 = vld [vmem:[%s0 + $0x38] sm:$0xf]
  %v29 = vld [vmem:[%s0 + $0x3c] sm:$0xf]
  %v30 = vunpack.c.l.bf16 %v14
  %v31 = vunpack.c.l.bf16 %v15
  %v32 = vunpack.c.l.bf16 %v16
  %v33 = vunpack.c.l.bf16 %v17
  %v34 = vunpack.c.l.bf16 %v18
  %v35 = vunpack.c.l.bf16 %v19
  %v36 = vunpack.c.l.bf16 %v20
  %v37 = vunpack.c.l.bf16 %v21
  %v38 = vunpack.c.l.bf16 %v22
  %v39 = vunpack.c.l.bf16 %v23
  %v40 = vunpack.c.l.bf16 %v24
  %v41 = vunpack.c.l.bf16 %v25
  %v42 = vunpack.c.l.bf16 %v26
  %v43 = vunpack.c.l.bf16 %v27
  %v44 = vunpack.c.l.bf16 %v28
  %v45 = vunpack.c.l.bf16 %v29
  %v46 = vld [vmem:[%s1] sm:$0x1]
  %v48 = vlaneseq
  %v49 = vshrl.u32 %v48, 7
  %v50 = vsub.s32 0, %v49
  %v51 = vrot.slane %v46, %v50
  %v53 = vmul.f32 %v30, %v51
  %v54 = vmul.f32 %v31, %v51
  %v55 = vmul.f32 %v32, %v51
  %v56 = vmul.f32 %v33, %v51
  %v57 = vmul.f32 %v34, %v51
  %v58 = vmul.f32 %v35, %v51
  %v59 = vmul.f32 %v36, %v51
  %v60 = vmul.f32 %v37, %v51
  %v61 = vmul.f32 %v38, %v51
  %v62 = vmul.f32 %v39, %v51
  %v63 = vmul.f32 %v40, %v51
  %v64 = vmul.f32 %v41, %v51
  %v65 = vmul.f32 %v42, %v51
  %v66 = vmul.f32 %v43, %v51
  %v67 = vmul.f32 %v44, %v51
  %v68 = vmul.f32 %v45, %v51
  %v69 = vld [vmem:[%s2] sm:$0x1]
  %v71 = vlaneseq
  %v72 = vshrl.u32 %v71, 7
  %v73 = vsub.s32 0, %v72
  %v74 = vrot.slane %v69, %v73
  %v76 = vadd.f32 %v53, %v74
  %v77 = vadd.f32 %v54, %v74
  %v78 = vadd.f32 %v55, %v74
  %v79 = vadd.f32 %v56, %v74
  %v80 = vadd.f32 %v57, %v74
  %v81 = vadd.f32 %v58, %v74
  %v82 = vadd.f32 %v59, %v74
  %v83 = vadd.f32 %v60, %v74
  %v84 = vadd.f32 %v61, %v74
  %v85 = vadd.f32 %v62, %v74
  %v86 = vadd.f32 %v63, %v74
  %v87 = vadd.f32 %v64, %v74
  %v88 = vadd.f32 %v65, %v74
  %v89 = vadd.f32 %v66, %v74
  %v90 = vadd.f32 %v67, %v74
  %v91 = vadd.f32 %v68, %v74
  %v92 = vmax.f32 %v76, 0.0
  %v93 = vmax.f32 %v77, 0.0
  %v94 = vmax.f32 %v78, 0.0
  %v95 = vmax.f32 %v79, 0.0
  %v96 = vmax.f32 %v80, 0.0
  %v97 = vmax.f32 %v81, 0.0
  %v98 = vmax.f32 %v82, 0.0
  %v99 = vmax.f32 %v83, 0.0
  %v100 = vmax.f32 %v84, 0.0
  %v101 = vmax.f32 %v85, 0.0
  %v102 = vmax.f32 %v86, 0.0
  %v103 = vmax.f32 %v87, 0.0
  %v104 = vmax.f32 %v88, 0.0
  %v105 = vmax.f32 %v89, 0.0
  %v106 = vmax.f32 %v90, 0.0
  %v107 = vmax.f32 %v91, 0.0
  %v108 = vpack.c.bf16 %v93, %v92
  %v109 = vpack.c.bf16 %v95, %v94
  %v110 = vpack.c.bf16 %v97, %v96
  %v111 = vpack.c.bf16 %v99, %v98
  %v112 = vpack.c.bf16 %v101, %v100
  %v113 = vpack.c.bf16 %v103, %v102
  %v114 = vpack.c.bf16 %v105, %v104
  %v115 = vpack.c.bf16 %v107, %v106
  %v124 = vunpack.c.l.b16 %v108
  %v125 = vunpack.c.h.b16 %v108
  %v126 = vunpack.c.l.b16 %v109
  %v127 = vunpack.c.h.b16 %v109
  %v128 = vunpack.c.l.b16 %v110
  %v129 = vunpack.c.h.b16 %v110
  %v130 = vunpack.c.l.b16 %v111
  %v131 = vunpack.c.h.b16 %v111
  %v132 = vunpack.c.l.b16 %v112
  %v133 = vunpack.c.h.b16 %v112
  %v134 = vunpack.c.l.b16 %v113
  %v135 = vunpack.c.h.b16 %v113
  %v136 = vunpack.c.l.b16 %v114
  %v137 = vunpack.c.h.b16 %v114
  %v138 = vunpack.c.l.b16 %v115
  %v139 = vunpack.c.h.b16 %v115
  %v140 = vpack.c.b16 %v124, %v124
  %v141 = vpack.c.b16 %v125, %v125
  %v142 = vpack.c.b16 %v126, %v126
  %v143 = vpack.c.b16 %v127, %v127
  %v144 = vpack.c.b16 %v128, %v128
  %v145 = vpack.c.b16 %v129, %v129
  %v146 = vpack.c.b16 %v130, %v130
  %v147 = vpack.c.b16 %v131, %v131
  %v148 = vpack.c.b16 %v132, %v132
  %v149 = vpack.c.b16 %v133, %v133
  %v150 = vpack.c.b16 %v134, %v134
  %v151 = vpack.c.b16 %v135, %v135
  %v152 = vpack.c.b16 %v136, %v136
  %v153 = vpack.c.b16 %v137, %v137
  %v154 = vpack.c.b16 %v138, %v138
  %v155 = vpack.c.b16 %v139, %v139
  %vm172 = vcmask 519168
  %173 = vst.msk [vmem:[%s3] sm:$0xf] %vm172, %v140
  %174 = vst.msk [vmem:[%s3 + $0x4] sm:$0xf] %vm172, %v141
  %175 = vst.msk [vmem:[%s3 + $0x8] sm:$0xf] %vm172, %v142
  %176 = vst.msk [vmem:[%s3 + $0xc] sm:$0xf] %vm172, %v143
  %177 = vst.msk [vmem:[%s3 + $0x10] sm:$0xf] %vm172, %v144
  %178 = vst.msk [vmem:[%s3 + $0x14] sm:$0xf] %vm172, %v145
  %179 = vst.msk [vmem:[%s3 + $0x18] sm:$0xf] %vm172, %v146
  %180 = vst.msk [vmem:[%s3 + $0x1c] sm:$0xf] %vm172, %v147
  %181 = vst.msk [vmem:[%s3 + $0x20] sm:$0xf] %vm172, %v148
  %182 = vst.msk [vmem:[%s3 + $0x24] sm:$0xf] %vm172, %v149
  %183 = vst.msk [vmem:[%s3 + $0x28] sm:$0xf] %vm172, %v150
  %184 = vst.msk [vmem:[%s3 + $0x2c] sm:$0xf] %vm172, %v151
  %185 = vst.msk [vmem:[%s3 + $0x30] sm:$0xf] %vm172, %v152
  %186 = vst.msk [vmem:[%s3 + $0x34] sm:$0xf] %vm172, %v153
  %187 = vst.msk [vmem:[%s3 + $0x38] sm:$0xf] %vm172, %v154
  %188 = vst.msk [vmem:[%s3 + $0x3c] sm:$0xf] %vm172, %v155
  // Predicated region
  $region14: #{generator_forward.10} parent=0 // pred_check
    _
  $region15: #{generator_forward.10} parent=0 // pred_check_branch
    %190 = sbr.rel (0) target = $region17
  $region16: #{generator_forward.10} parent=0 // pred_region
    _
  $region17: #{generator_forward.10} parent=0 // pred_fallthru
    _
  // Predicated region
  $region18: #{generator_forward.10} parent=0 // pred_check
    _
  $region19: #{generator_forward.10} parent=0 // pred_check_branch
    %192 = sbr.rel (0) target = $region21
  $region20: #{generator_forward.10} parent=0 // pred_region
    _
  $region21: #{generator_forward.10} parent=0 // pred_fallthru
    _

// kernel: tile.8
$region0: #{tile.8}
  #allocation0 [shape = 's32[1]{0}', space=sflag, size = 0x4, scoped, tag = 'scoped memory for tile.8']
  %s0 = inlined_call_operand.vmem [shape: f32[3], index: 0, kind: input, shape index: {}]
  %s1 = inlined_call_operand.vmem [shape: f32[4,3], index: 1, kind: output, shape index: {}]
  // Predicated region
  $region2: #{tile.8} parent=0 // pred_check
    _
  $region3: #{tile.8} parent=0 // pred_check_branch
    %3 = sbr.rel (0) target = $region5
  $region4: #{tile.8} parent=0 // pred_region
    _
  $region5: #{tile.8} parent=0 // pred_fallthru
    _
  %v4 = vld [vmem:[%s0] ss:$0 sm:$0xff]
  %5 = vst [vmem:[%s1] sm:$0xf] %v4

// kernel: tile.9
$region0: #{tile.9}
  %s0 = inlined_call_operand.vmem [shape: f32[4,3], index: 0, kind: input, shape index: {}]
  %s1 = inlined_call_operand.vmem [shape: f32[1,12], index: 1, kind: output, shape index: {}]
  $region1: #{tile.9} parent=0
    #allocation0 [shape = 'u8[4096]{0}', space=vmem, size = 0x1000, scoped, tag = 'scoped mem for output reshape']
    #allocation1 [shape = 'u8[4096]{0}', space=vmem, size = 0x1000, scoped, tag = 'scoped mem for input reshape']
    %s3 = sshll.u32 1, 4
    %s4 = ssub.s32 %s3, 1
    %v5 = vld [vmem:[%s0] sm:%s4]
    %6 = vst [vmem:[#allocation1] sm:%s4] %v5
    %v7 = vld [vmem:[#allocation1] sm:$0x1]
    %vm8 = vcmask 23552
    %9 = vst.msk [vmem:[#allocation0] sm:$0x1] %vm8, %v7
    %s10 = scalar_lea.vmem [#allocation1], 3
    %v11 = vld [vmem:[%s10] sm:$0x1]
    %12 = vrot.lane.b32.xlu0 %v11, 9
    %v13 = vpop.permute.xlu0 %12
    %vm14 = vcmask 97352
    %15 = vst.msk [vmem:[#allocation0] sm:$0x1] %vm14, %v13
    %s16 = scalar_lea.vmem [#allocation1], 2
    %v17 = vld [vmem:[%s16] sm:$0x1]
    %18 = vrot.lane.b32.xlu0 %v17, 6
    %v19 = vpop.permute.xlu0 %18
    %vm20 = vcmask 72752
    %21 = vst.msk [vmem:[#allocation0] sm:$0x1] %vm20, %v19
    %s22 = scalar_lea.vmem [#allocation1], 1
    %v23 = vld [vmem:[%s22] sm:$0x1]
    %24 = vrot.lane.b32.xlu0 %v23, 3
    %v25 = vpop.permute.xlu0 %24
    %vm26 = vcmask 48152
    %27 = vst.msk [vmem:[#allocation0] sm:$0x1] %vm26, %v25
    %s29 = sshll.u32 1, 1
    %s30 = ssub.s32 %s29, 1
    %v32 = vld [vmem:[#allocation0] sm:%s30]
    %s33 = sshll.u32 1, 1
    %s34 = ssub.s32 %s33, 1
    %35 = vst [vmem:[%s1] sm:%s34] %v32

// kernel: generator_forward.11
$region0: #{generator_forward.11}
  #allocation0 [shape = 'u32[]', space=smem, size = 0x4, offset = 0x4, fixed_abs, tag = 'smem constant byte address 0x4 - core index']
  #allocation1 [shape = 'u32[144,128]{1,0:T(1,128)}', space=vmem, size = 0x12000, scoped, tag = 'internal scratch']
  #allocation2 [shape = 'f32[96,128]{1,0:T(8,128)}', space=vmem, size = 0xc000, scoped, tag = 'scratch operand']
  %s0 = inlined_call_operand.vmem [shape: bf16[192,256], index: 0, kind: input, shape index: {}]
  %s1 = inlined_call_operand.vmem [shape: bf16[256,128], index: 1, kind: input, shape index: {}]
  %s2 = inlined_call_operand.vmem [shape: f32[1,128], index: 2, kind: input, shape index: {}]
  %s3 = inlined_call_operand.vmem [shape: f32[192,128], index: 3, kind: output, shape index: {}]
  %s4 = sld [smem:[#allocation0]]
  $region53: #{generator_forward.11} parent=0
    _
  %s6 = ssub.s32 1, %s4
  %s7 = scalar_select 0, %s6, %s4
  loop: start=0, step=1, limit=4
  $region2: #{generator_forward.11} parent=0 // loop_pre_header
    _
  $region3: #{generator_forward.11} parent=0 // loop_header
    %s9 = sphi 0, %s13
    %p10 = scmp.ge.s32.totalorder %s9, 4
    %s16 = sphi 0, %s35
    %s17 = sphi 0, %s31
    %s18 = sphi 0, %s27
    %s19 = sphi 0, %s16
    %s20 = sphi 0, %s17
    %s21 = sphi 0, %s18
    %s22 = sphi 0, %s19
    %s23 = sphi 0, %s20
    %s24 = sphi 0, %s21
    %s40 = sphi 0, %s42
    %s43 = sphi 0, %s40
    %s44 = sphi 0, %s43
    %s60 = sphi 0, %s44
    %s68 = sphi 0, %s70
    %s71 = sphi 0, %s68
    %s72 = sphi 0, %s71
    %s88 = sphi 0, %s72
    %s94 = sphi 0, %s96
    %s97 = sphi 0, %s94
    %s98 = sphi 0, %s97
    %s114 = sphi 0, %s98
    %s122 = sphi 0, %s124
    %s125 = sphi 0, %s122
    %s126 = sphi 0, %s125
    %s142 = sphi 0, %s126
  $region4: #{generator_forward.11} parent=0 // loop_header_branch
    %12 = sbr.rel (%p10) target = $region8
  $region5: #{generator_forward.11} parent=0 // loop_body
    %s14 = ssub.s32 %s9, 1
    %s15 = ssub.s32 %s9, 2
    %s25 = sadd.s32 1, %s18
    %p26 = scmp.ge.s32.totalorder %s25, 1
    %s27 = scalar_select %p26, 0, %s25
    %s28 = sadd.s32 1, %s17
    %s29 = scalar_select %p26, %s28, %s17
    %p30 = scmp.ge.s32.totalorder %s29, 1
    %s31 = scalar_select %p30, 0, %s29
    %s32 = sadd.s32 1, %s16
    %s33 = scalar_select %p30, %s32, %s16
    %p34 = scmp.ge.s32.totalorder %s33, 2
    %s35 = scalar_select %p34, 0, %s33
    %s36 = ssub.s32 %s16, %s35
    %s37 = ssub.s32 %s18, %s27
    %s38 = sor.u32 %s36, %s37
    %p39 = scmp.eq.s32.totalorder %s38, 0
    %s41 = sadd.s32 %s40, 1
    %s42 = scalar_select %p39, %s40, %s41
    %p45 = pneg %p39
    %p46 = scmp.eq.s32.totalorder %s9, 1
    %p47 = por %p45, %p46
    %p48 = scmp.ne.s32.totalorder %s40, %s43
    %p49 = scmp.eq.s32.totalorder %s9, 0
    %p50 = por %p48, %p49
    %p51 = scmp.ne.s32.totalorder %s40, %s43
    %p52 = scmp.eq.s32.totalorder %s14, 1
    %p53 = por %p51, %p52
    %p54 = scmp.ne.s32.totalorder %s43, %s44
    %p55 = scmp.eq.s32.totalorder %s14, 0
    %p56 = por %p54, %p55
    %p57 = scmp.ne.s32.totalorder %s43, %s44
    %p58 = scmp.eq.s32.totalorder %s15, 1
    %p59 = por %p57, %p58
    %p61 = scmp.ne.s32.totalorder %s44, %s60
    %p62 = scmp.eq.s32.totalorder %s15, 0
    %p63 = por %p61, %p62
    %s64 = ssub.s32 %s18, %s27
    %s65 = ssub.s32 %s17, %s31
    %s66 = sor.u32 %s64, %s65
    %p67 = scmp.eq.s32.totalorder %s66, 0
    %s69 = sadd.s32 %s68, 1
    %s70 = scalar_select %p67, %s68, %s69
    %p73 = pneg %p67
    %p74 = scmp.eq.s32.totalorder %s9, 1
    %p75 = por %p73, %p74
    %p76 = scmp.ne.s32.totalorder %s68, %s71
    %p77 = scmp.eq.s32.totalorder %s9, 0
    %p78 = por %p76, %p77
    %p79 = scmp.ne.s32.totalorder %s68, %s71
    %p80 = scmp.eq.s32.totalorder %s14, 1
    %p81 = por %p79, %p80
    %p82 = scmp.ne.s32.totalorder %s71, %s72
    %p83 = scmp.eq.s32.totalorder %s14, 0
    %p84 = por %p82, %p83
    %p85 = scmp.ne.s32.totalorder %s71, %s72
    %p86 = scmp.eq.s32.totalorder %s15, 1
    %p87 = por %p85, %p86
    %p89 = scmp.ne.s32.totalorder %s72, %s88
    %p90 = scmp.eq.s32.totalorder %s15, 0
    %p91 = por %p89, %p90
    %s92 = ssub.s32 %s17, %s31
    %p93 = scmp.eq.s32.totalorder %s92, 0
    %s95 = sadd.s32 %s94, 1
    %s96 = scalar_select %p93, %s94, %s95
    %p99 = pneg %p93
    %p100 = scmp.eq.s32.totalorder %s9, 1
    %p101 = por %p99, %p100
    %p102 = scmp.ne.s32.totalorder %s94, %s97
    %p103 = scmp.eq.s32.totalorder %s9, 0
    %p104 = por %p102, %p103
    %p105 = scmp.ne.s32.totalorder %s94, %s97
    %p106 = scmp.eq.s32.totalorder %s14, 1
    %p107 = por %p105, %p106
    %p108 = scmp.ne.s32.totalorder %s97, %s98
    %p109 = scmp.eq.s32.totalorder %s14, 0
    %p110 = por %p108, %p109
    %p111 = scmp.ne.s32.totalorder %s97, %s98
    %p112 = scmp.eq.s32.totalorder %s15, 1
    %p113 = por %p111, %p112
    %p115 = scmp.ne.s32.totalorder %s98, %s114
    %p116 = scmp.eq.s32.totalorder %s15, 0
    %p117 = por %p115, %p116
    %s118 = ssub.s32 %s16, %s35
    %s119 = ssub.s32 %s17, %s31
    %s120 = sor.u32 %s118, %s119
    %p121 = scmp.eq.s32.totalorder %s120, 0
    %s123 = sadd.s32 %s122, 1
    %s124 = scalar_select %p121, %s122, %s123
    %p127 = pneg %p121
    %p128 = scmp.eq.s32.totalorder %s9, 1
    %p129 = por %p127, %p128
    %p130 = scmp.ne.s32.totalorder %s122, %s125
    %p131 = scmp.eq.s32.totalorder %s9, 0
    %p132 = por %p130, %p131
    %p133 = scmp.ne.s32.totalorder %s122, %s125
    %p134 = scmp.eq.s32.totalorder %s14, 1
    %p135 = por %p133, %p134
    %p136 = scmp.ne.s32.totalorder %s125, %s126
    %p137 = scmp.eq.s32.totalorder %s14, 0
    %p138 = por %p136, %p137
    %p139 = scmp.ne.s32.totalorder %s125, %s126
    %p140 = scmp.eq.s32.totalorder %s15, 1
    %p141 = por %p139, %p140
    %p143 = scmp.ne.s32.totalorder %s126, %s142
    %p144 = scmp.eq.s32.totalorder %s15, 0
    %p145 = por %p143, %p144
    %p146 = scmp.le.s32.totalorder 1, %s9
    %p147 = scmp.lt.s32.totalorder %s9, 3
    %p148 = pnand %p146, %p147
    %p149 = pneg %p148
    // Predicated region
    $region9: #{generator_forward.11} parent=5 // pred_check
      _
    $region10: #{generator_forward.11} parent=5 // pred_check_branch
      %151 = sbr.rel (%p148) target = $region12
    $region11: #{generator_forward.11} parent=5 // pred_region
      %s152 = ssub.s32 %s9, 1
      // Predicated region
      $region13: #{generator_forward.11} parent=11 // pred_check
        %p153 = pneg %p84
      $region14: #{generator_forward.11} parent=11 // pred_check_branch
        %155 = sbr.rel (%p153) target = $region16
      $region15: #{generator_forward.11} parent=11 // pred_region
        %s156 = smul.u32 32, %s21
        %p157 = scmp.lt.s32.totalorder %s156, 31
        %s158 = scalar_select %p157, %s156, 31
        %p159 = scmp.lt.s32.totalorder %s20, 0
        %s160 = scalar_select %p159, %s20, 0
        %s161 = sadd.s32 %s160, %s158
        %s162 = smul.addr %s161, 4
        %s163 = scalar_lea.vmem %s1, %s162
        %s164 = smul.u32 32, %s21
      $region16: #{generator_forward.11} parent=11 // pred_fallthru
        _
      // Predicated region
      $region17: #{generator_forward.11} parent=11 // pred_check
        %p165 = pneg %p110
      $region18: #{generator_forward.11} parent=11 // pred_check_branch
        %167 = sbr.rel (%p165) target = $region20
      $region19: #{generator_forward.11} parent=11 // pred_region
        %p168 = scmp.lt.s32.totalorder %s20, 0
        %s169 = scalar_select %p168, %s20, 0
        %s170 = scalar_lea.vmem %s2, %s169
      $region20: #{generator_forward.11} parent=11 // pred_fallthru
        _
    $region12: #{generator_forward.11} parent=5 // pred_fallthru
      _
    %p171 = scmp.lt.s32.totalorder %s9, 2
    // Predicated region
    $region21: #{generator_forward.11} parent=5 // pred_check
      %p172 = pneg %p171
    $region22: #{generator_forward.11} parent=5 // pred_check_branch
      %174 = sbr.rel (%p172) target = $region24
    $region23: #{generator_forward.11} parent=5 // pred_region
      // Predicated region
      $region25: #{generator_forward.11} parent=23 // pred_check
        %p175 = pneg %p50
      $region26: #{generator_forward.11} parent=23 // pred_check_branch
        %177 = sbr.rel (%p175) target = $region28
      $region27: #{generator_forward.11} parent=23 // pred_region
        %s178 = smul.u32 12, %s16
        %s179 = smul.u32 2, %s18
        %p180 = scmp.lt.s32.totalorder %s178, 23
        %s181 = scalar_select %p180, %s178, 23
        %p182 = scmp.lt.s32.totalorder %s179, 1
        %s183 = scalar_select %p182, %s179, 1
        %s184 = smul.addr %s181, 2
        %s185 = sadd.s32 %s183, %s184
        %s186 = smul.addr %s185, 4
        %s187 = scalar_lea.vmem %s0, %s186
        %s188 = smul.u32 12, %s16
        %s189 = smul.u32 2, %s18
      $region28: #{generator_forward.11} parent=23 // pred_fallthru
        _
    $region24: #{generator_forward.11} parent=5 // pred_fallthru
      _
    %p190 = scmp.le.s32.totalorder 1, %s9
    %p191 = scmp.lt.s32.totalorder %s9, 3
    %p192 = pnand %p190, %p191
    %p193 = pneg %p192
    // Predicated region
    $region29: #{generator_forward.11} parent=5 // pred_check
      _
    $region30: #{generator_forward.11} parent=5 // pred_check_branch
      %195 = sbr.rel (%p192) target = $region32
    $region31: #{generator_forward.11} parent=5 // pred_region
      %s196 = ssub.s32 %s9, 1
      %s197 = smul.u32 12, %s19
      %s198 = smul.u32 2, %s21
      %p199 = scmp.lt.s32.totalorder %s197, 23
      %s200 = scalar_select %p199, %s197, 23
      %p201 = scmp.lt.s32.totalorder %s198, 1
      %s202 = scalar_select %p201, %s198, 1
      %s203 = smul.addr %s200, 2
      %s204 = sadd.s32 %s202, %s203
      %s205 = smul.addr %s204, 4
      %s206 = scalar_lea.vmem %s0, %s205
      %p207 = pneg %p56
      %p208 = pneg %p53
      %s209 = smul.u32 32, %s21
      %p210 = scmp.lt.s32.totalorder %s209, 31
      %s211 = scalar_select %p210, %s209, 31
      %p212 = scmp.lt.s32.totalorder %s20, 0
      %s213 = scalar_select %p212, %s20, 0
      %s214 = sadd.s32 %s213, %s211
      %s215 = smul.addr %s214, 4
      %s216 = scalar_lea.vmem %s1, %s215
      %p217 = pneg %p84
      %p218 = pneg %p81
      %p219 = scmp.lt.s32.totalorder %s20, 0
      %s220 = scalar_select %p219, %s20, 0
      %s221 = scalar_lea.vmem %s2, %s220
      %p222 = pneg %p110
      %p223 = pneg %p107
      %p224 = pneg %p138
      %p225 = pneg %p135
      %s226 = smul.u32 12, %s19
      %p227 = scmp.lt.s32.totalorder %s226, 23
      %s228 = scalar_select %p227, %s226, 23
      %p229 = scmp.lt.s32.totalorder %s20, 0
      %s230 = scalar_select %p229, %s20, 0
      %s231 = sadd.s32 %s230, %s228
      %s232 = smul.addr %s231, 8
      %s233 = scalar_lea.vmem %s3, %s232
      %s234 = smul.u32 12, %s19
      %s235 = smul.u32 2, %s21
      %p236 = scmp.lt.s32.totalorder %s234, 23
      %s237 = scalar_select %p236, %s234, 23
      %p238 = scmp.lt.s32.totalorder %s235, 1
      %s239 = scalar_select %p238, %s235, 1
      %s240 = smul.addr %s237, 2
      %s241 = sadd.s32 %s239, %s240
      %s242 = smul.addr %s241, 4
      %s243 = scalar_lea.vmem %s0, %s242
      %s244 = smul.u32 12, %s19
      %s245 = smul.u32 2, %s21
      %s246 = smul.u32 32, %s21
      %p247 = scmp.lt.s32.totalorder %s246, 31
      %s248 = scalar_select %p247, %s246, 31
      %p249 = scmp.lt.s32.totalorder %s20, 0
      %s250 = scalar_select %p249, %s20, 0
      %s251 = sadd.s32 %s250, %s248
      %s252 = smul.addr %s251, 4
      %s253 = scalar_lea.vmem %s1, %s252
      %s254 = smul.u32 32, %s21
      %p255 = scmp.lt.s32.totalorder %s20, 0
      %s256 = scalar_select %p255, %s20, 0
      %s257 = scalar_lea.vmem %s2, %s256
      %s258 = smul.u32 12, %s19
      %p259 = scmp.lt.s32.totalorder %s258, 23
      %s260 = scalar_select %p259, %s258, 23
      %p261 = scmp.lt.s32.totalorder %s20, 0
      %s262 = scalar_select %p261, %s20, 0
      %s263 = sadd.s32 %s262, %s260
      %s264 = smul.addr %s263, 8
      %s265 = scalar_lea.vmem %s3, %s264
      %s266 = smul.u32 12, %s19
      %p268 = scmp.eq.s32.totalorder %s21, 0
      // Predicated region
      $region33: #{generator_forward.11} parent=31 // pred_check
        %p269 = pneg %p268
      $region34: #{generator_forward.11} parent=31 // pred_check_branch
        %271 = sbr.rel (%p269) target = $region36
      $region35: #{generator_forward.11} parent=31 // pred_region
        %272 = vst [vmem:[#allocation2] sm:$0xff] 0.0
        %273 = vst [vmem:[#allocation2 + $0x8] sm:$0xff] 0.0
        %274 = vst [vmem:[#allocation2 + $0x10] sm:$0xff] 0.0
        %275 = vst [vmem:[#allocation2 + $0x18] sm:$0xff] 0.0
        %276 = vst [vmem:[#allocation2 + $0x20] sm:$0xff] 0.0
        %277 = vst [vmem:[#allocation2 + $0x28] sm:$0xff] 0.0
        %278 = vst [vmem:[#allocation2 + $0x30] sm:$0xff] 0.0
        %279 = vst [vmem:[#allocation2 + $0x38] sm:$0xff] 0.0
        %280 = vst [vmem:[#allocation2 + $0x40] sm:$0xff] 0.0
        %281 = vst [vmem:[#allocation2 + $0x48] sm:$0xff] 0.0
        %282 = vst [vmem:[#allocation2 + $0x50] sm:$0xff] 0.0
        %283 = vst [vmem:[#allocation2 + $0x58] sm:$0xff] 0.0
      $region36: #{generator_forward.11} parent=31 // pred_fallthru
        _
      %v284 = vld [vmem:[#allocation2] sm:$0xff]
      %v285 = vld [vmem:[#allocation2 + $0x8] sm:$0xff]
      %v286 = vld [vmem:[#allocation2 + $0x10] sm:$0xff]
      %v287 = vld [vmem:[#allocation2 + $0x18] sm:$0xff]
      %v288 = vld [vmem:[#allocation2 + $0x20] sm:$0xff]
      %v289 = vld [vmem:[#allocation2 + $0x28] sm:$0xff]
      %v290 = vld [vmem:[#allocation2 + $0x30] sm:$0xff]
      %v291 = vld [vmem:[#allocation2 + $0x38] sm:$0xff]
      %v292 = vld [vmem:[#allocation2 + $0x40] sm:$0xff]
      %v293 = vld [vmem:[#allocation2 + $0x48] sm:$0xff]
      %v294 = vld [vmem:[#allocation2 + $0x50] sm:$0xff]
      %v295 = vld [vmem:[#allocation2 + $0x58] sm:$0xff]
      %v296 = vld [vmem:[%s243] sm:$0xff]
      %v297 = vld [vmem:[%s243 + $0x8] sm:$0xff]
      %v298 = vld [vmem:[%s243 + $0x10] sm:$0xff]
      %v299 = vld [vmem:[%s243 + $0x18] sm:$0xff]
      %v300 = vld [vmem:[%s243 + $0x20] sm:$0xff]
      %v301 = vld [vmem:[%s243 + $0x28] sm:$0xff]
      %v302 = vld [vmem:[%s243 + $0x30] sm:$0xff]
      %v303 = vld [vmem:[%s243 + $0x38] sm:$0xff]
      %v304 = vld [vmem:[%s243 + $0x40] sm:$0xff]
      %v305 = vld [vmem:[%s243 + $0x48] sm:$0xff]
      %v306 = vld [vmem:[%s243 + $0x50] sm:$0xff]
      %v307 = vld [vmem:[%s243 + $0x58] sm:$0xff]
      %v308 = vld [vmem:[%s253] sm:$0xf]
      %v309 = vld [vmem:[%s253 + $0x4] sm:$0xf]
      %v310 = vld [vmem:[%s253 + $0x8] sm:$0xf]
      %v311 = vld [vmem:[%s253 + $0xc] sm:$0xf]
      %v312 = vld [vmem:[%s253 + $0x10] sm:$0xf]
      %v313 = vld [vmem:[%s253 + $0x14] sm:$0xf]
      %v314 = vld [vmem:[%s253 + $0x18] sm:$0xf]
      %v315 = vld [vmem:[%s253 + $0x1c] sm:$0xf]
      %v316 = vld [vmem:[%s253 + $0x20] sm:$0xf]
      %v317 = vld [vmem:[%s253 + $0x24] sm:$0xf]
      %v318 = vld [vmem:[%s253 + $0x28] sm:$0xf]
      %v319 = vld [vmem:[%s253 + $0x2c] sm:$0xf]
      %v320 = vld [vmem:[%s253 + $0x30] sm:$0xf]
      %v321 = vld [vmem:[%s253 + $0x34] sm:$0xf]
      %v322 = vld [vmem:[%s253 + $0x38] sm:$0xf]
      %v323 = vld [vmem:[%s253 + $0x3c] sm:$0xf]
      %v324 = vld [vmem:[%s253 + $0x40] sm:$0xf]
      %v325 = vld [vmem:[%s253 + $0x44] sm:$0xf]
      %v326 = vld [vmem:[%s253 + $0x48] sm:$0xf]
      %v327 = vld [vmem:[%s253 + $0x4c] sm:$0xf]
      %v328 = vld [vmem:[%s253 + $0x50] sm:$0xf]
      %v329 = vld [vmem:[%s253 + $0x54] sm:$0xf]
      %v330 = vld [vmem:[%s253 + $0x58] sm:$0xf]
      %v331 = vld [vmem:[%s253 + $0x5c] sm:$0xf]
      %v332 = vld [vmem:[%s253 + $0x60] sm:$0xf]
      %v333 = vld [vmem:[%s253 + $0x64] sm:$0xf]
      %v334 = vld [vmem:[%s253 + $0x68] sm:$0xf]
      %v335 = vld [vmem:[%s253 + $0x6c] sm:$0xf]
      %v336 = vld [vmem:[%s253 + $0x70] sm:$0xf]
      %v337 = vld [vmem:[%s253 + $0x74] sm:$0xf]
      %v338 = vld [vmem:[%s253 + $0x78] sm:$0xf]
      %v339 = vld [vmem:[%s253 + $0x7c] sm:$0xf]
      %v352 = vunpack.c.l.b16 %v296
      %v353 = vunpack.c.h.b16 %v296
      %v354 = vunpack.c.l.b16 %v297
      %v355 = vunpack.c.h.b16 %v297
      %v356 = vunpack.c.l.b16 %v298
      %v357 = vunpack.c.h.b16 %v298
      %v358 = vunpack.c.l.b16 %v299
      %v359 = vunpack.c.h.b16 %v299
      %v360 = vunpack.c.l.b16 %v300
      %v361 = vunpack.c.h.b16 %v300
      %v362 = vunpack.c.l.b16 %v301
      %v363 = vunpack.c.h.b16 %v301
      %v364 = vunpack.c.l.b16 %v302
      %v365 = vunpack.c.h.b16 %v302
      %v366 = vunpack.c.l.b16 %v303
      %v367 = vunpack.c.h.b16 %v303
      %v368 = vunpack.c.l.b16 %v304
      %v369 = vunpack.c.h.b16 %v304
      %v370 = vunpack.c.l.b16 %v305
      %v371 = vunpack.c.h.b16 %v305
      %v372 = vunpack.c.l.b16 %v306
      %v373 = vunpack.c.h.b16 %v306
      %v374 = vunpack.c.l.b16 %v307
      %v375 = vunpack.c.h.b16 %v307
      %v376 = vpack.c.b16 %v354, %v352
      %v377 = vpack.c.b16 %v355, %v353
      %v378 = vpack.c.b16 %v358, %v356
      %v379 = vpack.c.b16 %v359, %v357
      %v380 = vpack.c.b16 %v362, %v360
      %v381 = vpack.c.b16 %v363, %v361
      %v382 = vpack.c.b16 %v366, %v364
      %v383 = vpack.c.b16 %v367, %v365
      %v384 = vpack.c.b16 %v370, %v368
      %v385 = vpack.c.b16 %v371, %v369
      %v386 = vpack.c.b16 %v374, %v372
      %v387 = vpack.c.b16 %v375, %v373
      %v432 = vunpack.c.l.b16 %v308
      %v433 = vunpack.c.l.b16 %v309
      %v434 = vunpack.c.l.b16 %v310
      %v435 = vunpack.c.l.b16 %v311
      %v436 = vunpack.c.l.b16 %v312
      %v437 = vunpack.c.l.b16 %v313
      %v438 = vunpack.c.l.b16 %v314
      %v439 = vunpack.c.l.b16 %v315
      %v440 = vunpack.c.l.b16 %v316
      %v441 = vunpack.c.l.b16 %v317
      %v442 = vunpack.c.l.b16 %v318
      %v443 = vunpack.c.l.b16 %v319
      %v444 = vunpack.c.l.b16 %v320
      %v445 = vunpack.c.l.b16 %v321
      %v446 = vunpack.c.l.b16 %v322
      %v447 = vunpack.c.l.b16 %v323
      %v448 = vunpack.c.l.b16 %v324
      %v449 = vunpack.c.l.b16 %v325
      %v450 = vunpack.c.l.b16 %v326
      %v451 = vunpack.c.l.b16 %v327
      %v452 = vunpack.c.l.b16 %v328
      %v453 = vunpack.c.l.b16 %v329
      %v454 = vunpack.c.l.b16 %v330
      %v455 = vunpack.c.l.b16 %v331
      %v456 = vunpack.c.l.b16 %v332
      %v457 = vunpack.c.l.b16 %v333
      %v458 = vunpack.c.l.b16 %v334
      %v459 = vunpack.c.l.b16 %v335
      %v460 = vunpack.c.l.b16 %v336
      %v461 = vunpack.c.l.b16 %v337
      %v462 = vunpack.c.l.b16 %v338
      %v463 = vunpack.c.l.b16 %v339
      %v464 = vpack.c.b16 %v433, %v432
      %v465 = vpack.c.b16 %v435, %v434
      %v466 = vpack.c.b16 %v437, %v436
      %v467 = vpack.c.b16 %v439, %v438
      %v468 = vpack.c.b16 %v441, %v440
      %v469 = vpack.c.b16 %v443, %v442
      %v470 = vpack.c.b16 %v445, %v444
      %v471 = vpack.c.b16 %v447, %v446
      %v472 = vpack.c.b16 %v449, %v448
      %v473 = vpack.c.b16 %v451, %v450
      %v474 = vpack.c.b16 %v453, %v452
      %v475 = vpack.c.b16 %v455, %v454
      %v476 = vpack.c.b16 %v457, %v456
      %v477 = vpack.c.b16 %v459, %v458
      %v478 = vpack.c.b16 %v461, %v460
      %v479 = vpack.c.b16 %v463, %v462
      %496 = vmatprep.subr.bf16.mxu0 0
      %497 = vmatpush1.bf16.msra.mxu0 %v471
      %498 = vmatprep.subr.bf16.mxu0 0
      %499 = vmatpush1.bf16.msra.mxu0 %v470
      %500 = vmatprep.subr.bf16.mxu0 0
      %501 = vmatpush1.bf16.msra.mxu0 %v469
      %502 = vmatprep.subr.bf16.mxu0 0
      %503 = vmatpush1.bf16.msra.mxu0 %v468
      %504 = vmatprep.subr.bf16.mxu0 0
      %505 = vmatpush1.bf16.msra.mxu0 %v467
      %506 = vmatprep.subr.bf16.mxu0 0
      %507 = vmatpush1.bf16.msra.mxu0 %v466
      %508 = vmatprep.subr.bf16.mxu0 0
      %509 = vmatpush1.bf16.msra.mxu0 %v465
      %510 = vmatprep.subr.bf16.mxu0 0
      %511 = vmatpush1.bf16.msra.mxu0 %v464
      %512 = vmatprep.subr.bf16.mxu0 0
      %513 = vmatpush2.bf16.msra.mxu0 %v479
      %514 = vmatprep.subr.bf16.mxu0 0
      %515 = vmatpush2.bf16.msra.mxu0 %v478
      %516 = vmatprep.subr.bf16.mxu0 0
      %517 = vmatpush2.bf16.msra.mxu0 %v477
      %518 = vmatprep.subr.bf16.mxu0 0
      %519 = vmatpush2.bf16.msra.mxu0 %v476
      %520 = vmatprep.subr.bf16.mxu0 0
      %521 = vmatpush2.bf16.msra.mxu0 %v475
      %522 = vmatprep.subr.bf16.mxu0 0
      %523 = vmatpush2.bf16.msra.mxu0 %v474
      %524 = vmatprep.subr.bf16.mxu0 0
      %525 = vmatpush2.bf16.msra.mxu0 %v473
      %526 = vmatprep.subr.bf16.mxu0 0
      %527 = vmatpush2.bf16.msra.mxu0 %v472
      %528 = vmatprep.mubr.bf16.mxu0 %v377
      %529 = vmatmul.mubr.bf16.gmra.mxu0 %v376
      %v530 = vpop.f32.mrf.mxu0
      %v531 = vadd.f32 0.0, %v530
      %v532 = vpop.f32.mrf.mxu0
      %v533 = vpop.f32.mrf.mxu0
      %v534 = vadd.f32 0.0, %v533
      %v535 = vpop.f32.mrf.mxu0
      %536 = vmatprep.mubr.bf16.mxu0 %v379
      %537 = vmatmul.mubr.bf16.gmra.mxu0 %v378
      %v538 = vpop.f32.mrf.mxu0
      %v539 = vadd.f32 0.0, %v538
      %v540 = vpop.f32.mrf.mxu0
      %v541 = vpop.f32.mrf.mxu0
      %v542 = vadd.f32 0.0, %v541
      %v543 = vpop.f32.mrf.mxu0
      %544 = vmatprep.mubr.bf16.mxu0 %v381
      %545 = vmatmul.mubr.bf16.gmra.mxu0 %v380
      %v546 = vpop.f32.mrf.mxu0
      %v547 = vadd.f32 0.0, %v546
      %v548 = vpop.f32.mrf.mxu0
      %v549 = vpop.f32.mrf.mxu0
      %v550 = vadd.f32 0.0, %v549
      %v551 = vpop.f32.mrf.mxu0
      %552 = vmatprep.mubr.bf16.mxu0 %v383
      %553 = vmatmul.mubr.bf16.gmra.mxu0 %v382
      %v554 = vpop.f32.mrf.mxu0
      %v555 = vadd.f32 0.0, %v554
      %v556 = vpop.f32.mrf.mxu0
      %v557 = vpop.f32.mrf.mxu0
      %v558 = vadd.f32 0.0, %v557
      %v559 = vpop.f32.mrf.mxu0
      %560 = vmatprep.mubr.bf16.mxu0 %v385
      %561 = vmatmul.mubr.bf16.gmra.mxu0 %v384
      %v562 = vpop.f32.mrf.mxu0
      %v563 = vadd.f32 0.0, %v562
      %v564 = vpop.f32.mrf.mxu0
      %v565 = vpop.f32.mrf.mxu0
      %v566 = vadd.f32 0.0, %v565
      %v567 = vpop.f32.mrf.mxu0
      %568 = vmatprep.mubr.bf16.mxu0 %v387
      %569 = vmatmul.mubr.bf16.gmra.mxu0 %v386
      %v570 = vpop.f32.mrf.mxu0
      %v571 = vadd.f32 0.0, %v570
      %v572 = vpop.f32.mrf.mxu0
      %v573 = vpop.f32.mrf.mxu0
      %v574 = vadd.f32 0.0, %v573
      %v575 = vpop.f32.mrf.mxu0
      %576 = vdwg.mxu0
      %v577 = vadd.f32 %v284, %v531
      %v578 = vadd.f32 %v285, %v534
      %v579 = vadd.f32 %v286, %v539
      %v580 = vadd.f32 %v287, %v542
      %v581 = vadd.f32 %v288, %v547
      %v582 = vadd.f32 %v289, %v550
      %v583 = vadd.f32 %v290, %v555
      %v584 = vadd.f32 %v291, %v558
      %v585 = vadd.f32 %v292, %v563
      %v586 = vadd.f32 %v293, %v566
      %v587 = vadd.f32 %v294, %v571
      %v588 = vadd.f32 %v295, %v574
      %589 = vst [vmem:[#allocation2] sm:$0xff] %v577
      %590 = vst [vmem:[#allocation2 + $0x8] sm:$0xff] %v578
      %591 = vst [vmem:[#allocation2 + $0x10] sm:$0xff] %v579
      %592 = vst [vmem:[#allocation2 + $0x18] sm:$0xff] %v580
      %593 = vst [vmem:[#allocation2 + $0x20] sm:$0xff] %v581
      %594 = vst [vmem:[#allocation2 + $0x28] sm:$0xff] %v582
      %595 = vst [vmem:[#allocation2 + $0x30] sm:$0xff] %v583
      %596 = vst [vmem:[#allocation2 + $0x38] sm:$0xff] %v584
      %597 = vst [vmem:[#allocation2 + $0x40] sm:$0xff] %v585
      %598 = vst [vmem:[#allocation2 + $0x48] sm:$0xff] %v586
      %599 = vst [vmem:[#allocation2 + $0x50] sm:$0xff] %v587
      %600 = vst [vmem:[#allocation2 + $0x58] sm:$0xff] %v588
      // Predicated region
      $region37: #{generator_forward.11} parent=31 // pred_check
        %p601 = pneg %p268
      $region38: #{generator_forward.11} parent=31 // pred_check_branch
        %603 = sbr.rel (%p601) target = $region40
      $region39: #{generator_forward.11} parent=31 // pred_region
        %v604 = vld [vmem:[#allocation2] sm:$0xff]
        %v605 = vld [vmem:[#allocation2 + $0x8] sm:$0xff]
        %v606 = vld [vmem:[#allocation2 + $0x10] sm:$0xff]
        %v607 = vld [vmem:[#allocation2 + $0x18] sm:$0xff]
        %v608 = vld [vmem:[#allocation2 + $0x20] sm:$0xff]
        %v609 = vld [vmem:[#allocation2 + $0x28] sm:$0xff]
        %v610 = vld [vmem:[#allocation2 + $0x30] sm:$0xff]
        %v611 = vld [vmem:[#allocation2 + $0x38] sm:$0xff]
        %v612 = vld [vmem:[#allocation2 + $0x40] sm:$0xff]
        %v613 = vld [vmem:[#allocation2 + $0x48] sm:$0xff]
        %v614 = vld [vmem:[#allocation2 + $0x50] sm:$0xff]
        %v615 = vld [vmem:[#allocation2 + $0x58] sm:$0xff]
        %v616 = vld [vmem:[%s257] sm:$0x1]
        %v618 = vlaneseq
        %v619 = vshrl.u32 %v618, 7
        %v620 = vsub.s32 0, %v619
        %v621 = vrot.slane %v616, %v620
        %v623 = vadd.f32 %v604, %v621
        %v624 = vadd.f32 %v605, %v621
        %v625 = vadd.f32 %v606, %v621
        %v626 = vadd.f32 %v607, %v621
        %v627 = vadd.f32 %v608, %v621
        %v628 = vadd.f32 %v609, %v621
        %v629 = vadd.f32 %v610, %v621
        %v630 = vadd.f32 %v611, %v621
        %v631 = vadd.f32 %v612, %v621
        %v632 = vadd.f32 %v613, %v621
        %v633 = vadd.f32 %v614, %v621
        %v634 = vadd.f32 %v615, %v621
        %v635 = vtanh.pop %v623
        %v636 = vtanh.pop %v624
        %v637 = vtanh.pop %v625
        %v638 = vtanh.pop %v626
        %v639 = vtanh.pop %v627
        %v640 = vtanh.pop %v628
        %v641 = vtanh.pop %v629
        %v642 = vtanh.pop %v630
        %v643 = vtanh.pop %v631
        %v644 = vtanh.pop %v632
        %v645 = vtanh.pop %v633
        %v646 = vtanh.pop %v634
        %647 = vst [vmem:[%s265] sm:$0xff] %v635
        %648 = vst [vmem:[%s265 + $0x8] sm:$0xff] %v636
        %649 = vst [vmem:[%s265 + $0x10] sm:$0xff] %v637
        %650 = vst [vmem:[%s265 + $0x18] sm:$0xff] %v638
        %651 = vst [vmem:[%s265 + $0x20] sm:$0xff] %v639
        %652 = vst [vmem:[%s265 + $0x28] sm:$0xff] %v640
        %653 = vst [vmem:[%s265 + $0x30] sm:$0xff] %v641
        %654 = vst [vmem:[%s265 + $0x38] sm:$0xff] %v642
        %655 = vst [vmem:[%s265 + $0x40] sm:$0xff] %v643
        %656 = vst [vmem:[%s265 + $0x48] sm:$0xff] %v644
        %657 = vst [vmem:[%s265 + $0x50] sm:$0xff] %v645
        %658 = vst [vmem:[%s265 + $0x58] sm:$0xff] %v646
      $region40: #{generator_forward.11} parent=31 // pred_fallthru
        _
      %s659 = smul.u32 12, %s19
      %p660 = scmp.lt.s32.totalorder %s659, 23
      %s661 = scalar_select %p660, %s659, 23
      %p662 = scmp.lt.s32.totalorder %s20, 0
      %s663 = scalar_select %p662, %s20, 0
      %s664 = sadd.s32 %s663, %s661
      %s665 = smul.addr %s664, 8
      %s666 = scalar_lea.vmem %s3, %s665
      // Predicated region
      $region41: #{generator_forward.11} parent=31 // pred_check
        %p667 = pneg %p135
      $region42: #{generator_forward.11} parent=31 // pred_check_branch
        %669 = sbr.rel (%p667) target = $region44
      $region43: #{generator_forward.11} parent=31 // pred_region
        %s670 = smul.u32 12, %s19
      $region44: #{generator_forward.11} parent=31 // pred_fallthru
        _
    $region32: #{generator_forward.11} parent=5 // pred_fallthru
      _
    %p671 = scmp.le.s32.totalorder 2, %s9
    // Predicated region
    $region45: #{generator_forward.11} parent=5 // pred_check
      %p672 = pneg %p671
    $region46: #{generator_forward.11} parent=5 // pred_check_branch
      %674 = sbr.rel (%p672) target = $region48
    $region47: #{generator_forward.11} parent=5 // pred_region
      %s675 = ssub.s32 %s9, 2
      // Predicated region
      $region49: #{generator_forward.11} parent=47 // pred_check
        %p676 = pneg %p141
      $region50: #{generator_forward.11} parent=47 // pred_check_branch
        %678 = sbr.rel (%p676) target = $region52
      $region51: #{generator_forward.11} parent=47 // pred_region
        %s679 = smul.u32 12, %s22
        %p680 = scmp.lt.s32.totalorder %s679, 23
        %s681 = scalar_select %p680, %s679, 23
        %p682 = scmp.lt.s32.totalorder %s23, 0
        %s683 = scalar_select %p682, %s23, 0
        %s684 = sadd.s32 %s683, %s681
        %s685 = smul.addr %s684, 8
        %s686 = scalar_lea.vmem %s3, %s685
      $region52: #{generator_forward.11} parent=47 // pred_fallthru
        _
    $region48: #{generator_forward.11} parent=5 // pred_fallthru
      _
  $region6: #{generator_forward.11} parent=0 // loop_footer
    %s13 = sadd.s32 1, %s9
  $region7: #{generator_forward.11} parent=0 // loop_footer_branch
    %8 = sbr.rel target = $region3
  $region8: #{generator_forward.11} parent=0 // loop_exit
    _

</llo_original>
